<compile_context>
chip_gen: v5e
topology: v5e:2x2
jax: 0.10.0
libtpu: 0.0.40
codegen_flags: <defaults>
</compile_context>

<pallas_src>
import numpy as np

import jax
import jax.numpy as jnp
from jax.experimental import pallas as pl
from jax.experimental.pallas import tpu as pltpu

BN_EPS = 1e-5


# ----------------------------------------------------------------------------- kernel
def _encoder_kernel(p1_ref, w1_ref, wt_ref,
                    g2_ref, g3_ref, g4_ref, g5_ref, g6_ref,
                    b_ref, gam_ref, bet_ref, o_ref):
    """Fully fused encoder forward.

    p1_ref : (M1, KP)        im2col patches of the network input (zero-padded cols)
    w1_ref : (KP, CP)        block-1 conv weight in matmul form (zero-padded)
    wt_ref : (20, CP, CP)    per-tap weights for blocks 2..6 (4 taps each, padded)
    gN_ref : (4, Mout, Min)  0/1 gather matrices for block N (tap row-select)
    b_ref, gam_ref, bet_ref : (6, CP) conv bias / BN gamma / BN beta (padded with 0)
    o_ref  : (Mfinal, CP)    final activations (tanh applied), padded channels = 0
    """

    def mish(y):
        # mish(y) = y * tanh(softplus(y)) = y * n / d   with t = exp(-|y|):
        #   y >= 0: n = 1 + 2t          d = 1 + 2t + 2t^2
        #   y <  0: n = t(t + 2)        d = 2 + t(t + 2)
        t = jnp.exp(-jnp.abs(y))
        pos = y >= 0.0
        num = jnp.where(pos, 1.0 + 2.0 * t, t * (t + 2.0))
        den = jnp.where(pos, 1.0 + 2.0 * t + 2.0 * t * t, 2.0 + t * (t + 2.0))
        return y * num * pl.reciprocal(den, approx=True)

    def mish_bn(y, blk, m_rows):
        h = mish(y)
        inv_m = 1.0 / float(m_rows)
        mean = jnp.sum(h, axis=0, keepdims=True) * inv_m
        var = jnp.sum(h * h, axis=0, keepdims=True) * inv_m - mean * mean
        scale = jax.lax.rsqrt(jnp.maximum(var, 0.0) + BN_EPS) * gam_ref[blk:blk + 1, :]
        shift = bet_ref[blk:blk + 1, :] - mean * scale
        return h * scale + shift          # fused per-channel affine

    # ---- block 1: pre-gathered patches -> one MXU matmul ----
    y = jnp.dot(p1_ref[...], w1_ref[...], preferred_element_type=jnp.float32)
    y = y + b_ref[0:1, :]
    x = mish_bn(y, 0, p1_ref.shape[0])

    # ---- blocks 2..6: in-VMEM tap gather (as matmul) + conv matmul, fused ----
    for bi, g_ref in enumerate((g2_ref, g3_ref, g4_ref, g5_ref, g6_ref)):
        blk = bi + 1
        acc = None
        for t in range(4):
            gathered = jnp.dot(g_ref[t], x, preferred_element_type=jnp.float32)
            contrib = jnp.dot(gathered, wt_ref[4 * bi + t],
                              preferred_element_type=jnp.float32)
            acc = contrib if acc is None else acc + contrib
        y = acc + b_ref[blk:blk + 1, :]
        x = mish_bn(y, blk, g_ref.shape[1])

    o_ref[...] = jnp.tanh(x)


# --------------------------------------------------------------------------- wrapper
def _gather_matrices(N, Hin, Win, stride):
    """0/1 matrices G[t] with (G[t] @ x_rows)[n,ho,wo] = x_rows[n, s*ho+dy, s*wo+dx]."""
    Ho = (Hin - 2) // stride + 1
    Wo = (Win - 2) // stride + 1
    M_out, M_in = N * Ho * Wo, N * Hin * Win
    n = np.arange(N)[:, None, None]
    ho = np.arange(Ho)[None, :, None]
    wo = np.arange(Wo)[None, None, :]
    r_out = ((n * Ho + ho) * Wo + wo).reshape(-1)
    G = np.zeros((4, M_out, M_in), np.float32)
    t = 0
    for dy in range(2):
        for dx in range(2):
            r_in = ((n * Hin + stride * ho + dy) * Win + (stride * wo + dx)).reshape(-1)
            G[t, r_out, r_in] = 1.0
            t += 1
    return G, Ho, Wo


def encoder_forward(x_nchw, params):
    """Encoder.forward: tanh(layer3(layer2(layer1(x)))).  Input/output are NCHW."""
    assert len(params) == 6
    N, CH, H, W = map(int, x_nchw.shape)
    cout = [int(p["w"].shape[0]) for p in params]
    latent = cout[-1]
    cpad = max(128, ((max(cout) + 127) // 128) * 128)        # lane-dense channel pad
    kp1 = max(cpad, ((4 * CH + 127) // 128) * 128)

    x_nhwc = jnp.transpose(x_nchw, (0, 2, 3, 1)).astype(jnp.float32)

    # -- block 1: wrapper-side im2col of the (tiny) network input --
    s0 = int(params[0]["stride"])
    H1 = (H - 2) // s0 + 1
    W1 = (W - 2) // s0 + 1
    cols = []
    for dy in range(2):
        for dx in range(2):
            cols.append(x_nhwc[:, dy:dy + s0 * (H1 - 1) + 1:s0,
                               dx:dx + s0 * (W1 - 1) + 1:s0, :])
    p1 = jnp.concatenate(cols, axis=-1).reshape(N * H1 * W1, 4 * CH)
    p1 = jnp.pad(p1, ((0, 0), (0, kp1 - 4 * CH)))

    # PyTorch (Cout,Cin,2,2) -> (dy,dx,cin, cout) matmul form, matching im2col order.
    w1 = jnp.transpose(params[0]["w"], (2, 3, 1, 0)).reshape(4 * CH, cout[0])
    w1 = jnp.pad(w1, ((0, kp1 - 4 * CH), (0, cpad - cout[0])))

    # -- blocks 2..6: gather matrices + per-tap (Cin,Cout) weights --
    g_mats, taps = [], []
    Hc, Wc = H1, W1
    for i in range(1, 6):
        s = int(params[i]["stride"])
        G, Hc, Wc = _gather_matrices(N, Hc, Wc, s)
        g_mats.append(jnp.asarray(G))
        w = params[i]["w"]                       # (Cout, Cin, 2, 2)
        cin = int(w.shape[1])
        for dy in range(2):
            for dx in range(2):
                wt = jnp.transpose(w[:, :, dy, dx], (1, 0))     # (Cin, Cout)
                taps.append(jnp.pad(wt, ((0, cpad - cin), (0, cpad - cout[i]))))
    wt_all = jnp.stack(taps, axis=0)             # (20, cpad, cpad)

    def pad_vec(v, c):
        return jnp.pad(v, (0, cpad - c))
    bias_all = jnp.stack([pad_vec(p["b"], cout[i]) for i, p in enumerate(params)])
    gamma_all = jnp.stack([pad_vec(p["gamma"], cout[i]) for i, p in enumerate(params)])
    beta_all = jnp.stack([pad_vec(p["beta"], cout[i]) for i, p in enumerate(params)])

    m_final = int(g_mats[-1].shape[1])
    out = pl.pallas_call(
        _encoder_kernel,
        out_shape=jax.ShapeDtypeStruct((m_final, cpad), jnp.float32),
        in_specs=[pl.BlockSpec(memory_space=pltpu.MemorySpace.VMEM)] * 11,
        out_specs=pl.BlockSpec(memory_space=pltpu.MemorySpace.VMEM),
    )(p1, w1, wt_all, *g_mats, bias_all, gamma_all, beta_all)

    out = out[:, :latent].reshape(N, Hc, Wc, latent)
    return jnp.transpose(out, (0, 3, 1, 2))      # back to NCHW


# ---------------------------------------------------------------------------- params
def init_encoder_params(key, CH=1, latent=48):
    """Deterministic parameter init matching the module's shapes.

    Conv weights ~ N(0, 1/fan_in), small biases; BN gamma=1, beta=0 (PyTorch init).
    """
    c1, c2, c3 = int(latent / 3), int(latent / 2), latent
    plan = [
        (CH, c1, 1), (c1, c1, 2),   # layer1
        (c1, c2, 1), (c2, c2, 2),   # layer2
        (c2, c3, 1), (c3, c3, 2),   # layer3
    ]
    params = []
    for cin, cout, stride in plan:
        key, kw, kb = jax.random.split(key, 3)
        fan_in = 4 * cin
        w = jax.random.normal(kw, (cout, cin, 2, 2), jnp.float32) / jnp.sqrt(float(fan_in))
        b = jax.random.normal(kb, (cout,), jnp.float32) * 0.01
        params.append(dict(
            w=w, b=b,
            gamma=jnp.ones((cout,), jnp.float32),
            beta=jnp.zeros((cout,), jnp.float32),
            stride=stride,
        ))
    return params


if __name__ == "__main__":
    key = jax.random.PRNGKey(0)
    k_in, k_par = jax.random.split(key)

    # Small shapes consistent with the module: CH=1 grayscale images, latent=48
    # (so channels are 16 / 24 / 48), batch=2, 16x16 spatial -> 1x1 at the output.
    N, CH, H, W = 2, 1, 16, 16
    latent = 48

    x = jax.random.normal(k_in, (N, CH, H, W), jnp.float32)
    params = init_encoder_params(k_par, CH=CH, latent=latent)

    y = encoder_forward(x, params)
    y = jax.block_until_ready(y)

    assert y.shape == (N, latent, 1, 1), y.shape
    assert bool(jnp.all(jnp.isfinite(y)))
    assert bool(jnp.all(jnp.abs(y) <= 1.0))  # tanh range
    print("KERNEL_OK")
</pallas_src>

<mosaic_0001>
module attributes {stable_mosaic.version = 11 : i64} {
  func.func @_encoder_kernel(%arg0: memref<450x128xf32, #tpu.memory_space<vmem>>, %arg1: memref<128x128xf32, #tpu.memory_space<vmem>>, %arg2: memref<20x128x128xf32, #tpu.memory_space<vmem>>, %arg3: memref<4x98x450xf32, #tpu.memory_space<vmem>>, %arg4: memref<4x72x98xf32, #tpu.memory_space<vmem>>, %arg5: memref<4x18x72xf32, #tpu.memory_space<vmem>>, %arg6: memref<4x8x18xf32, #tpu.memory_space<vmem>>, %arg7: memref<4x2x8xf32, #tpu.memory_space<vmem>>, %arg8: memref<6x128xf32, #tpu.memory_space<vmem>>, %arg9: memref<6x128xf32, #tpu.memory_space<vmem>>, %arg10: memref<6x128xf32, #tpu.memory_space<vmem>>, %arg11: memref<2x128xf32, #tpu.memory_space<vmem>>) attributes {dimension_semantics = [], scalar_prefetch = 0 : i64, scratch_operands = 0 : i64, tpu.core_type = #tpu.core_type<tc>} {
    %c0 = arith.constant 0 : index
    %c0_0 = arith.constant 0 : index
    %0 = vector.load %arg0[%c0, %c0_0] : memref<450x128xf32, #tpu.memory_space<vmem>>, vector<450x128xf32>
    %c0_1 = arith.constant 0 : index
    %c0_2 = arith.constant 0 : index
    %1 = vector.load %arg1[%c0_1, %c0_2] : memref<128x128xf32, #tpu.memory_space<vmem>>, vector<128x128xf32>
    %cst = arith.constant dense<0.000000e+00> : vector<450x128xf32>
    %2 = tpu.matmul %0, %1, %cst {dimension_numbers = #tpu.dot_dimension_numbers<[1], [0], [0], [1], [0, 0, 1, 1], [], []>} : vector<450x128xf32>, vector<128x128xf32>, vector<450x128xf32> -> vector<450x128xf32>
    %c0_3 = arith.constant 0 : index
    %c0_4 = arith.constant 0 : index
    %3 = vector.load %arg8[%c0_3, %c0_4] : memref<6x128xf32, #tpu.memory_space<vmem>>, vector<1x128xf32>
    %4 = vector.broadcast %3 : vector<1x128xf32> to vector<450x128xf32>
    %5 = arith.addf %2, %4 : vector<450x128xf32>
    %6 = math.absf %5 : vector<450x128xf32>
    %cst_5 = arith.constant 0.000000e+00 : f32
    %7 = vector.broadcast %cst_5 : f32 to vector<450x128xf32>
    %8 = arith.subf %7, %6 : vector<450x128xf32>
    %9 = math.exp %8 : vector<450x128xf32>
    %cst_6 = arith.constant 0.000000e+00 : f32
    %10 = vector.broadcast %cst_6 : f32 to vector<450x128xf32>
    %11 = arith.cmpf oge, %5, %10 : vector<450x128xf32>
    %cst_7 = arith.constant 2.000000e+00 : f32
    %12 = vector.broadcast %cst_7 : f32 to vector<450x128xf32>
    %13 = arith.mulf %12, %9 : vector<450x128xf32>
    %cst_8 = arith.constant 1.000000e+00 : f32
    %14 = vector.broadcast %cst_8 : f32 to vector<450x128xf32>
    %15 = arith.addf %14, %13 : vector<450x128xf32>
    %cst_9 = arith.constant 2.000000e+00 : f32
    %16 = vector.broadcast %cst_9 : f32 to vector<450x128xf32>
    %17 = arith.addf %9, %16 : vector<450x128xf32>
    %18 = arith.mulf %9, %17 : vector<450x128xf32>
    %19 = arith.select %11, %15, %18 : vector<450x128xi1>, vector<450x128xf32>
    %cst_10 = arith.constant 2.000000e+00 : f32
    %20 = vector.broadcast %cst_10 : f32 to vector<450x128xf32>
    %21 = arith.mulf %20, %9 : vector<450x128xf32>
    %cst_11 = arith.constant 1.000000e+00 : f32
    %22 = vector.broadcast %cst_11 : f32 to vector<450x128xf32>
    %23 = arith.addf %22, %21 : vector<450x128xf32>
    %cst_12 = arith.constant 2.000000e+00 : f32
    %24 = vector.broadcast %cst_12 : f32 to vector<450x128xf32>
    %25 = arith.mulf %24, %9 : vector<450x128xf32>
    %26 = arith.mulf %25, %9 : vector<450x128xf32>
    %27 = arith.addf %23, %26 : vector<450x128xf32>
    %cst_13 = arith.constant 2.000000e+00 : f32
    %28 = vector.broadcast %cst_13 : f32 to vector<450x128xf32>
    %29 = arith.addf %9, %28 : vector<450x128xf32>
    %30 = arith.mulf %9, %29 : vector<450x128xf32>
    %cst_14 = arith.constant 2.000000e+00 : f32
    %31 = vector.broadcast %cst_14 : f32 to vector<450x128xf32>
    %32 = arith.addf %31, %30 : vector<450x128xf32>
    %33 = arith.select %11, %27, %32 : vector<450x128xi1>, vector<450x128xf32>
    %34 = arith.mulf %5, %19 : vector<450x128xf32>
    %35 = tpu.reciprocal %33 {approx = true} : vector<450x128xf32> -> vector<450x128xf32>
    %36 = arith.mulf %34, %35 : vector<450x128xf32>
    %cst_15 = arith.constant dense<0.000000e+00> : vector<128xf32>
    %37 = vector.multi_reduction <add>, %36, %cst_15 [0] : vector<450x128xf32> to vector<128xf32>
    %38 = vector.shape_cast %37 : vector<128xf32> to vector<1x128xf32>
    %cst_16 = arith.constant 0.00222222228 : f32
    %39 = vector.broadcast %cst_16 : f32 to vector<1x128xf32>
    %40 = arith.mulf %38, %39 : vector<1x128xf32>
    %41 = arith.mulf %36, %36 : vector<450x128xf32>
    %cst_17 = arith.constant dense<0.000000e+00> : vector<128xf32>
    %42 = vector.multi_reduction <add>, %41, %cst_17 [0] : vector<450x128xf32> to vector<128xf32>
    %43 = vector.shape_cast %42 : vector<128xf32> to vector<1x128xf32>
    %cst_18 = arith.constant 0.00222222228 : f32
    %44 = vector.broadcast %cst_18 : f32 to vector<1x128xf32>
    %45 = arith.mulf %43, %44 : vector<1x128xf32>
    %46 = arith.mulf %40, %40 : vector<1x128xf32>
    %47 = arith.subf %45, %46 : vector<1x128xf32>
    %cst_19 = arith.constant 0.000000e+00 : f32
    %48 = vector.broadcast %cst_19 : f32 to vector<1x128xf32>
    %49 = arith.maximumf %47, %48 : vector<1x128xf32>
    %cst_20 = arith.constant 9.99999974E-6 : f32
    %50 = vector.broadcast %cst_20 : f32 to vector<1x128xf32>
    %51 = arith.addf %49, %50 : vector<1x128xf32>
    %52 = math.rsqrt %51 : vector<1x128xf32>
    %c0_21 = arith.constant 0 : index
    %c0_22 = arith.constant 0 : index
    %53 = vector.load %arg9[%c0_21, %c0_22] : memref<6x128xf32, #tpu.memory_space<vmem>>, vector<1x128xf32>
    %54 = arith.mulf %52, %53 : vector<1x128xf32>
    %c0_23 = arith.constant 0 : index
    %c0_24 = arith.constant 0 : index
    %55 = vector.load %arg10[%c0_23, %c0_24] : memref<6x128xf32, #tpu.memory_space<vmem>>, vector<1x128xf32>
    %56 = arith.mulf %40, %54 : vector<1x128xf32>
    %57 = arith.subf %55, %56 : vector<1x128xf32>
    %58 = vector.broadcast %54 : vector<1x128xf32> to vector<450x128xf32>
    %59 = arith.mulf %36, %58 : vector<450x128xf32>
    %60 = vector.broadcast %57 : vector<1x128xf32> to vector<450x128xf32>
    %61 = arith.addf %59, %60 : vector<450x128xf32>
    %c0_25 = arith.constant 0 : index
    %c0_26 = arith.constant 0 : index
    %c0_27 = arith.constant 0 : index
    %62 = vector.load %arg3[%c0_25, %c0_26, %c0_27] : memref<4x98x450xf32, #tpu.memory_space<vmem>>, vector<1x98x450xf32>
    %63 = vector.shape_cast %62 : vector<1x98x450xf32> to vector<98x450xf32>
    %cst_28 = arith.constant dense<0.000000e+00> : vector<98x128xf32>
    %64 = tpu.matmul %63, %61, %cst_28 {dimension_numbers = #tpu.dot_dimension_numbers<[1], [0], [0], [1], [0, 0, 1, 1], [], []>} : vector<98x450xf32>, vector<450x128xf32>, vector<98x128xf32> -> vector<98x128xf32>
    %c0_29 = arith.constant 0 : index
    %c0_30 = arith.constant 0 : index
    %c0_31 = arith.constant 0 : index
    %65 = vector.load %arg2[%c0_29, %c0_30, %c0_31] : memref<20x128x128xf32, #tpu.memory_space<vmem>>, vector<1x128x128xf32>
    %66 = vector.shape_cast %65 : vector<1x128x128xf32> to vector<128x128xf32>
    %cst_32 = arith.constant dense<0.000000e+00> : vector<98x128xf32>
    %67 = tpu.matmul %64, %66, %cst_32 {dimension_numbers = #tpu.dot_dimension_numbers<[1], [0], [0], [1], [0, 0, 1, 1], [], []>} : vector<98x128xf32>, vector<128x128xf32>, vector<98x128xf32> -> vector<98x128xf32>
    %c1 = arith.constant 1 : index
    %c0_33 = arith.constant 0 : index
    %c0_34 = arith.constant 0 : index
    %68 = vector.load %arg3[%c1, %c0_33, %c0_34] : memref<4x98x450xf32, #tpu.memory_space<vmem>>, vector<1x98x450xf32>
    %69 = vector.shape_cast %68 : vector<1x98x450xf32> to vector<98x450xf32>
    %cst_35 = arith.constant dense<0.000000e+00> : vector<98x128xf32>
    %70 = tpu.matmul %69, %61, %cst_35 {dimension_numbers = #tpu.dot_dimension_numbers<[1], [0], [0], [1], [0, 0, 1, 1], [], []>} : vector<98x450xf32>, vector<450x128xf32>, vector<98x128xf32> -> vector<98x128xf32>
    %c1_36 = arith.constant 1 : index
    %c0_37 = arith.constant 0 : index
    %c0_38 = arith.constant 0 : index
    %71 = vector.load %arg2[%c1_36, %c0_37, %c0_38] : memref<20x128x128xf32, #tpu.memory_space<vmem>>, vector<1x128x128xf32>
    %72 = vector.shape_cast %71 : vector<1x128x128xf32> to vector<128x128xf32>
    %cst_39 = arith.constant dense<0.000000e+00> : vector<98x128xf32>
    %73 = tpu.matmul %70, %72, %cst_39 {dimension_numbers = #tpu.dot_dimension_numbers<[1], [0], [0], [1], [0, 0, 1, 1], [], []>} : vector<98x128xf32>, vector<128x128xf32>, vector<98x128xf32> -> vector<98x128xf32>
    %74 = arith.addf %67, %73 : vector<98x128xf32>
    %c2 = arith.constant 2 : index
    %c0_40 = arith.constant 0 : index
    %c0_41 = arith.constant 0 : index
    %75 = vector.load %arg3[%c2, %c0_40, %c0_41] : memref<4x98x450xf32, #tpu.memory_space<vmem>>, vector<1x98x450xf32>
    %76 = vector.shape_cast %75 : vector<1x98x450xf32> to vector<98x450xf32>
    %cst_42 = arith.constant dense<0.000000e+00> : vector<98x128xf32>
    %77 = tpu.matmul %76, %61, %cst_42 {dimension_numbers = #tpu.dot_dimension_numbers<[1], [0], [0], [1], [0, 0, 1, 1], [], []>} : vector<98x450xf32>, vector<450x128xf32>, vector<98x128xf32> -> vector<98x128xf32>
    %c2_43 = arith.constant 2 : index
    %c0_44 = arith.constant 0 : index
    %c0_45 = arith.constant 0 : index
    %78 = vector.load %arg2[%c2_43, %c0_44, %c0_45] : memref<20x128x128xf32, #tpu.memory_space<vmem>>, vector<1x128x128xf32>
    %79 = vector.shape_cast %78 : vector<1x128x128xf32> to vector<128x128xf32>
    %cst_46 = arith.constant dense<0.000000e+00> : vector<98x128xf32>
    %80 = tpu.matmul %77, %79, %cst_46 {dimension_numbers = #tpu.dot_dimension_numbers<[1], [0], [0], [1], [0, 0, 1, 1], [], []>} : vector<98x128xf32>, vector<128x128xf32>, vector<98x128xf32> -> vector<98x128xf32>
    %81 = arith.addf %74, %80 : vector<98x128xf32>
    %c3 = arith.constant 3 : index
    %c0_47 = arith.constant 0 : index
    %c0_48 = arith.constant 0 : index
    %82 = vector.load %arg3[%c3, %c0_47, %c0_48] : memref<4x98x450xf32, #tpu.memory_space<vmem>>, vector<1x98x450xf32>
    %83 = vector.shape_cast %82 : vector<1x98x450xf32> to vector<98x450xf32>
    %cst_49 = arith.constant dense<0.000000e+00> : vector<98x128xf32>
    %84 = tpu.matmul %83, %61, %cst_49 {dimension_numbers = #tpu.dot_dimension_numbers<[1], [0], [0], [1], [0, 0, 1, 1], [], []>} : vector<98x450xf32>, vector<450x128xf32>, vector<98x128xf32> -> vector<98x128xf32>
    %c3_50 = arith.constant 3 : index
    %c0_51 = arith.constant 0 : index
    %c0_52 = arith.constant 0 : index
    %85 = vector.load %arg2[%c3_50, %c0_51, %c0_52] : memref<20x128x128xf32, #tpu.memory_space<vmem>>, vector<1x128x128xf32>
    %86 = vector.shape_cast %85 : vector<1x128x128xf32> to vector<128x128xf32>
    %cst_53 = arith.constant dense<0.000000e+00> : vector<98x128xf32>
    %87 = tpu.matmul %84, %86, %cst_53 {dimension_numbers = #tpu.dot_dimension_numbers<[1], [0], [0], [1], [0, 0, 1, 1], [], []>} : vector<98x128xf32>, vector<128x128xf32>, vector<98x128xf32> -> vector<98x128xf32>
    %88 = arith.addf %81, %87 : vector<98x128xf32>
    %c1_54 = arith.constant 1 : index
    %c0_55 = arith.constant 0 : index
    %89 = vector.load %arg8[%c1_54, %c0_55] : memref<6x128xf32, #tpu.memory_space<vmem>>, vector<1x128xf32>
    %90 = vector.broadcast %89 : vector<1x128xf32> to vector<98x128xf32>
    %91 = arith.addf %88, %90 : vector<98x128xf32>
    %92 = math.absf %91 : vector<98x128xf32>
    %cst_56 = arith.constant 0.000000e+00 : f32
    %93 = vector.broadcast %cst_56 : f32 to vector<98x128xf32>
    %94 = arith.subf %93, %92 : vector<98x128xf32>
    %95 = math.exp %94 : vector<98x128xf32>
    %cst_57 = arith.constant 0.000000e+00 : f32
    %96 = vector.broadcast %cst_57 : f32 to vector<98x128xf32>
    %97 = arith.cmpf oge, %91, %96 : vector<98x128xf32>
    %cst_58 = arith.constant 2.000000e+00 : f32
    %98 = vector.broadcast %cst_58 : f32 to vector<98x128xf32>
    %99 = arith.mulf %98, %95 : vector<98x128xf32>
    %cst_59 = arith.constant 1.000000e+00 : f32
    %100 = vector.broadcast %cst_59 : f32 to vector<98x128xf32>
    %101 = arith.addf %100, %99 : vector<98x128xf32>
    %cst_60 = arith.constant 2.000000e+00 : f32
    %102 = vector.broadcast %cst_60 : f32 to vector<98x128xf32>
    %103 = arith.addf %95, %102 : vector<98x128xf32>
    %104 = arith.mulf %95, %103 : vector<98x128xf32>
    %105 = arith.select %97, %101, %104 : vector<98x128xi1>, vector<98x128xf32>
    %cst_61 = arith.constant 2.000000e+00 : f32
    %106 = vector.broadcast %cst_61 : f32 to vector<98x128xf32>
    %107 = arith.mulf %106, %95 : vector<98x128xf32>
    %cst_62 = arith.constant 1.000000e+00 : f32
    %108 = vector.broadcast %cst_62 : f32 to vector<98x128xf32>
    %109 = arith.addf %108, %107 : vector<98x128xf32>
    %cst_63 = arith.constant 2.000000e+00 : f32
    %110 = vector.broadcast %cst_63 : f32 to vector<98x128xf32>
    %111 = arith.mulf %110, %95 : vector<98x128xf32>
    %112 = arith.mulf %111, %95 : vector<98x128xf32>
    %113 = arith.addf %109, %112 : vector<98x128xf32>
    %cst_64 = arith.constant 2.000000e+00 : f32
    %114 = vector.broadcast %cst_64 : f32 to vector<98x128xf32>
    %115 = arith.addf %95, %114 : vector<98x128xf32>
    %116 = arith.mulf %95, %115 : vector<98x128xf32>
    %cst_65 = arith.constant 2.000000e+00 : f32
    %117 = vector.broadcast %cst_65 : f32 to vector<98x128xf32>
    %118 = arith.addf %117, %116 : vector<98x128xf32>
    %119 = arith.select %97, %113, %118 : vector<98x128xi1>, vector<98x128xf32>
    %120 = arith.mulf %91, %105 : vector<98x128xf32>
    %121 = tpu.reciprocal %119 {approx = true} : vector<98x128xf32> -> vector<98x128xf32>
    %122 = arith.mulf %120, %121 : vector<98x128xf32>
    %cst_66 = arith.constant dense<0.000000e+00> : vector<128xf32>
    %123 = vector.multi_reduction <add>, %122, %cst_66 [0] : vector<98x128xf32> to vector<128xf32>
    %124 = vector.shape_cast %123 : vector<128xf32> to vector<1x128xf32>
    %cst_67 = arith.constant 0.0102040814 : f32
    %125 = vector.broadcast %cst_67 : f32 to vector<1x128xf32>
    %126 = arith.mulf %124, %125 : vector<1x128xf32>
    %127 = arith.mulf %122, %122 : vector<98x128xf32>
    %cst_68 = arith.constant dense<0.000000e+00> : vector<128xf32>
    %128 = vector.multi_reduction <add>, %127, %cst_68 [0] : vector<98x128xf32> to vector<128xf32>
    %129 = vector.shape_cast %128 : vector<128xf32> to vector<1x128xf32>
    %cst_69 = arith.constant 0.0102040814 : f32
    %130 = vector.broadcast %cst_69 : f32 to vector<1x128xf32>
    %131 = arith.mulf %129, %130 : vector<1x128xf32>
    %132 = arith.mulf %126, %126 : vector<1x128xf32>
    %133 = arith.subf %131, %132 : vector<1x128xf32>
    %cst_70 = arith.constant 0.000000e+00 : f32
    %134 = vector.broadcast %cst_70 : f32 to vector<1x128xf32>
    %135 = arith.maximumf %133, %134 : vector<1x128xf32>
    %cst_71 = arith.constant 9.99999974E-6 : f32
    %136 = vector.broadcast %cst_71 : f32 to vector<1x128xf32>
    %137 = arith.addf %135, %136 : vector<1x128xf32>
    %138 = math.rsqrt %137 : vector<1x128xf32>
    %c1_72 = arith.constant 1 : index
    %c0_73 = arith.constant 0 : index
    %139 = vector.load %arg9[%c1_72, %c0_73] : memref<6x128xf32, #tpu.memory_space<vmem>>, vector<1x128xf32>
    %140 = arith.mulf %138, %139 : vector<1x128xf32>
    %c1_74 = arith.constant 1 : index
    %c0_75 = arith.constant 0 : index
    %141 = vector.load %arg10[%c1_74, %c0_75] : memref<6x128xf32, #tpu.memory_space<vmem>>, vector<1x128xf32>
    %142 = arith.mulf %126, %140 : vector<1x128xf32>
    %143 = arith.subf %141, %142 : vector<1x128xf32>
    %144 = vector.broadcast %140 : vector<1x128xf32> to vector<98x128xf32>
    %145 = arith.mulf %122, %144 : vector<98x128xf32>
    %146 = vector.broadcast %143 : vector<1x128xf32> to vector<98x128xf32>
    %147 = arith.addf %145, %146 : vector<98x128xf32>
    %c0_76 = arith.constant 0 : index
    %c0_77 = arith.constant 0 : index
    %c0_78 = arith.constant 0 : index
    %148 = vector.load %arg4[%c0_76, %c0_77, %c0_78] : memref<4x72x98xf32, #tpu.memory_space<vmem>>, vector<1x72x98xf32>
    %149 = vector.shape_cast %148 : vector<1x72x98xf32> to vector<72x98xf32>
    %cst_79 = arith.constant dense<0.000000e+00> : vector<72x128xf32>
    %150 = tpu.matmul %149, %147, %cst_79 {dimension_numbers = #tpu.dot_dimension_numbers<[1], [0], [0], [1], [0, 0, 1, 1], [], []>} : vector<72x98xf32>, vector<98x128xf32>, vector<72x128xf32> -> vector<72x128xf32>
    %c4 = arith.constant 4 : index
    %c0_80 = arith.constant 0 : index
    %c0_81 = arith.constant 0 : index
    %151 = vector.load %arg2[%c4, %c0_80, %c0_81] : memref<20x128x128xf32, #tpu.memory_space<vmem>>, vector<1x128x128xf32>
    %152 = vector.shape_cast %151 : vector<1x128x128xf32> to vector<128x128xf32>
    %cst_82 = arith.constant dense<0.000000e+00> : vector<72x128xf32>
    %153 = tpu.matmul %150, %152, %cst_82 {dimension_numbers = #tpu.dot_dimension_numbers<[1], [0], [0], [1], [0, 0, 1, 1], [], []>} : vector<72x128xf32>, vector<128x128xf32>, vector<72x128xf32> -> vector<72x128xf32>
    %c1_83 = arith.constant 1 : index
    %c0_84 = arith.constant 0 : index
    %c0_85 = arith.constant 0 : index
    %154 = vector.load %arg4[%c1_83, %c0_84, %c0_85] : memref<4x72x98xf32, #tpu.memory_space<vmem>>, vector<1x72x98xf32>
    %155 = vector.shape_cast %154 : vector<1x72x98xf32> to vector<72x98xf32>
    %cst_86 = arith.constant dense<0.000000e+00> : vector<72x128xf32>
    %156 = tpu.matmul %155, %147, %cst_86 {dimension_numbers = #tpu.dot_dimension_numbers<[1], [0], [0], [1], [0, 0, 1, 1], [], []>} : vector<72x98xf32>, vector<98x128xf32>, vector<72x128xf32> -> vector<72x128xf32>
    %c5 = arith.constant 5 : index
    %c0_87 = arith.constant 0 : index
    %c0_88 = arith.constant 0 : index
    %157 = vector.load %arg2[%c5, %c0_87, %c0_88] : memref<20x128x128xf32, #tpu.memory_space<vmem>>, vector<1x128x128xf32>
    %158 = vector.shape_cast %157 : vector<1x128x128xf32> to vector<128x128xf32>
    %cst_89 = arith.constant dense<0.000000e+00> : vector<72x128xf32>
    %159 = tpu.matmul %156, %158, %cst_89 {dimension_numbers = #tpu.dot_dimension_numbers<[1], [0], [0], [1], [0, 0, 1, 1], [], []>} : vector<72x128xf32>, vector<128x128xf32>, vector<72x128xf32> -> vector<72x128xf32>
    %160 = arith.addf %153, %159 : vector<72x128xf32>
    %c2_90 = arith.constant 2 : index
    %c0_91 = arith.constant 0 : index
    %c0_92 = arith.constant 0 : index
    %161 = vector.load %arg4[%c2_90, %c0_91, %c0_92] : memref<4x72x98xf32, #tpu.memory_space<vmem>>, vector<1x72x98xf32>
    %162 = vector.shape_cast %161 : vector<1x72x98xf32> to vector<72x98xf32>
    %cst_93 = arith.constant dense<0.000000e+00> : vector<72x128xf32>
    %163 = tpu.matmul %162, %147, %cst_93 {dimension_numbers = #tpu.dot_dimension_numbers<[1], [0], [0], [1], [0, 0, 1, 1], [], []>} : vector<72x98xf32>, vector<98x128xf32>, vector<72x128xf32> -> vector<72x128xf32>
    %c6 = arith.constant 6 : index
    %c0_94 = arith.constant 0 : index
    %c0_95 = arith.constant 0 : index
    %164 = vector.load %arg2[%c6, %c0_94, %c0_95] : memref<20x128x128xf32, #tpu.memory_space<vmem>>, vector<1x128x128xf32>
    %165 = vector.shape_cast %164 : vector<1x128x128xf32> to vector<128x128xf32>
    %cst_96 = arith.constant dense<0.000000e+00> : vector<72x128xf32>
    %166 = tpu.matmul %163, %165, %cst_96 {dimension_numbers = #tpu.dot_dimension_numbers<[1], [0], [0], [1], [0, 0, 1, 1], [], []>} : vector<72x128xf32>, vector<128x128xf32>, vector<72x128xf32> -> vector<72x128xf32>
    %167 = arith.addf %160, %166 : vector<72x128xf32>
    %c3_97 = arith.constant 3 : index
    %c0_98 = arith.constant 0 : index
    %c0_99 = arith.constant 0 : index
    %168 = vector.load %arg4[%c3_97, %c0_98, %c0_99] : memref<4x72x98xf32, #tpu.memory_space<vmem>>, vector<1x72x98xf32>
    %169 = vector.shape_cast %168 : vector<1x72x98xf32> to vector<72x98xf32>
    %cst_100 = arith.constant dense<0.000000e+00> : vector<72x128xf32>
    %170 = tpu.matmul %169, %147, %cst_100 {dimension_numbers = #tpu.dot_dimension_numbers<[1], [0], [0], [1], [0, 0, 1, 1], [], []>} : vector<72x98xf32>, vector<98x128xf32>, vector<72x128xf32> -> vector<72x128xf32>
    %c7 = arith.constant 7 : index
    %c0_101 = arith.constant 0 : index
    %c0_102 = arith.constant 0 : index
    %171 = vector.load %arg2[%c7, %c0_101, %c0_102] : memref<20x128x128xf32, #tpu.memory_space<vmem>>, vector<1x128x128xf32>
    %172 = vector.shape_cast %171 : vector<1x128x128xf32> to vector<128x128xf32>
    %cst_103 = arith.constant dense<0.000000e+00> : vector<72x128xf32>
    %173 = tpu.matmul %170, %172, %cst_103 {dimension_numbers = #tpu.dot_dimension_numbers<[1], [0], [0], [1], [0, 0, 1, 1], [], []>} : vector<72x128xf32>, vector<128x128xf32>, vector<72x128xf32> -> vector<72x128xf32>
    %174 = arith.addf %167, %173 : vector<72x128xf32>
    %c2_104 = arith.constant 2 : index
    %c0_105 = arith.constant 0 : index
    %175 = vector.load %arg8[%c2_104, %c0_105] : memref<6x128xf32, #tpu.memory_space<vmem>>, vector<1x128xf32>
    %176 = vector.broadcast %175 : vector<1x128xf32> to vector<72x128xf32>
    %177 = arith.addf %174, %176 : vector<72x128xf32>
    %178 = math.absf %177 : vector<72x128xf32>
    %cst_106 = arith.constant 0.000000e+00 : f32
    %179 = vector.broadcast %cst_106 : f32 to vector<72x128xf32>
    %180 = arith.subf %179, %178 : vector<72x128xf32>
    %181 = math.exp %180 : vector<72x128xf32>
    %cst_107 = arith.constant 0.000000e+00 : f32
    %182 = vector.broadcast %cst_107 : f32 to vector<72x128xf32>
    %183 = arith.cmpf oge, %177, %182 : vector<72x128xf32>
    %cst_108 = arith.constant 2.000000e+00 : f32
    %184 = vector.broadcast %cst_108 : f32 to vector<72x128xf32>
    %185 = arith.mulf %184, %181 : vector<72x128xf32>
    %cst_109 = arith.constant 1.000000e+00 : f32
    %186 = vector.broadcast %cst_109 : f32 to vector<72x128xf32>
    %187 = arith.addf %186, %185 : vector<72x128xf32>
    %cst_110 = arith.constant 2.000000e+00 : f32
    %188 = vector.broadcast %cst_110 : f32 to vector<72x128xf32>
    %189 = arith.addf %181, %188 : vector<72x128xf32>
    %190 = arith.mulf %181, %189 : vector<72x128xf32>
    %191 = arith.select %183, %187, %190 : vector<72x128xi1>, vector<72x128xf32>
    %cst_111 = arith.constant 2.000000e+00 : f32
    %192 = vector.broadcast %cst_111 : f32 to vector<72x128xf32>
    %193 = arith.mulf %192, %181 : vector<72x128xf32>
    %cst_112 = arith.constant 1.000000e+00 : f32
    %194 = vector.broadcast %cst_112 : f32 to vector<72x128xf32>
    %195 = arith.addf %194, %193 : vector<72x128xf32>
    %cst_113 = arith.constant 2.000000e+00 : f32
    %196 = vector.broadcast %cst_113 : f32 to vector<72x128xf32>
    %197 = arith.mulf %196, %181 : vector<72x128xf32>
    %198 = arith.mulf %197, %181 : vector<72x128xf32>
    %199 = arith.addf %195, %198 : vector<72x128xf32>
    %cst_114 = arith.constant 2.000000e+00 : f32
    %200 = vector.broadcast %cst_114 : f32 to vector<72x128xf32>
    %201 = arith.addf %181, %200 : vector<72x128xf32>
    %202 = arith.mulf %181, %201 : vector<72x128xf32>
    %cst_115 = arith.constant 2.000000e+00 : f32
    %203 = vector.broadcast %cst_115 : f32 to vector<72x128xf32>
    %204 = arith.addf %203, %202 : vector<72x128xf32>
    %205 = arith.select %183, %199, %204 : vector<72x128xi1>, vector<72x128xf32>
    %206 = arith.mulf %177, %191 : vector<72x128xf32>
    %207 = tpu.reciprocal %205 {approx = true} : vector<72x128xf32> -> vector<72x128xf32>
    %208 = arith.mulf %206, %207 : vector<72x128xf32>
    %cst_116 = arith.constant dense<0.000000e+00> : vector<128xf32>
    %209 = vector.multi_reduction <add>, %208, %cst_116 [0] : vector<72x128xf32> to vector<128xf32>
    %210 = vector.shape_cast %209 : vector<128xf32> to vector<1x128xf32>
    %cst_117 = arith.constant 0.013888889 : f32
    %211 = vector.broadcast %cst_117 : f32 to vector<1x128xf32>
    %212 = arith.mulf %210, %211 : vector<1x128xf32>
    %213 = arith.mulf %208, %208 : vector<72x128xf32>
    %cst_118 = arith.constant dense<0.000000e+00> : vector<128xf32>
    %214 = vector.multi_reduction <add>, %213, %cst_118 [0] : vector<72x128xf32> to vector<128xf32>
    %215 = vector.shape_cast %214 : vector<128xf32> to vector<1x128xf32>
    %cst_119 = arith.constant 0.013888889 : f32
    %216 = vector.broadcast %cst_119 : f32 to vector<1x128xf32>
    %217 = arith.mulf %215, %216 : vector<1x128xf32>
    %218 = arith.mulf %212, %212 : vector<1x128xf32>
    %219 = arith.subf %217, %218 : vector<1x128xf32>
    %cst_120 = arith.constant 0.000000e+00 : f32
    %220 = vector.broadcast %cst_120 : f32 to vector<1x128xf32>
    %221 = arith.maximumf %219, %220 : vector<1x128xf32>
    %cst_121 = arith.constant 9.99999974E-6 : f32
    %222 = vector.broadcast %cst_121 : f32 to vector<1x128xf32>
    %223 = arith.addf %221, %222 : vector<1x128xf32>
    %224 = math.rsqrt %223 : vector<1x128xf32>
    %c2_122 = arith.constant 2 : index
    %c0_123 = arith.constant 0 : index
    %225 = vector.load %arg9[%c2_122, %c0_123] : memref<6x128xf32, #tpu.memory_space<vmem>>, vector<1x128xf32>
    %226 = arith.mulf %224, %225 : vector<1x128xf32>
    %c2_124 = arith.constant 2 : index
    %c0_125 = arith.constant 0 : index
    %227 = vector.load %arg10[%c2_124, %c0_125] : memref<6x128xf32, #tpu.memory_space<vmem>>, vector<1x128xf32>
    %228 = arith.mulf %212, %226 : vector<1x128xf32>
    %229 = arith.subf %227, %228 : vector<1x128xf32>
    %230 = vector.broadcast %226 : vector<1x128xf32> to vector<72x128xf32>
    %231 = arith.mulf %208, %230 : vector<72x128xf32>
    %232 = vector.broadcast %229 : vector<1x128xf32> to vector<72x128xf32>
    %233 = arith.addf %231, %232 : vector<72x128xf32>
    %c0_126 = arith.constant 0 : index
    %c0_127 = arith.constant 0 : index
    %c0_128 = arith.constant 0 : index
    %234 = vector.load %arg5[%c0_126, %c0_127, %c0_128] : memref<4x18x72xf32, #tpu.memory_space<vmem>>, vector<1x18x72xf32>
    %235 = vector.shape_cast %234 : vector<1x18x72xf32> to vector<18x72xf32>
    %cst_129 = arith.constant dense<0.000000e+00> : vector<18x128xf32>
    %236 = tpu.matmul %235, %233, %cst_129 {dimension_numbers = #tpu.dot_dimension_numbers<[1], [0], [0], [1], [0, 0, 1, 1], [], []>} : vector<18x72xf32>, vector<72x128xf32>, vector<18x128xf32> -> vector<18x128xf32>
    %c8 = arith.constant 8 : index
    %c0_130 = arith.constant 0 : index
    %c0_131 = arith.constant 0 : index
    %237 = vector.load %arg2[%c8, %c0_130, %c0_131] : memref<20x128x128xf32, #tpu.memory_space<vmem>>, vector<1x128x128xf32>
    %238 = vector.shape_cast %237 : vector<1x128x128xf32> to vector<128x128xf32>
    %cst_132 = arith.constant dense<0.000000e+00> : vector<18x128xf32>
    %239 = tpu.matmul %236, %238, %cst_132 {dimension_numbers = #tpu.dot_dimension_numbers<[1], [0], [0], [1], [0, 0, 1, 1], [], []>} : vector<18x128xf32>, vector<128x128xf32>, vector<18x128xf32> -> vector<18x128xf32>
    %c1_133 = arith.constant 1 : index
    %c0_134 = arith.constant 0 : index
    %c0_135 = arith.constant 0 : index
    %240 = vector.load %arg5[%c1_133, %c0_134, %c0_135] : memref<4x18x72xf32, #tpu.memory_space<vmem>>, vector<1x18x72xf32>
    %241 = vector.shape_cast %240 : vector<1x18x72xf32> to vector<18x72xf32>
    %cst_136 = arith.constant dense<0.000000e+00> : vector<18x128xf32>
    %242 = tpu.matmul %241, %233, %cst_136 {dimension_numbers = #tpu.dot_dimension_numbers<[1], [0], [0], [1], [0, 0, 1, 1], [], []>} : vector<18x72xf32>, vector<72x128xf32>, vector<18x128xf32> -> vector<18x128xf32>
    %c9 = arith.constant 9 : index
    %c0_137 = arith.constant 0 : index
    %c0_138 = arith.constant 0 : index
    %243 = vector.load %arg2[%c9, %c0_137, %c0_138] : memref<20x128x128xf32, #tpu.memory_space<vmem>>, vector<1x128x128xf32>
    %244 = vector.shape_cast %243 : vector<1x128x128xf32> to vector<128x128xf32>
    %cst_139 = arith.constant dense<0.000000e+00> : vector<18x128xf32>
    %245 = tpu.matmul %242, %244, %cst_139 {dimension_numbers = #tpu.dot_dimension_numbers<[1], [0], [0], [1], [0, 0, 1, 1], [], []>} : vector<18x128xf32>, vector<128x128xf32>, vector<18x128xf32> -> vector<18x128xf32>
    %246 = arith.addf %239, %245 : vector<18x128xf32>
    %c2_140 = arith.constant 2 : index
    %c0_141 = arith.constant 0 : index
    %c0_142 = arith.constant 0 : index
    %247 = vector.load %arg5[%c2_140, %c0_141, %c0_142] : memref<4x18x72xf32, #tpu.memory_space<vmem>>, vector<1x18x72xf32>
    %248 = vector.shape_cast %247 : vector<1x18x72xf32> to vector<18x72xf32>
    %cst_143 = arith.constant dense<0.000000e+00> : vector<18x128xf32>
    %249 = tpu.matmul %248, %233, %cst_143 {dimension_numbers = #tpu.dot_dimension_numbers<[1], [0], [0], [1], [0, 0, 1, 1], [], []>} : vector<18x72xf32>, vector<72x128xf32>, vector<18x128xf32> -> vector<18x128xf32>
    %c10 = arith.constant 10 : index
    %c0_144 = arith.constant 0 : index
    %c0_145 = arith.constant 0 : index
    %250 = vector.load %arg2[%c10, %c0_144, %c0_145] : memref<20x128x128xf32, #tpu.memory_space<vmem>>, vector<1x128x128xf32>
    %251 = vector.shape_cast %250 : vector<1x128x128xf32> to vector<128x128xf32>
    %cst_146 = arith.constant dense<0.000000e+00> : vector<18x128xf32>
    %252 = tpu.matmul %249, %251, %cst_146 {dimension_numbers = #tpu.dot_dimension_numbers<[1], [0], [0], [1], [0, 0, 1, 1], [], []>} : vector<18x128xf32>, vector<128x128xf32>, vector<18x128xf32> -> vector<18x128xf32>
    %253 = arith.addf %246, %252 : vector<18x128xf32>
    %c3_147 = arith.constant 3 : index
    %c0_148 = arith.constant 0 : index
    %c0_149 = arith.constant 0 : index
    %254 = vector.load %arg5[%c3_147, %c0_148, %c0_149] : memref<4x18x72xf32, #tpu.memory_space<vmem>>, vector<1x18x72xf32>
    %255 = vector.shape_cast %254 : vector<1x18x72xf32> to vector<18x72xf32>
    %cst_150 = arith.constant dense<0.000000e+00> : vector<18x128xf32>
    %256 = tpu.matmul %255, %233, %cst_150 {dimension_numbers = #tpu.dot_dimension_numbers<[1], [0], [0], [1], [0, 0, 1, 1], [], []>} : vector<18x72xf32>, vector<72x128xf32>, vector<18x128xf32> -> vector<18x128xf32>
    %c11 = arith.constant 11 : index
    %c0_151 = arith.constant 0 : index
    %c0_152 = arith.constant 0 : index
    %257 = vector.load %arg2[%c11, %c0_151, %c0_152] : memref<20x128x128xf32, #tpu.memory_space<vmem>>, vector<1x128x128xf32>
    %258 = vector.shape_cast %257 : vector<1x128x128xf32> to vector<128x128xf32>
    %cst_153 = arith.constant dense<0.000000e+00> : vector<18x128xf32>
    %259 = tpu.matmul %256, %258, %cst_153 {dimension_numbers = #tpu.dot_dimension_numbers<[1], [0], [0], [1], [0, 0, 1, 1], [], []>} : vector<18x128xf32>, vector<128x128xf32>, vector<18x128xf32> -> vector<18x128xf32>
    %260 = arith.addf %253, %259 : vector<18x128xf32>
    %c3_154 = arith.constant 3 : index
    %c0_155 = arith.constant 0 : index
    %261 = vector.load %arg8[%c3_154, %c0_155] : memref<6x128xf32, #tpu.memory_space<vmem>>, vector<1x128xf32>
    %262 = vector.broadcast %261 : vector<1x128xf32> to vector<18x128xf32>
    %263 = arith.addf %260, %262 : vector<18x128xf32>
    %264 = math.absf %263 : vector<18x128xf32>
    %cst_156 = arith.constant 0.000000e+00 : f32
    %265 = vector.broadcast %cst_156 : f32 to vector<18x128xf32>
    %266 = arith.subf %265, %264 : vector<18x128xf32>
    %267 = math.exp %266 : vector<18x128xf32>
    %cst_157 = arith.constant 0.000000e+00 : f32
    %268 = vector.broadcast %cst_157 : f32 to vector<18x128xf32>
    %269 = arith.cmpf oge, %263, %268 : vector<18x128xf32>
    %cst_158 = arith.constant 2.000000e+00 : f32
    %270 = vector.broadcast %cst_158 : f32 to vector<18x128xf32>
    %271 = arith.mulf %270, %267 : vector<18x128xf32>
    %cst_159 = arith.constant 1.000000e+00 : f32
    %272 = vector.broadcast %cst_159 : f32 to vector<18x128xf32>
    %273 = arith.addf %272, %271 : vector<18x128xf32>
    %cst_160 = arith.constant 2.000000e+00 : f32
    %274 = vector.broadcast %cst_160 : f32 to vector<18x128xf32>
    %275 = arith.addf %267, %274 : vector<18x128xf32>
    %276 = arith.mulf %267, %275 : vector<18x128xf32>
    %277 = arith.select %269, %273, %276 : vector<18x128xi1>, vector<18x128xf32>
    %cst_161 = arith.constant 2.000000e+00 : f32
    %278 = vector.broadcast %cst_161 : f32 to vector<18x128xf32>
    %279 = arith.mulf %278, %267 : vector<18x128xf32>
    %cst_162 = arith.constant 1.000000e+00 : f32
    %280 = vector.broadcast %cst_162 : f32 to vector<18x128xf32>
    %281 = arith.addf %280, %279 : vector<18x128xf32>
    %cst_163 = arith.constant 2.000000e+00 : f32
    %282 = vector.broadcast %cst_163 : f32 to vector<18x128xf32>
    %283 = arith.mulf %282, %267 : vector<18x128xf32>
    %284 = arith.mulf %283, %267 : vector<18x128xf32>
    %285 = arith.addf %281, %284 : vector<18x128xf32>
    %cst_164 = arith.constant 2.000000e+00 : f32
    %286 = vector.broadcast %cst_164 : f32 to vector<18x128xf32>
    %287 = arith.addf %267, %286 : vector<18x128xf32>
    %288 = arith.mulf %267, %287 : vector<18x128xf32>
    %cst_165 = arith.constant 2.000000e+00 : f32
    %289 = vector.broadcast %cst_165 : f32 to vector<18x128xf32>
    %290 = arith.addf %289, %288 : vector<18x128xf32>
    %291 = arith.select %269, %285, %290 : vector<18x128xi1>, vector<18x128xf32>
    %292 = arith.mulf %263, %277 : vector<18x128xf32>
    %293 = tpu.reciprocal %291 {approx = true} : vector<18x128xf32> -> vector<18x128xf32>
    %294 = arith.mulf %292, %293 : vector<18x128xf32>
    %cst_166 = arith.constant dense<0.000000e+00> : vector<128xf32>
    %295 = vector.multi_reduction <add>, %294, %cst_166 [0] : vector<18x128xf32> to vector<128xf32>
    %296 = vector.shape_cast %295 : vector<128xf32> to vector<1x128xf32>
    %cst_167 = arith.constant 0.055555556 : f32
    %297 = vector.broadcast %cst_167 : f32 to vector<1x128xf32>
    %298 = arith.mulf %296, %297 : vector<1x128xf32>
    %299 = arith.mulf %294, %294 : vector<18x128xf32>
    %cst_168 = arith.constant dense<0.000000e+00> : vector<128xf32>
    %300 = vector.multi_reduction <add>, %299, %cst_168 [0] : vector<18x128xf32> to vector<128xf32>
    %301 = vector.shape_cast %300 : vector<128xf32> to vector<1x128xf32>
    %cst_169 = arith.constant 0.055555556 : f32
    %302 = vector.broadcast %cst_169 : f32 to vector<1x128xf32>
    %303 = arith.mulf %301, %302 : vector<1x128xf32>
    %304 = arith.mulf %298, %298 : vector<1x128xf32>
    %305 = arith.subf %303, %304 : vector<1x128xf32>
    %cst_170 = arith.constant 0.000000e+00 : f32
    %306 = vector.broadcast %cst_170 : f32 to vector<1x128xf32>
    %307 = arith.maximumf %305, %306 : vector<1x128xf32>
    %cst_171 = arith.constant 9.99999974E-6 : f32
    %308 = vector.broadcast %cst_171 : f32 to vector<1x128xf32>
    %309 = arith.addf %307, %308 : vector<1x128xf32>
    %310 = math.rsqrt %309 : vector<1x128xf32>
    %c3_172 = arith.constant 3 : index
    %c0_173 = arith.constant 0 : index
    %311 = vector.load %arg9[%c3_172, %c0_173] : memref<6x128xf32, #tpu.memory_space<vmem>>, vector<1x128xf32>
    %312 = arith.mulf %310, %311 : vector<1x128xf32>
    %c3_174 = arith.constant 3 : index
    %c0_175 = arith.constant 0 : index
    %313 = vector.load %arg10[%c3_174, %c0_175] : memref<6x128xf32, #tpu.memory_space<vmem>>, vector<1x128xf32>
    %314 = arith.mulf %298, %312 : vector<1x128xf32>
    %315 = arith.subf %313, %314 : vector<1x128xf32>
    %316 = vector.broadcast %312 : vector<1x128xf32> to vector<18x128xf32>
    %317 = arith.mulf %294, %316 : vector<18x128xf32>
    %318 = vector.broadcast %315 : vector<1x128xf32> to vector<18x128xf32>
    %319 = arith.addf %317, %318 : vector<18x128xf32>
    %c0_176 = arith.constant 0 : index
    %c0_177 = arith.constant 0 : index
    %c0_178 = arith.constant 0 : index
    %320 = vector.load %arg6[%c0_176, %c0_177, %c0_178] : memref<4x8x18xf32, #tpu.memory_space<vmem>>, vector<1x8x18xf32>
    %321 = vector.shape_cast %320 : vector<1x8x18xf32> to vector<8x18xf32>
    %cst_179 = arith.constant dense<0.000000e+00> : vector<8x128xf32>
    %322 = tpu.matmul %321, %319, %cst_179 {dimension_numbers = #tpu.dot_dimension_numbers<[1], [0], [0], [1], [0, 0, 1, 1], [], []>} : vector<8x18xf32>, vector<18x128xf32>, vector<8x128xf32> -> vector<8x128xf32>
    %c12 = arith.constant 12 : index
    %c0_180 = arith.constant 0 : index
    %c0_181 = arith.constant 0 : index
    %323 = vector.load %arg2[%c12, %c0_180, %c0_181] : memref<20x128x128xf32, #tpu.memory_space<vmem>>, vector<1x128x128xf32>
    %324 = vector.shape_cast %323 : vector<1x128x128xf32> to vector<128x128xf32>
    %cst_182 = arith.constant dense<0.000000e+00> : vector<8x128xf32>
    %325 = tpu.matmul %322, %324, %cst_182 {dimension_numbers = #tpu.dot_dimension_numbers<[1], [0], [0], [1], [0, 0, 1, 1], [], []>} : vector<8x128xf32>, vector<128x128xf32>, vector<8x128xf32> -> vector<8x128xf32>
    %c1_183 = arith.constant 1 : index
    %c0_184 = arith.constant 0 : index
    %c0_185 = arith.constant 0 : index
    %326 = vector.load %arg6[%c1_183, %c0_184, %c0_185] : memref<4x8x18xf32, #tpu.memory_space<vmem>>, vector<1x8x18xf32>
    %327 = vector.shape_cast %326 : vector<1x8x18xf32> to vector<8x18xf32>
    %cst_186 = arith.constant dense<0.000000e+00> : vector<8x128xf32>
    %328 = tpu.matmul %327, %319, %cst_186 {dimension_numbers = #tpu.dot_dimension_numbers<[1], [0], [0], [1], [0, 0, 1, 1], [], []>} : vector<8x18xf32>, vector<18x128xf32>, vector<8x128xf32> -> vector<8x128xf32>
    %c13 = arith.constant 13 : index
    %c0_187 = arith.constant 0 : index
    %c0_188 = arith.constant 0 : index
    %329 = vector.load %arg2[%c13, %c0_187, %c0_188] : memref<20x128x128xf32, #tpu.memory_space<vmem>>, vector<1x128x128xf32>
    %330 = vector.shape_cast %329 : vector<1x128x128xf32> to vector<128x128xf32>
    %cst_189 = arith.constant dense<0.000000e+00> : vector<8x128xf32>
    %331 = tpu.matmul %328, %330, %cst_189 {dimension_numbers = #tpu.dot_dimension_numbers<[1], [0], [0], [1], [0, 0, 1, 1], [], []>} : vector<8x128xf32>, vector<128x128xf32>, vector<8x128xf32> -> vector<8x128xf32>
    %332 = arith.addf %325, %331 : vector<8x128xf32>
    %c2_190 = arith.constant 2 : index
    %c0_191 = arith.constant 0 : index
    %c0_192 = arith.constant 0 : index
    %333 = vector.load %arg6[%c2_190, %c0_191, %c0_192] : memref<4x8x18xf32, #tpu.memory_space<vmem>>, vector<1x8x18xf32>
    %334 = vector.shape_cast %333 : vector<1x8x18xf32> to vector<8x18xf32>
    %cst_193 = arith.constant dense<0.000000e+00> : vector<8x128xf32>
    %335 = tpu.matmul %334, %319, %cst_193 {dimension_numbers = #tpu.dot_dimension_numbers<[1], [0], [0], [1], [0, 0, 1, 1], [], []>} : vector<8x18xf32>, vector<18x128xf32>, vector<8x128xf32> -> vector<8x128xf32>
    %c14 = arith.constant 14 : index
    %c0_194 = arith.constant 0 : index
    %c0_195 = arith.constant 0 : index
    %336 = vector.load %arg2[%c14, %c0_194, %c0_195] : memref<20x128x128xf32, #tpu.memory_space<vmem>>, vector<1x128x128xf32>
    %337 = vector.shape_cast %336 : vector<1x128x128xf32> to vector<128x128xf32>
    %cst_196 = arith.constant dense<0.000000e+00> : vector<8x128xf32>
    %338 = tpu.matmul %335, %337, %cst_196 {dimension_numbers = #tpu.dot_dimension_numbers<[1], [0], [0], [1], [0, 0, 1, 1], [], []>} : vector<8x128xf32>, vector<128x128xf32>, vector<8x128xf32> -> vector<8x128xf32>
    %339 = arith.addf %332, %338 : vector<8x128xf32>
    %c3_197 = arith.constant 3 : index
    %c0_198 = arith.constant 0 : index
    %c0_199 = arith.constant 0 : index
    %340 = vector.load %arg6[%c3_197, %c0_198, %c0_199] : memref<4x8x18xf32, #tpu.memory_space<vmem>>, vector<1x8x18xf32>
    %341 = vector.shape_cast %340 : vector<1x8x18xf32> to vector<8x18xf32>
    %cst_200 = arith.constant dense<0.000000e+00> : vector<8x128xf32>
    %342 = tpu.matmul %341, %319, %cst_200 {dimension_numbers = #tpu.dot_dimension_numbers<[1], [0], [0], [1], [0, 0, 1, 1], [], []>} : vector<8x18xf32>, vector<18x128xf32>, vector<8x128xf32> -> vector<8x128xf32>
    %c15 = arith.constant 15 : index
    %c0_201 = arith.constant 0 : index
    %c0_202 = arith.constant 0 : index
    %343 = vector.load %arg2[%c15, %c0_201, %c0_202] : memref<20x128x128xf32, #tpu.memory_space<vmem>>, vector<1x128x128xf32>
    %344 = vector.shape_cast %343 : vector<1x128x128xf32> to vector<128x128xf32>
    %cst_203 = arith.constant dense<0.000000e+00> : vector<8x128xf32>
    %345 = tpu.matmul %342, %344, %cst_203 {dimension_numbers = #tpu.dot_dimension_numbers<[1], [0], [0], [1], [0, 0, 1, 1], [], []>} : vector<8x128xf32>, vector<128x128xf32>, vector<8x128xf32> -> vector<8x128xf32>
    %346 = arith.addf %339, %345 : vector<8x128xf32>
    %c4_204 = arith.constant 4 : index
    %c0_205 = arith.constant 0 : index
    %347 = vector.load %arg8[%c4_204, %c0_205] : memref<6x128xf32, #tpu.memory_space<vmem>>, vector<1x128xf32>
    %348 = vector.broadcast %347 : vector<1x128xf32> to vector<8x128xf32>
    %349 = arith.addf %346, %348 : vector<8x128xf32>
    %350 = math.absf %349 : vector<8x128xf32>
    %cst_206 = arith.constant 0.000000e+00 : f32
    %351 = vector.broadcast %cst_206 : f32 to vector<8x128xf32>
    %352 = arith.subf %351, %350 : vector<8x128xf32>
    %353 = math.exp %352 : vector<8x128xf32>
    %cst_207 = arith.constant 0.000000e+00 : f32
    %354 = vector.broadcast %cst_207 : f32 to vector<8x128xf32>
    %355 = arith.cmpf oge, %349, %354 : vector<8x128xf32>
    %cst_208 = arith.constant 2.000000e+00 : f32
    %356 = vector.broadcast %cst_208 : f32 to vector<8x128xf32>
    %357 = arith.mulf %356, %353 : vector<8x128xf32>
    %cst_209 = arith.constant 1.000000e+00 : f32
    %358 = vector.broadcast %cst_209 : f32 to vector<8x128xf32>
    %359 = arith.addf %358, %357 : vector<8x128xf32>
    %cst_210 = arith.constant 2.000000e+00 : f32
    %360 = vector.broadcast %cst_210 : f32 to vector<8x128xf32>
    %361 = arith.addf %353, %360 : vector<8x128xf32>
    %362 = arith.mulf %353, %361 : vector<8x128xf32>
    %363 = arith.select %355, %359, %362 : vector<8x128xi1>, vector<8x128xf32>
    %cst_211 = arith.constant 2.000000e+00 : f32
    %364 = vector.broadcast %cst_211 : f32 to vector<8x128xf32>
    %365 = arith.mulf %364, %353 : vector<8x128xf32>
    %cst_212 = arith.constant 1.000000e+00 : f32
    %366 = vector.broadcast %cst_212 : f32 to vector<8x128xf32>
    %367 = arith.addf %366, %365 : vector<8x128xf32>
    %cst_213 = arith.constant 2.000000e+00 : f32
    %368 = vector.broadcast %cst_213 : f32 to vector<8x128xf32>
    %369 = arith.mulf %368, %353 : vector<8x128xf32>
    %370 = arith.mulf %369, %353 : vector<8x128xf32>
    %371 = arith.addf %367, %370 : vector<8x128xf32>
    %cst_214 = arith.constant 2.000000e+00 : f32
    %372 = vector.broadcast %cst_214 : f32 to vector<8x128xf32>
    %373 = arith.addf %353, %372 : vector<8x128xf32>
    %374 = arith.mulf %353, %373 : vector<8x128xf32>
    %cst_215 = arith.constant 2.000000e+00 : f32
    %375 = vector.broadcast %cst_215 : f32 to vector<8x128xf32>
    %376 = arith.addf %375, %374 : vector<8x128xf32>
    %377 = arith.select %355, %371, %376 : vector<8x128xi1>, vector<8x128xf32>
    %378 = arith.mulf %349, %363 : vector<8x128xf32>
    %379 = tpu.reciprocal %377 {approx = true} : vector<8x128xf32> -> vector<8x128xf32>
    %380 = arith.mulf %378, %379 : vector<8x128xf32>
    %cst_216 = arith.constant dense<0.000000e+00> : vector<128xf32>
    %381 = vector.multi_reduction <add>, %380, %cst_216 [0] : vector<8x128xf32> to vector<128xf32>
    %382 = vector.shape_cast %381 : vector<128xf32> to vector<1x128xf32>
    %cst_217 = arith.constant 1.250000e-01 : f32
    %383 = vector.broadcast %cst_217 : f32 to vector<1x128xf32>
    %384 = arith.mulf %382, %383 : vector<1x128xf32>
    %385 = arith.mulf %380, %380 : vector<8x128xf32>
    %cst_218 = arith.constant dense<0.000000e+00> : vector<128xf32>
    %386 = vector.multi_reduction <add>, %385, %cst_218 [0] : vector<8x128xf32> to vector<128xf32>
    %387 = vector.shape_cast %386 : vector<128xf32> to vector<1x128xf32>
    %cst_219 = arith.constant 1.250000e-01 : f32
    %388 = vector.broadcast %cst_219 : f32 to vector<1x128xf32>
    %389 = arith.mulf %387, %388 : vector<1x128xf32>
    %390 = arith.mulf %384, %384 : vector<1x128xf32>
    %391 = arith.subf %389, %390 : vector<1x128xf32>
    %cst_220 = arith.constant 0.000000e+00 : f32
    %392 = vector.broadcast %cst_220 : f32 to vector<1x128xf32>
    %393 = arith.maximumf %391, %392 : vector<1x128xf32>
    %cst_221 = arith.constant 9.99999974E-6 : f32
    %394 = vector.broadcast %cst_221 : f32 to vector<1x128xf32>
    %395 = arith.addf %393, %394 : vector<1x128xf32>
    %396 = math.rsqrt %395 : vector<1x128xf32>
    %c4_222 = arith.constant 4 : index
    %c0_223 = arith.constant 0 : index
    %397 = vector.load %arg9[%c4_222, %c0_223] : memref<6x128xf32, #tpu.memory_space<vmem>>, vector<1x128xf32>
    %398 = arith.mulf %396, %397 : vector<1x128xf32>
    %c4_224 = arith.constant 4 : index
    %c0_225 = arith.constant 0 : index
    %399 = vector.load %arg10[%c4_224, %c0_225] : memref<6x128xf32, #tpu.memory_space<vmem>>, vector<1x128xf32>
    %400 = arith.mulf %384, %398 : vector<1x128xf32>
    %401 = arith.subf %399, %400 : vector<1x128xf32>
    %402 = vector.broadcast %398 : vector<1x128xf32> to vector<8x128xf32>
    %403 = arith.mulf %380, %402 : vector<8x128xf32>
    %404 = vector.broadcast %401 : vector<1x128xf32> to vector<8x128xf32>
    %405 = arith.addf %403, %404 : vector<8x128xf32>
    %c0_226 = arith.constant 0 : index
    %c0_227 = arith.constant 0 : index
    %c0_228 = arith.constant 0 : index
    %406 = vector.load %arg7[%c0_226, %c0_227, %c0_228] : memref<4x2x8xf32, #tpu.memory_space<vmem>>, vector<1x2x8xf32>
    %407 = vector.shape_cast %406 : vector<1x2x8xf32> to vector<2x8xf32>
    %cst_229 = arith.constant dense<0.000000e+00> : vector<2x128xf32>
    %408 = tpu.matmul %407, %405, %cst_229 {dimension_numbers = #tpu.dot_dimension_numbers<[1], [0], [0], [1], [0, 0, 1, 1], [], []>} : vector<2x8xf32>, vector<8x128xf32>, vector<2x128xf32> -> vector<2x128xf32>
    %c16 = arith.constant 16 : index
    %c0_230 = arith.constant 0 : index
    %c0_231 = arith.constant 0 : index
    %409 = vector.load %arg2[%c16, %c0_230, %c0_231] : memref<20x128x128xf32, #tpu.memory_space<vmem>>, vector<1x128x128xf32>
    %410 = vector.shape_cast %409 : vector<1x128x128xf32> to vector<128x128xf32>
    %cst_232 = arith.constant dense<0.000000e+00> : vector<2x128xf32>
    %411 = tpu.matmul %408, %410, %cst_232 {dimension_numbers = #tpu.dot_dimension_numbers<[1], [0], [0], [1], [0, 0, 1, 1], [], []>} : vector<2x128xf32>, vector<128x128xf32>, vector<2x128xf32> -> vector<2x128xf32>
    %c1_233 = arith.constant 1 : index
    %c0_234 = arith.constant 0 : index
    %c0_235 = arith.constant 0 : index
    %412 = vector.load %arg7[%c1_233, %c0_234, %c0_235] : memref<4x2x8xf32, #tpu.memory_space<vmem>>, vector<1x2x8xf32>
    %413 = vector.shape_cast %412 : vector<1x2x8xf32> to vector<2x8xf32>
    %cst_236 = arith.constant dense<0.000000e+00> : vector<2x128xf32>
    %414 = tpu.matmul %413, %405, %cst_236 {dimension_numbers = #tpu.dot_dimension_numbers<[1], [0], [0], [1], [0, 0, 1, 1], [], []>} : vector<2x8xf32>, vector<8x128xf32>, vector<2x128xf32> -> vector<2x128xf32>
    %c17 = arith.constant 17 : index
    %c0_237 = arith.constant 0 : index
    %c0_238 = arith.constant 0 : index
    %415 = vector.load %arg2[%c17, %c0_237, %c0_238] : memref<20x128x128xf32, #tpu.memory_space<vmem>>, vector<1x128x128xf32>
    %416 = vector.shape_cast %415 : vector<1x128x128xf32> to vector<128x128xf32>
    %cst_239 = arith.constant dense<0.000000e+00> : vector<2x128xf32>
    %417 = tpu.matmul %414, %416, %cst_239 {dimension_numbers = #tpu.dot_dimension_numbers<[1], [0], [0], [1], [0, 0, 1, 1], [], []>} : vector<2x128xf32>, vector<128x128xf32>, vector<2x128xf32> -> vector<2x128xf32>
    %418 = arith.addf %411, %417 : vector<2x128xf32>
    %c2_240 = arith.constant 2 : index
    %c0_241 = arith.constant 0 : index
    %c0_242 = arith.constant 0 : index
    %419 = vector.load %arg7[%c2_240, %c0_241, %c0_242] : memref<4x2x8xf32, #tpu.memory_space<vmem>>, vector<1x2x8xf32>
    %420 = vector.shape_cast %419 : vector<1x2x8xf32> to vector<2x8xf32>
    %cst_243 = arith.constant dense<0.000000e+00> : vector<2x128xf32>
    %421 = tpu.matmul %420, %405, %cst_243 {dimension_numbers = #tpu.dot_dimension_numbers<[1], [0], [0], [1], [0, 0, 1, 1], [], []>} : vector<2x8xf32>, vector<8x128xf32>, vector<2x128xf32> -> vector<2x128xf32>
    %c18 = arith.constant 18 : index
    %c0_244 = arith.constant 0 : index
    %c0_245 = arith.constant 0 : index
    %422 = vector.load %arg2[%c18, %c0_244, %c0_245] : memref<20x128x128xf32, #tpu.memory_space<vmem>>, vector<1x128x128xf32>
    %423 = vector.shape_cast %422 : vector<1x128x128xf32> to vector<128x128xf32>
    %cst_246 = arith.constant dense<0.000000e+00> : vector<2x128xf32>
    %424 = tpu.matmul %421, %423, %cst_246 {dimension_numbers = #tpu.dot_dimension_numbers<[1], [0], [0], [1], [0, 0, 1, 1], [], []>} : vector<2x128xf32>, vector<128x128xf32>, vector<2x128xf32> -> vector<2x128xf32>
    %425 = arith.addf %418, %424 : vector<2x128xf32>
    %c3_247 = arith.constant 3 : index
    %c0_248 = arith.constant 0 : index
    %c0_249 = arith.constant 0 : index
    %426 = vector.load %arg7[%c3_247, %c0_248, %c0_249] : memref<4x2x8xf32, #tpu.memory_space<vmem>>, vector<1x2x8xf32>
    %427 = vector.shape_cast %426 : vector<1x2x8xf32> to vector<2x8xf32>
    %cst_250 = arith.constant dense<0.000000e+00> : vector<2x128xf32>
    %428 = tpu.matmul %427, %405, %cst_250 {dimension_numbers = #tpu.dot_dimension_numbers<[1], [0], [0], [1], [0, 0, 1, 1], [], []>} : vector<2x8xf32>, vector<8x128xf32>, vector<2x128xf32> -> vector<2x128xf32>
    %c19 = arith.constant 19 : index
    %c0_251 = arith.constant 0 : index
    %c0_252 = arith.constant 0 : index
    %429 = vector.load %arg2[%c19, %c0_251, %c0_252] : memref<20x128x128xf32, #tpu.memory_space<vmem>>, vector<1x128x128xf32>
    %430 = vector.shape_cast %429 : vector<1x128x128xf32> to vector<128x128xf32>
    %cst_253 = arith.constant dense<0.000000e+00> : vector<2x128xf32>
    %431 = tpu.matmul %428, %430, %cst_253 {dimension_numbers = #tpu.dot_dimension_numbers<[1], [0], [0], [1], [0, 0, 1, 1], [], []>} : vector<2x128xf32>, vector<128x128xf32>, vector<2x128xf32> -> vector<2x128xf32>
    %432 = arith.addf %425, %431 : vector<2x128xf32>
    %c5_254 = arith.constant 5 : index
    %c0_255 = arith.constant 0 : index
    %433 = vector.load %arg8[%c5_254, %c0_255] : memref<6x128xf32, #tpu.memory_space<vmem>>, vector<1x128xf32>
    %434 = vector.broadcast %433 : vector<1x128xf32> to vector<2x128xf32>
    %435 = arith.addf %432, %434 : vector<2x128xf32>
    %436 = math.absf %435 : vector<2x128xf32>
    %cst_256 = arith.constant 0.000000e+00 : f32
    %437 = vector.broadcast %cst_256 : f32 to vector<2x128xf32>
    %438 = arith.subf %437, %436 : vector<2x128xf32>
    %439 = math.exp %438 : vector<2x128xf32>
    %cst_257 = arith.constant 0.000000e+00 : f32
    %440 = vector.broadcast %cst_257 : f32 to vector<2x128xf32>
    %441 = arith.cmpf oge, %435, %440 : vector<2x128xf32>
    %cst_258 = arith.constant 2.000000e+00 : f32
    %442 = vector.broadcast %cst_258 : f32 to vector<2x128xf32>
    %443 = arith.mulf %442, %439 : vector<2x128xf32>
    %cst_259 = arith.constant 1.000000e+00 : f32
    %444 = vector.broadcast %cst_259 : f32 to vector<2x128xf32>
    %445 = arith.addf %444, %443 : vector<2x128xf32>
    %cst_260 = arith.constant 2.000000e+00 : f32
    %446 = vector.broadcast %cst_260 : f32 to vector<2x128xf32>
    %447 = arith.addf %439, %446 : vector<2x128xf32>
    %448 = arith.mulf %439, %447 : vector<2x128xf32>
    %449 = arith.select %441, %445, %448 : vector<2x128xi1>, vector<2x128xf32>
    %cst_261 = arith.constant 2.000000e+00 : f32
    %450 = vector.broadcast %cst_261 : f32 to vector<2x128xf32>
    %451 = arith.mulf %450, %439 : vector<2x128xf32>
    %cst_262 = arith.constant 1.000000e+00 : f32
    %452 = vector.broadcast %cst_262 : f32 to vector<2x128xf32>
    %453 = arith.addf %452, %451 : vector<2x128xf32>
    %cst_263 = arith.constant 2.000000e+00 : f32
    %454 = vector.broadcast %cst_263 : f32 to vector<2x128xf32>
    %455 = arith.mulf %454, %439 : vector<2x128xf32>
    %456 = arith.mulf %455, %439 : vector<2x128xf32>
    %457 = arith.addf %453, %456 : vector<2x128xf32>
    %cst_264 = arith.constant 2.000000e+00 : f32
    %458 = vector.broadcast %cst_264 : f32 to vector<2x128xf32>
    %459 = arith.addf %439, %458 : vector<2x128xf32>
    %460 = arith.mulf %439, %459 : vector<2x128xf32>
    %cst_265 = arith.constant 2.000000e+00 : f32
    %461 = vector.broadcast %cst_265 : f32 to vector<2x128xf32>
    %462 = arith.addf %461, %460 : vector<2x128xf32>
    %463 = arith.select %441, %457, %462 : vector<2x128xi1>, vector<2x128xf32>
    %464 = arith.mulf %435, %449 : vector<2x128xf32>
    %465 = tpu.reciprocal %463 {approx = true} : vector<2x128xf32> -> vector<2x128xf32>
    %466 = arith.mulf %464, %465 : vector<2x128xf32>
    %cst_266 = arith.constant dense<0.000000e+00> : vector<128xf32>
    %467 = vector.multi_reduction <add>, %466, %cst_266 [0] : vector<2x128xf32> to vector<128xf32>
    %468 = vector.shape_cast %467 : vector<128xf32> to vector<1x128xf32>
    %cst_267 = arith.constant 5.000000e-01 : f32
    %469 = vector.broadcast %cst_267 : f32 to vector<1x128xf32>
    %470 = arith.mulf %468, %469 : vector<1x128xf32>
    %471 = arith.mulf %466, %466 : vector<2x128xf32>
    %cst_268 = arith.constant dense<0.000000e+00> : vector<128xf32>
    %472 = vector.multi_reduction <add>, %471, %cst_268 [0] : vector<2x128xf32> to vector<128xf32>
    %473 = vector.shape_cast %472 : vector<128xf32> to vector<1x128xf32>
    %cst_269 = arith.constant 5.000000e-01 : f32
    %474 = vector.broadcast %cst_269 : f32 to vector<1x128xf32>
    %475 = arith.mulf %473, %474 : vector<1x128xf32>
    %476 = arith.mulf %470, %470 : vector<1x128xf32>
    %477 = arith.subf %475, %476 : vector<1x128xf32>
    %cst_270 = arith.constant 0.000000e+00 : f32
    %478 = vector.broadcast %cst_270 : f32 to vector<1x128xf32>
    %479 = arith.maximumf %477, %478 : vector<1x128xf32>
    %cst_271 = arith.constant 9.99999974E-6 : f32
    %480 = vector.broadcast %cst_271 : f32 to vector<1x128xf32>
    %481 = arith.addf %479, %480 : vector<1x128xf32>
    %482 = math.rsqrt %481 : vector<1x128xf32>
    %c5_272 = arith.constant 5 : index
    %c0_273 = arith.constant 0 : index
    %483 = vector.load %arg9[%c5_272, %c0_273] : memref<6x128xf32, #tpu.memory_space<vmem>>, vector<1x128xf32>
    %484 = arith.mulf %482, %483 : vector<1x128xf32>
    %c5_274 = arith.constant 5 : index
    %c0_275 = arith.constant 0 : index
    %485 = vector.load %arg10[%c5_274, %c0_275] : memref<6x128xf32, #tpu.memory_space<vmem>>, vector<1x128xf32>
    %486 = arith.mulf %470, %484 : vector<1x128xf32>
    %487 = arith.subf %485, %486 : vector<1x128xf32>
    %488 = vector.broadcast %484 : vector<1x128xf32> to vector<2x128xf32>
    %489 = arith.mulf %466, %488 : vector<2x128xf32>
    %490 = vector.broadcast %487 : vector<1x128xf32> to vector<2x128xf32>
    %491 = arith.addf %489, %490 : vector<2x128xf32>
    %492 = math.tanh %491 : vector<2x128xf32>
    %c0_276 = arith.constant 0 : index
    %c0_277 = arith.constant 0 : index
    %493 = vector.load %arg11[%c0_276, %c0_277] : memref<2x128xf32, #tpu.memory_space<vmem>>, vector<2x128xf32>
    tpu.vector_store %arg11[%c0_276, %c0_277], %492 {strides = array<i32>} : memref<2x128xf32, #tpu.memory_space<vmem>>, vector<2x128xf32>,
    return
  }
}

</mosaic_0001>

<llo_original>
// kernel: tpu_custom_call.1
$region0: #{tpu_custom_call.1}
  #allocation0 [shape = 'u32[]', space=smem, size = 0x4, offset = 0x4, fixed_abs, tag = 'smem constant byte address 0x4 - core index']
  #allocation1 [shape = 'u32[72,128]{1,0:T(1,128)}', space=vmem, size = 0x9000, scoped, tag = 'internal scratch']
  %s0 = inlined_call_operand.vmem [shape: f32[450,128], index: 0, kind: input, shape index: {}]
  %s1 = inlined_call_operand.hbm [shape: f32[128,128], index: 1, kind: input, shape index: {}]
  %s2 = inlined_call_operand.vmem [shape: f32[20,128,128], index: 2, kind: input, shape index: {}]
  %s3 = inlined_call_operand.vmem [shape: f32[4,98,450], index: 3, kind: input, shape index: {}]
  %s4 = inlined_call_operand.vmem [shape: f32[4,72,98], index: 4, kind: input, shape index: {}]
  %s5 = inlined_call_operand.vmem [shape: f32[4,18,72], index: 5, kind: input, shape index: {}]
  %s6 = inlined_call_operand.vmem [shape: f32[4,8,18], index: 6, kind: input, shape index: {}]
  %s7 = inlined_call_operand.vmem [shape: f32[4,2,8], index: 7, kind: input, shape index: {}]
  %s8 = inlined_call_operand.vmem [shape: f32[6,128], index: 8, kind: input, shape index: {}]
  %s9 = inlined_call_operand.vmem [shape: f32[6,128], index: 9, kind: input, shape index: {}]
  %s10 = inlined_call_operand.vmem [shape: f32[6,128], index: 10, kind: input, shape index: {}]
  %s11 = inlined_call_operand.hbm [shape: f32[2,128], index: 11, kind: output, shape index: {}]
  %s12 = sld [smem:[#allocation0]]
  $region58: #{tpu_custom_call.1} parent=0
    _
  %s14 = ssub.s32 1, %s12
  %s15 = scalar_select 0, %s14, %s12
  $region1: #{tpu_custom_call.1} parent=0
    #allocation2 [shape = 'u8[65536]{0}', space=vmem, size = 0x10000, scoped, tag = 'input window, operand 1, single buffered']
    #allocation3 [shape = 's32[1]{0}', space=sflag, size = 0x4, scoped, tag = 'scoped memory for tpu_custom_call.1']
    #allocation4 [shape = 's32[1]{0}', space=sflag, size = 0x4, scoped, tag = 'scoped memory for tpu_custom_call.1']
    #allocation5 [shape = 'u8[1024]{0}', space=vmem, size = 0x400, scoped, tag = 'output window, operand 0, single buffered']
    %16 = vsyncpa [#allocation3], 0
    %17 = vsyncpa [#allocation4], 0
    // Predicated region
    $region2: #{tpu_custom_call.1} parent=1 // pred_check
      _
    $region3: #{tpu_custom_call.1} parent=1 // pred_check_branch
      %19 = sbr.rel (0) target = $region5
    $region4: #{tpu_custom_call.1} parent=1 // pred_region
      _
    $region5: #{tpu_custom_call.1} parent=1 // pred_fallthru
      _
    // Predicated region
    $region6: #{tpu_custom_call.1} parent=1 // pred_check
      _
    $region7: #{tpu_custom_call.1} parent=1 // pred_check_branch
      %21 = sbr.rel (0) target = $region9
    $region8: #{tpu_custom_call.1} parent=1 // pred_region
      %23 = vsyncadd [#allocation3], 0
      %s24 = sshll.u32 %s1, 4
      %s25 = int_to_ptr.hbm [resolvable:$true] %s24
      %s26 = sshll.u32 [#allocation2], 4
      %s27 = int_to_ptr.vmem [resolvable:$true] %s26
      %32 = dma.hbm_to_vmem [thread:$0]  %s25, 2048, %s27, [#allocation3], 128, 128, 8
    $region9: #{tpu_custom_call.1} parent=1 // pred_fallthru
      _
    // Predicated region
    $region10: #{tpu_custom_call.1} parent=1 // pred_check
      _
    $region11: #{tpu_custom_call.1} parent=1 // pred_check_branch
      %34 = sbr.rel (0) target = $region13
    $region12: #{tpu_custom_call.1} parent=1 // pred_region
      _
    $region13: #{tpu_custom_call.1} parent=1 // pred_fallthru
      _
    // Predicated region
    $region14: #{tpu_custom_call.1} parent=1 // pred_check
      _
    $region15: #{tpu_custom_call.1} parent=1 // pred_check_branch
      %36 = sbr.rel (0) target = $region17
    $region16: #{tpu_custom_call.1} parent=1 // pred_region
      _
    $region17: #{tpu_custom_call.1} parent=1 // pred_fallthru
      _
    // Predicated region
    $region18: #{tpu_custom_call.1} parent=1 // pred_check
      _
    $region19: #{tpu_custom_call.1} parent=1 // pred_check_branch
      %38 = sbr.rel (0) target = $region21
    $region20: #{tpu_custom_call.1} parent=1 // pred_region
      _
    $region21: #{tpu_custom_call.1} parent=1 // pred_fallthru
      _
    // Predicated region
    $region22: #{tpu_custom_call.1} parent=1 // pred_check
      _
    $region23: #{tpu_custom_call.1} parent=1 // pred_check_branch
      %40 = sbr.rel (0) target = $region25
    $region24: #{tpu_custom_call.1} parent=1 // pred_region
      _
    $region25: #{tpu_custom_call.1} parent=1 // pred_fallthru
      _
    // Predicated region
    $region26: #{tpu_custom_call.1} parent=1 // pred_check
      _
    $region27: #{tpu_custom_call.1} parent=1 // pred_check_branch
      %42 = sbr.rel (0) target = $region29
    $region28: #{tpu_custom_call.1} parent=1 // pred_region
      _
    $region29: #{tpu_custom_call.1} parent=1 // pred_fallthru
      _
    // Predicated region
    $region30: #{tpu_custom_call.1} parent=1 // pred_check
      _
    $region31: #{tpu_custom_call.1} parent=1 // pred_check_branch
      %44 = sbr.rel (0) target = $region33
    $region32: #{tpu_custom_call.1} parent=1 // pred_region
      _
    $region33: #{tpu_custom_call.1} parent=1 // pred_fallthru
      _
    // Predicated region
    $region34: #{tpu_custom_call.1} parent=1 // pred_check
      _
    $region35: #{tpu_custom_call.1} parent=1 // pred_check_branch
      %46 = sbr.rel (0) target = $region37
    $region36: #{tpu_custom_call.1} parent=1 // pred_region
      _
    $region37: #{tpu_custom_call.1} parent=1 // pred_fallthru
      _
    // Predicated region
    $region38: #{tpu_custom_call.1} parent=1 // pred_check
      _
    $region39: #{tpu_custom_call.1} parent=1 // pred_check_branch
      %48 = sbr.rel (0) target = $region41
    $region40: #{tpu_custom_call.1} parent=1 // pred_region
      _
    $region41: #{tpu_custom_call.1} parent=1 // pred_fallthru
      _
    // Predicated region
    $region42: #{tpu_custom_call.1} parent=1 // pred_check
      _
    $region43: #{tpu_custom_call.1} parent=1 // pred_check_branch
      %50 = sbr.rel (0) target = $region45
    $region44: #{tpu_custom_call.1} parent=1 // pred_region
      _
    $region45: #{tpu_custom_call.1} parent=1 // pred_fallthru
      _
    // Predicated region
    $region46: #{tpu_custom_call.1} parent=1 // pred_check
      _
    $region47: #{tpu_custom_call.1} parent=1 // pred_check_branch
      %52 = sbr.rel (0) target = $region49
    $region48: #{tpu_custom_call.1} parent=1 // pred_region
      %54 = dma.done [#allocation3], 2048
    $region49: #{tpu_custom_call.1} parent=1 // pred_fallthru
      _
    %v55 = vld [vmem:[%s0] sm:$0xff]
    %v56 = vld [vmem:[%s0 + $0x8] sm:$0xff]
    %v57 = vld [vmem:[%s0 + $0x10] sm:$0xff]
    %v58 = vld [vmem:[%s0 + $0x18] sm:$0xff]
    %v59 = vld [vmem:[%s0 + $0x20] sm:$0xff]
    %v60 = vld [vmem:[%s0 + $0x28] sm:$0xff]
    %v61 = vld [vmem:[%s0 + $0x30] sm:$0xff]
    %v62 = vld [vmem:[%s0 + $0x38] sm:$0xff]
    %v63 = vld [vmem:[%s0 + $0x40] sm:$0xff]
    %v64 = vld [vmem:[%s0 + $0x48] sm:$0xff]
    %v65 = vld [vmem:[%s0 + $0x50] sm:$0xff]
    %v66 = vld [vmem:[%s0 + $0x58] sm:$0xff]
    %v67 = vld [vmem:[%s0 + $0x60] sm:$0xff]
    %v68 = vld [vmem:[%s0 + $0x68] sm:$0xff]
    %v69 = vld [vmem:[%s0 + $0x70] sm:$0xff]
    %v70 = vld [vmem:[%s0 + $0x78] sm:$0xff]
    %v71 = vld [vmem:[%s0 + $0x80] sm:$0xff]
    %v72 = vld [vmem:[%s0 + $0x88] sm:$0xff]
    %v73 = vld [vmem:[%s0 + $0x90] sm:$0xff]
    %v74 = vld [vmem:[%s0 + $0x98] sm:$0xff]
    %v75 = vld [vmem:[%s0 + $0xa0] sm:$0xff]
    %v76 = vld [vmem:[%s0 + $0xa8] sm:$0xff]
    %v77 = vld [vmem:[%s0 + $0xb0] sm:$0xff]
    %v78 = vld [vmem:[%s0 + $0xb8] sm:$0xff]
    %v79 = vld [vmem:[%s0 + $0xc0] sm:$0xff]
    %v80 = vld [vmem:[%s0 + $0xc8] sm:$0xff]
    %v81 = vld [vmem:[%s0 + $0xd0] sm:$0xff]
    %v82 = vld [vmem:[%s0 + $0xd8] sm:$0xff]
    %v83 = vld [vmem:[%s0 + $0xe0] sm:$0xff]
    %v84 = vld [vmem:[%s0 + $0xe8] sm:$0xff]
    %v85 = vld [vmem:[%s0 + $0xf0] sm:$0xff]
    %v86 = vld [vmem:[%s0 + $0xf8] sm:$0xff]
    %v87 = vld [vmem:[%s0 + $0x100] sm:$0xff]
    %v88 = vld [vmem:[%s0 + $0x108] sm:$0xff]
    %v89 = vld [vmem:[%s0 + $0x110] sm:$0xff]
    %v90 = vld [vmem:[%s0 + $0x118] sm:$0xff]
    %v91 = vld [vmem:[%s0 + $0x120] sm:$0xff]
    %v92 = vld [vmem:[%s0 + $0x128] sm:$0xff]
    %v93 = vld [vmem:[%s0 + $0x130] sm:$0xff]
    %v94 = vld [vmem:[%s0 + $0x138] sm:$0xff]
    %v95 = vld [vmem:[%s0 + $0x140] sm:$0xff]
    %v96 = vld [vmem:[%s0 + $0x148] sm:$0xff]
    %v97 = vld [vmem:[%s0 + $0x150] sm:$0xff]
    %v98 = vld [vmem:[%s0 + $0x158] sm:$0xff]
    %v99 = vld [vmem:[%s0 + $0x160] sm:$0xff]
    %v100 = vld [vmem:[%s0 + $0x168] sm:$0xff]
    %v101 = vld [vmem:[%s0 + $0x170] sm:$0xff]
    %v102 = vld [vmem:[%s0 + $0x178] sm:$0xff]
    %v103 = vld [vmem:[%s0 + $0x180] sm:$0xff]
    %v104 = vld [vmem:[%s0 + $0x188] sm:$0xff]
    %v105 = vld [vmem:[%s0 + $0x190] sm:$0xff]
    %v106 = vld [vmem:[%s0 + $0x198] sm:$0xff]
    %v107 = vld [vmem:[%s0 + $0x1a0] sm:$0xff]
    %v108 = vld [vmem:[%s0 + $0x1a8] sm:$0xff]
    %v109 = vld [vmem:[%s0 + $0x1b0] sm:$0xff]
    %v110 = vld [vmem:[%s0 + $0x1b8] sm:$0xff]
    %v111 = vld [vmem:[%s0 + $0x1c0] sm:$0x3]
    %v112 = vld [vmem:[#allocation2] sm:$0xff]
    %v113 = vld [vmem:[#allocation2 + $0x8] sm:$0xff]
    %v114 = vld [vmem:[#allocation2 + $0x10] sm:$0xff]
    %v115 = vld [vmem:[#allocation2 + $0x18] sm:$0xff]
    %v116 = vld [vmem:[#allocation2 + $0x20] sm:$0xff]
    %v117 = vld [vmem:[#allocation2 + $0x28] sm:$0xff]
    %v118 = vld [vmem:[#allocation2 + $0x30] sm:$0xff]
    %v119 = vld [vmem:[#allocation2 + $0x38] sm:$0xff]
    %v120 = vld [vmem:[#allocation2 + $0x40] sm:$0xff]
    %v121 = vld [vmem:[#allocation2 + $0x48] sm:$0xff]
    %v122 = vld [vmem:[#allocation2 + $0x50] sm:$0xff]
    %v123 = vld [vmem:[#allocation2 + $0x58] sm:$0xff]
    %v124 = vld [vmem:[#allocation2 + $0x60] sm:$0xff]
    %v125 = vld [vmem:[#allocation2 + $0x68] sm:$0xff]
    %v126 = vld [vmem:[#allocation2 + $0x70] sm:$0xff]
    %v127 = vld [vmem:[#allocation2 + $0x78] sm:$0xff]
    %v128 = vld [vmem:[%s8] sm:$0x1]
    %v129 = vperm.slane %v128, 0
    %130 = vmatpush.msra.mxu0 %v127
    %131 = vmatpush.msra.mxu0 %v126
    %132 = vmatpush.msra.mxu0 %v125
    %133 = vmatpush.msra.mxu0 %v124
    %134 = vmatpush.msra.mxu0 %v123
    %135 = vmatpush.msra.mxu0 %v122
    %136 = vmatpush.msra.mxu0 %v121
    %137 = vmatpush.msra.mxu0 %v120
    %138 = vmatpush.msra.mxu0 %v119
    %139 = vmatpush.msra.mxu0 %v118
    %140 = vmatpush.msra.mxu0 %v117
    %141 = vmatpush.msra.mxu0 %v116
    %142 = vmatpush.msra.mxu0 %v115
    %143 = vmatpush.msra.mxu0 %v114
    %144 = vmatpush.msra.mxu0 %v113
    %145 = vmatpush.msra.mxu0 %v112
    %146 = vmatmul.f32.gmra.mxu0 %v55
    %v147 = vpop.f32.mrf.mxu0
    %v148 = vadd.f32 %v129, %v147
    %149 = vmatmul.f32.gmra.mxu0 %v56
    %v150 = vpop.f32.mrf.mxu0
    %v151 = vadd.f32 %v129, %v150
    %152 = vmatmul.f32.gmra.mxu0 %v57
    %v153 = vpop.f32.mrf.mxu0
    %v154 = vadd.f32 %v129, %v153
    %155 = vmatmul.f32.gmra.mxu0 %v58
    %v156 = vpop.f32.mrf.mxu0
    %v157 = vadd.f32 %v129, %v156
    %158 = vmatmul.f32.gmra.mxu0 %v59
    %v159 = vpop.f32.mrf.mxu0
    %v160 = vadd.f32 %v129, %v159
    %161 = vmatmul.f32.gmra.mxu0 %v60
    %v162 = vpop.f32.mrf.mxu0
    %v163 = vadd.f32 %v129, %v162
    %164 = vmatmul.f32.gmra.mxu0 %v61
    %v165 = vpop.f32.mrf.mxu0
    %v166 = vadd.f32 %v129, %v165
    %167 = vmatmul.f32.gmra.mxu0 %v62
    %v168 = vpop.f32.mrf.mxu0
    %v169 = vadd.f32 %v129, %v168
    %170 = vmatmul.f32.gmra.mxu0 %v63
    %v171 = vpop.f32.mrf.mxu0
    %v172 = vadd.f32 %v129, %v171
    %173 = vmatmul.f32.gmra.mxu0 %v64
    %v174 = vpop.f32.mrf.mxu0
    %v175 = vadd.f32 %v129, %v174
    %176 = vmatmul.f32.gmra.mxu0 %v65
    %v177 = vpop.f32.mrf.mxu0
    %v178 = vadd.f32 %v129, %v177
    %179 = vmatmul.f32.gmra.mxu0 %v66
    %v180 = vpop.f32.mrf.mxu0
    %v181 = vadd.f32 %v129, %v180
    %182 = vmatmul.f32.gmra.mxu0 %v67
    %v183 = vpop.f32.mrf.mxu0
    %v184 = vadd.f32 %v129, %v183
    %185 = vmatmul.f32.gmra.mxu0 %v68
    %v186 = vpop.f32.mrf.mxu0
    %v187 = vadd.f32 %v129, %v186
    %188 = vmatmul.f32.gmra.mxu0 %v69
    %v189 = vpop.f32.mrf.mxu0
    %v190 = vadd.f32 %v129, %v189
    %191 = vmatmul.f32.gmra.mxu0 %v70
    %v192 = vpop.f32.mrf.mxu0
    %v193 = vadd.f32 %v129, %v192
    %194 = vmatmul.f32.gmra.mxu0 %v71
    %v195 = vpop.f32.mrf.mxu0
    %v196 = vadd.f32 %v129, %v195
    %197 = vmatmul.f32.gmra.mxu0 %v72
    %v198 = vpop.f32.mrf.mxu0
    %v199 = vadd.f32 %v129, %v198
    %200 = vmatmul.f32.gmra.mxu0 %v73
    %v201 = vpop.f32.mrf.mxu0
    %v202 = vadd.f32 %v129, %v201
    %203 = vmatmul.f32.gmra.mxu0 %v74
    %v204 = vpop.f32.mrf.mxu0
    %v205 = vadd.f32 %v129, %v204
    %206 = vmatmul.f32.gmra.mxu0 %v75
    %v207 = vpop.f32.mrf.mxu0
    %v208 = vadd.f32 %v129, %v207
    %209 = vmatmul.f32.gmra.mxu0 %v76
    %v210 = vpop.f32.mrf.mxu0
    %v211 = vadd.f32 %v129, %v210
    %212 = vmatmul.f32.gmra.mxu0 %v77
    %v213 = vpop.f32.mrf.mxu0
    %v214 = vadd.f32 %v129, %v213
    %215 = vmatmul.f32.gmra.mxu0 %v78
    %v216 = vpop.f32.mrf.mxu0
    %v217 = vadd.f32 %v129, %v216
    %218 = vmatmul.f32.gmra.mxu0 %v79
    %v219 = vpop.f32.mrf.mxu0
    %v220 = vadd.f32 %v129, %v219
    %221 = vmatmul.f32.gmra.mxu0 %v80
    %v222 = vpop.f32.mrf.mxu0
    %v223 = vadd.f32 %v129, %v222
    %224 = vmatmul.f32.gmra.mxu0 %v81
    %v225 = vpop.f32.mrf.mxu0
    %v226 = vadd.f32 %v129, %v225
    %227 = vmatmul.f32.gmra.mxu0 %v82
    %v228 = vpop.f32.mrf.mxu0
    %v229 = vadd.f32 %v129, %v228
    %230 = vmatmul.f32.gmra.mxu0 %v83
    %v231 = vpop.f32.mrf.mxu0
    %v232 = vadd.f32 %v129, %v231
    %233 = vmatmul.f32.gmra.mxu0 %v84
    %v234 = vpop.f32.mrf.mxu0
    %v235 = vadd.f32 %v129, %v234
    %236 = vmatmul.f32.gmra.mxu0 %v85
    %v237 = vpop.f32.mrf.mxu0
    %v238 = vadd.f32 %v129, %v237
    %239 = vmatmul.f32.gmra.mxu0 %v86
    %v240 = vpop.f32.mrf.mxu0
    %v241 = vadd.f32 %v129, %v240
    %242 = vmatmul.f32.gmra.mxu0 %v87
    %v243 = vpop.f32.mrf.mxu0
    %v244 = vadd.f32 %v129, %v243
    %245 = vmatmul.f32.gmra.mxu0 %v88
    %v246 = vpop.f32.mrf.mxu0
    %v247 = vadd.f32 %v129, %v246
    %248 = vmatmul.f32.gmra.mxu0 %v89
    %v249 = vpop.f32.mrf.mxu0
    %v250 = vadd.f32 %v129, %v249
    %251 = vmatmul.f32.gmra.mxu0 %v90
    %v252 = vpop.f32.mrf.mxu0
    %v253 = vadd.f32 %v129, %v252
    %254 = vmatmul.f32.gmra.mxu0 %v91
    %v255 = vpop.f32.mrf.mxu0
    %v256 = vadd.f32 %v129, %v255
    %257 = vmatmul.f32.gmra.mxu0 %v92
    %v258 = vpop.f32.mrf.mxu0
    %v259 = vadd.f32 %v129, %v258
    %260 = vmatmul.f32.gmra.mxu0 %v93
    %v261 = vpop.f32.mrf.mxu0
    %v262 = vadd.f32 %v129, %v261
    %263 = vmatmul.f32.gmra.mxu0 %v94
    %v264 = vpop.f32.mrf.mxu0
    %v265 = vadd.f32 %v129, %v264
    %266 = vmatmul.f32.gmra.mxu0 %v95
    %v267 = vpop.f32.mrf.mxu0
    %v268 = vadd.f32 %v129, %v267
    %269 = vmatmul.f32.gmra.mxu0 %v96
    %v270 = vpop.f32.mrf.mxu0
    %v271 = vadd.f32 %v129, %v270
    %272 = vmatmul.f32.gmra.mxu0 %v97
    %v273 = vpop.f32.mrf.mxu0
    %v274 = vadd.f32 %v129, %v273
    %275 = vmatmul.f32.gmra.mxu0 %v98
    %v276 = vpop.f32.mrf.mxu0
    %v277 = vadd.f32 %v129, %v276
    %278 = vmatmul.f32.gmra.mxu0 %v99
    %v279 = vpop.f32.mrf.mxu0
    %v280 = vadd.f32 %v129, %v279
    %281 = vmatmul.f32.gmra.mxu0 %v100
    %v282 = vpop.f32.mrf.mxu0
    %v283 = vadd.f32 %v129, %v282
    %284 = vmatmul.f32.gmra.mxu0 %v101
    %v285 = vpop.f32.mrf.mxu0
    %v286 = vadd.f32 %v129, %v285
    %287 = vmatmul.f32.gmra.mxu0 %v102
    %v288 = vpop.f32.mrf.mxu0
    %v289 = vadd.f32 %v129, %v288
    %290 = vmatmul.f32.gmra.mxu0 %v103
    %v291 = vpop.f32.mrf.mxu0
    %v292 = vadd.f32 %v129, %v291
    %293 = vmatmul.f32.gmra.mxu0 %v104
    %v294 = vpop.f32.mrf.mxu0
    %v295 = vadd.f32 %v129, %v294
    %296 = vmatmul.f32.gmra.mxu0 %v105
    %v297 = vpop.f32.mrf.mxu0
    %v298 = vadd.f32 %v129, %v297
    %299 = vmatmul.f32.gmra.mxu0 %v106
    %v300 = vpop.f32.mrf.mxu0
    %v301 = vadd.f32 %v129, %v300
    %302 = vmatmul.f32.gmra.mxu0 %v107
    %v303 = vpop.f32.mrf.mxu0
    %v304 = vadd.f32 %v129, %v303
    %305 = vmatmul.f32.gmra.mxu0 %v108
    %v306 = vpop.f32.mrf.mxu0
    %v307 = vadd.f32 %v129, %v306
    %308 = vmatmul.f32.gmra.mxu0 %v109
    %v309 = vpop.f32.mrf.mxu0
    %v310 = vadd.f32 %v129, %v309
    %311 = vmatmul.f32.gmra.mxu0 %v110
    %v312 = vpop.f32.mrf.mxu0
    %v313 = vadd.f32 %v129, %v312
    %314 = vmatmul.f32.gmra.mxu0 %v111
    %v315 = vpop.f32.mrf.mxu0
    %v316 = vadd.f32 %v129, %v315
    %317 = vdwg.mxu0
    %v318 = vand.u32 2147483647, %v148
    %v319 = vand.u32 2147483647, %v151
    %v320 = vand.u32 2147483647, %v154
    %v321 = vand.u32 2147483647, %v157
    %v322 = vand.u32 2147483647, %v160
    %v323 = vand.u32 2147483647, %v163
    %v324 = vand.u32 2147483647, %v166
    %v325 = vand.u32 2147483647, %v169
    %v326 = vand.u32 2147483647, %v172
    %v327 = vand.u32 2147483647, %v175
    %v328 = vand.u32 2147483647, %v178
    %v329 = vand.u32 2147483647, %v181
    %v330 = vand.u32 2147483647, %v184
    %v331 = vand.u32 2147483647, %v187
    %v332 = vand.u32 2147483647, %v190
    %v333 = vand.u32 2147483647, %v193
    %v334 = vand.u32 2147483647, %v196
    %v335 = vand.u32 2147483647, %v199
    %v336 = vand.u32 2147483647, %v202
    %v337 = vand.u32 2147483647, %v205
    %v338 = vand.u32 2147483647, %v208
    %v339 = vand.u32 2147483647, %v211
    %v340 = vand.u32 2147483647, %v214
    %v341 = vand.u32 2147483647, %v217
    %v342 = vand.u32 2147483647, %v220
    %v343 = vand.u32 2147483647, %v223
    %v344 = vand.u32 2147483647, %v226
    %v345 = vand.u32 2147483647, %v229
    %v346 = vand.u32 2147483647, %v232
    %v347 = vand.u32 2147483647, %v235
    %v348 = vand.u32 2147483647, %v238
    %v349 = vand.u32 2147483647, %v241
    %v350 = vand.u32 2147483647, %v244
    %v351 = vand.u32 2147483647, %v247
    %v352 = vand.u32 2147483647, %v250
    %v353 = vand.u32 2147483647, %v253
    %v354 = vand.u32 2147483647, %v256
    %v355 = vand.u32 2147483647, %v259
    %v356 = vand.u32 2147483647, %v262
    %v357 = vand.u32 2147483647, %v265
    %v358 = vand.u32 2147483647, %v268
    %v359 = vand.u32 2147483647, %v271
    %v360 = vand.u32 2147483647, %v274
    %v361 = vand.u32 2147483647, %v277
    %v362 = vand.u32 2147483647, %v280
    %v363 = vand.u32 2147483647, %v283
    %v364 = vand.u32 2147483647, %v286
    %v365 = vand.u32 2147483647, %v289
    %v366 = vand.u32 2147483647, %v292
    %v367 = vand.u32 2147483647, %v295
    %v368 = vand.u32 2147483647, %v298
    %v369 = vand.u32 2147483647, %v301
    %v370 = vand.u32 2147483647, %v304
    %v371 = vand.u32 2147483647, %v307
    %v372 = vand.u32 2147483647, %v310
    %v373 = vand.u32 2147483647, %v313
    %v374 = vand.u32 2147483647, %v316
    %v375 = vsub.f32 0.0, %v318
    %v376 = vsub.f32 0.0, %v319
    %v377 = vsub.f32 0.0, %v320
    %v378 = vsub.f32 0.0, %v321
    %v379 = vsub.f32 0.0, %v322
    %v380 = vsub.f32 0.0, %v323
    %v381 = vsub.f32 0.0, %v324
    %v382 = vsub.f32 0.0, %v325
    %v383 = vsub.f32 0.0, %v326
    %v384 = vsub.f32 0.0, %v327
    %v385 = vsub.f32 0.0, %v328
    %v386 = vsub.f32 0.0, %v329
    %v387 = vsub.f32 0.0, %v330
    %v388 = vsub.f32 0.0, %v331
    %v389 = vsub.f32 0.0, %v332
    %v390 = vsub.f32 0.0, %v333
    %v391 = vsub.f32 0.0, %v334
    %v392 = vsub.f32 0.0, %v335
    %v393 = vsub.f32 0.0, %v336
    %v394 = vsub.f32 0.0, %v337
    %v395 = vsub.f32 0.0, %v338
    %v396 = vsub.f32 0.0, %v339
    %v397 = vsub.f32 0.0, %v340
    %v398 = vsub.f32 0.0, %v341
    %v399 = vsub.f32 0.0, %v342
    %v400 = vsub.f32 0.0, %v343
    %v401 = vsub.f32 0.0, %v344
    %v402 = vsub.f32 0.0, %v345
    %v403 = vsub.f32 0.0, %v346
    %v404 = vsub.f32 0.0, %v347
    %v405 = vsub.f32 0.0, %v348
    %v406 = vsub.f32 0.0, %v349
    %v407 = vsub.f32 0.0, %v350
    %v408 = vsub.f32 0.0, %v351
    %v409 = vsub.f32 0.0, %v352
    %v410 = vsub.f32 0.0, %v353
    %v411 = vsub.f32 0.0, %v354
    %v412 = vsub.f32 0.0, %v355
    %v413 = vsub.f32 0.0, %v356
    %v414 = vsub.f32 0.0, %v357
    %v415 = vsub.f32 0.0, %v358
    %v416 = vsub.f32 0.0, %v359
    %v417 = vsub.f32 0.0, %v360
    %v418 = vsub.f32 0.0, %v361
    %v419 = vsub.f32 0.0, %v362
    %v420 = vsub.f32 0.0, %v363
    %v421 = vsub.f32 0.0, %v364
    %v422 = vsub.f32 0.0, %v365
    %v423 = vsub.f32 0.0, %v366
    %v424 = vsub.f32 0.0, %v367
    %v425 = vsub.f32 0.0, %v368
    %v426 = vsub.f32 0.0, %v369
    %v427 = vsub.f32 0.0, %v370
    %v428 = vsub.f32 0.0, %v371
    %v429 = vsub.f32 0.0, %v372
    %v430 = vsub.f32 0.0, %v373
    %v431 = vsub.f32 0.0, %v374
    %v432 = vmul.f32 %v375, 1.442695
    %v433 = vpow.pop %v432
    %v434 = vmul.f32 %v376, 1.442695
    %v435 = vpow.pop %v434
    %v436 = vmul.f32 %v377, 1.442695
    %v437 = vpow.pop %v436
    %v438 = vmul.f32 %v378, 1.442695
    %v439 = vpow.pop %v438
    %v440 = vmul.f32 %v379, 1.442695
    %v441 = vpow.pop %v440
    %v442 = vmul.f32 %v380, 1.442695
    %v443 = vpow.pop %v442
    %v444 = vmul.f32 %v381, 1.442695
    %v445 = vpow.pop %v444
    %v446 = vmul.f32 %v382, 1.442695
    %v447 = vpow.pop %v446
    %v448 = vmul.f32 %v383, 1.442695
    %v449 = vpow.pop %v448
    %v450 = vmul.f32 %v384, 1.442695
    %v451 = vpow.pop %v450
    %v452 = vmul.f32 %v385, 1.442695
    %v453 = vpow.pop %v452
    %v454 = vmul.f32 %v386, 1.442695
    %v455 = vpow.pop %v454
    %v456 = vmul.f32 %v387, 1.442695
    %v457 = vpow.pop %v456
    %v458 = vmul.f32 %v388, 1.442695
    %v459 = vpow.pop %v458
    %v460 = vmul.f32 %v389, 1.442695
    %v461 = vpow.pop %v460
    %v462 = vmul.f32 %v390, 1.442695
    %v463 = vpow.pop %v462
    %v464 = vmul.f32 %v391, 1.442695
    %v465 = vpow.pop %v464
    %v466 = vmul.f32 %v392, 1.442695
    %v467 = vpow.pop %v466
    %v468 = vmul.f32 %v393, 1.442695
    %v469 = vpow.pop %v468
    %v470 = vmul.f32 %v394, 1.442695
    %v471 = vpow.pop %v470
    %v472 = vmul.f32 %v395, 1.442695
    %v473 = vpow.pop %v472
    %v474 = vmul.f32 %v396, 1.442695
    %v475 = vpow.pop %v474
    %v476 = vmul.f32 %v397, 1.442695
    %v477 = vpow.pop %v476
    %v478 = vmul.f32 %v398, 1.442695
    %v479 = vpow.pop %v478
    %v480 = vmul.f32 %v399, 1.442695
    %v481 = vpow.pop %v480
    %v482 = vmul.f32 %v400, 1.442695
    %v483 = vpow.pop %v482
    %v484 = vmul.f32 %v401, 1.442695
    %v485 = vpow.pop %v484
    %v486 = vmul.f32 %v402, 1.442695
    %v487 = vpow.pop %v486
    %v488 = vmul.f32 %v403, 1.442695
    %v489 = vpow.pop %v488
    %v490 = vmul.f32 %v404, 1.442695
    %v491 = vpow.pop %v490
    %v492 = vmul.f32 %v405, 1.442695
    %v493 = vpow.pop %v492
    %v494 = vmul.f32 %v406, 1.442695
    %v495 = vpow.pop %v494
    %v496 = vmul.f32 %v407, 1.442695
    %v497 = vpow.pop %v496
    %v498 = vmul.f32 %v408, 1.442695
    %v499 = vpow.pop %v498
    %v500 = vmul.f32 %v409, 1.442695
    %v501 = vpow.pop %v500
    %v502 = vmul.f32 %v410, 1.442695
    %v503 = vpow.pop %v502
    %v504 = vmul.f32 %v411, 1.442695
    %v505 = vpow.pop %v504
    %v506 = vmul.f32 %v412, 1.442695
    %v507 = vpow.pop %v506
    %v508 = vmul.f32 %v413, 1.442695
    %v509 = vpow.pop %v508
    %v510 = vmul.f32 %v414, 1.442695
    %v511 = vpow.pop %v510
    %v512 = vmul.f32 %v415, 1.442695
    %v513 = vpow.pop %v512
    %v514 = vmul.f32 %v416, 1.442695
    %v515 = vpow.pop %v514
    %v516 = vmul.f32 %v417, 1.442695
    %v517 = vpow.pop %v516
    %v518 = vmul.f32 %v418, 1.442695
    %v519 = vpow.pop %v518
    %v520 = vmul.f32 %v419, 1.442695
    %v521 = vpow.pop %v520
    %v522 = vmul.f32 %v420, 1.442695
    %v523 = vpow.pop %v522
    %v524 = vmul.f32 %v421, 1.442695
    %v525 = vpow.pop %v524
    %v526 = vmul.f32 %v422, 1.442695
    %v527 = vpow.pop %v526
    %v528 = vmul.f32 %v423, 1.442695
    %v529 = vpow.pop %v528
    %v530 = vmul.f32 %v424, 1.442695
    %v531 = vpow.pop %v530
    %v532 = vmul.f32 %v425, 1.442695
    %v533 = vpow.pop %v532
    %v534 = vmul.f32 %v426, 1.442695
    %v535 = vpow.pop %v534
    %v536 = vmul.f32 %v427, 1.442695
    %v537 = vpow.pop %v536
    %v538 = vmul.f32 %v428, 1.442695
    %v539 = vpow.pop %v538
    %v540 = vmul.f32 %v429, 1.442695
    %v541 = vpow.pop %v540
    %v542 = vmul.f32 %v430, 1.442695
    %v543 = vpow.pop %v542
    %v544 = vmul.f32 %v431, 1.442695
    %v545 = vpow.pop %v544
    %vm546 = vcmp.ge.f32.partialorder %v148, 0.0
    %vm547 = vcmp.ge.f32.partialorder %v151, 0.0
    %vm548 = vcmp.ge.f32.partialorder %v154, 0.0
    %vm549 = vcmp.ge.f32.partialorder %v157, 0.0
    %vm550 = vcmp.ge.f32.partialorder %v160, 0.0
    %vm551 = vcmp.ge.f32.partialorder %v163, 0.0
    %vm552 = vcmp.ge.f32.partialorder %v166, 0.0
    %vm553 = vcmp.ge.f32.partialorder %v169, 0.0
    %vm554 = vcmp.ge.f32.partialorder %v172, 0.0
    %vm555 = vcmp.ge.f32.partialorder %v175, 0.0
    %vm556 = vcmp.ge.f32.partialorder %v178, 0.0
    %vm557 = vcmp.ge.f32.partialorder %v181, 0.0
    %vm558 = vcmp.ge.f32.partialorder %v184, 0.0
    %vm559 = vcmp.ge.f32.partialorder %v187, 0.0
    %vm560 = vcmp.ge.f32.partialorder %v190, 0.0
    %vm561 = vcmp.ge.f32.partialorder %v193, 0.0
    %vm562 = vcmp.ge.f32.partialorder %v196, 0.0
    %vm563 = vcmp.ge.f32.partialorder %v199, 0.0
    %vm564 = vcmp.ge.f32.partialorder %v202, 0.0
    %vm565 = vcmp.ge.f32.partialorder %v205, 0.0
    %vm566 = vcmp.ge.f32.partialorder %v208, 0.0
    %vm567 = vcmp.ge.f32.partialorder %v211, 0.0
    %vm568 = vcmp.ge.f32.partialorder %v214, 0.0
    %vm569 = vcmp.ge.f32.partialorder %v217, 0.0
    %vm570 = vcmp.ge.f32.partialorder %v220, 0.0
    %vm571 = vcmp.ge.f32.partialorder %v223, 0.0
    %vm572 = vcmp.ge.f32.partialorder %v226, 0.0
    %vm573 = vcmp.ge.f32.partialorder %v229, 0.0
    %vm574 = vcmp.ge.f32.partialorder %v232, 0.0
    %vm575 = vcmp.ge.f32.partialorder %v235, 0.0
    %vm576 = vcmp.ge.f32.partialorder %v238, 0.0
    %vm577 = vcmp.ge.f32.partialorder %v241, 0.0
    %vm578 = vcmp.ge.f32.partialorder %v244, 0.0
    %vm579 = vcmp.ge.f32.partialorder %v247, 0.0
    %vm580 = vcmp.ge.f32.partialorder %v250, 0.0
    %vm581 = vcmp.ge.f32.partialorder %v253, 0.0
    %vm582 = vcmp.ge.f32.partialorder %v256, 0.0
    %vm583 = vcmp.ge.f32.partialorder %v259, 0.0
    %vm584 = vcmp.ge.f32.partialorder %v262, 0.0
    %vm585 = vcmp.ge.f32.partialorder %v265, 0.0
    %vm586 = vcmp.ge.f32.partialorder %v268, 0.0
    %vm587 = vcmp.ge.f32.partialorder %v271, 0.0
    %vm588 = vcmp.ge.f32.partialorder %v274, 0.0
    %vm589 = vcmp.ge.f32.partialorder %v277, 0.0
    %vm590 = vcmp.ge.f32.partialorder %v280, 0.0
    %vm591 = vcmp.ge.f32.partialorder %v283, 0.0
    %vm592 = vcmp.ge.f32.partialorder %v286, 0.0
    %vm593 = vcmp.ge.f32.partialorder %v289, 0.0
    %vm594 = vcmp.ge.f32.partialorder %v292, 0.0
    %vm595 = vcmp.ge.f32.partialorder %v295, 0.0
    %vm596 = vcmp.ge.f32.partialorder %v298, 0.0
    %vm597 = vcmp.ge.f32.partialorder %v301, 0.0
    %vm598 = vcmp.ge.f32.partialorder %v304, 0.0
    %vm599 = vcmp.ge.f32.partialorder %v307, 0.0
    %vm600 = vcmp.ge.f32.partialorder %v310, 0.0
    %vm601 = vcmp.ge.f32.partialorder %v313, 0.0
    %vm602 = vcmp.ge.f32.partialorder %v316, 0.0
    %v603 = vmul.f32 %v433, 2.0
    %v604 = vmul.f32 %v435, 2.0
    %v605 = vmul.f32 %v437, 2.0
    %v606 = vmul.f32 %v439, 2.0
    %v607 = vmul.f32 %v441, 2.0
    %v608 = vmul.f32 %v443, 2.0
    %v609 = vmul.f32 %v445, 2.0
    %v610 = vmul.f32 %v447, 2.0
    %v611 = vmul.f32 %v449, 2.0
    %v612 = vmul.f32 %v451, 2.0
    %v613 = vmul.f32 %v453, 2.0
    %v614 = vmul.f32 %v455, 2.0
    %v615 = vmul.f32 %v457, 2.0
    %v616 = vmul.f32 %v459, 2.0
    %v617 = vmul.f32 %v461, 2.0
    %v618 = vmul.f32 %v463, 2.0
    %v619 = vmul.f32 %v465, 2.0
    %v620 = vmul.f32 %v467, 2.0
    %v621 = vmul.f32 %v469, 2.0
    %v622 = vmul.f32 %v471, 2.0
    %v623 = vmul.f32 %v473, 2.0
    %v624 = vmul.f32 %v475, 2.0
    %v625 = vmul.f32 %v477, 2.0
    %v626 = vmul.f32 %v479, 2.0
    %v627 = vmul.f32 %v481, 2.0
    %v628 = vmul.f32 %v483, 2.0
    %v629 = vmul.f32 %v485, 2.0
    %v630 = vmul.f32 %v487, 2.0
    %v631 = vmul.f32 %v489, 2.0
    %v632 = vmul.f32 %v491, 2.0
    %v633 = vmul.f32 %v493, 2.0
    %v634 = vmul.f32 %v495, 2.0
    %v635 = vmul.f32 %v497, 2.0
    %v636 = vmul.f32 %v499, 2.0
    %v637 = vmul.f32 %v501, 2.0
    %v638 = vmul.f32 %v503, 2.0
    %v639 = vmul.f32 %v505, 2.0
    %v640 = vmul.f32 %v507, 2.0
    %v641 = vmul.f32 %v509, 2.0
    %v642 = vmul.f32 %v511, 2.0
    %v643 = vmul.f32 %v513, 2.0
    %v644 = vmul.f32 %v515, 2.0
    %v645 = vmul.f32 %v517, 2.0
    %v646 = vmul.f32 %v519, 2.0
    %v647 = vmul.f32 %v521, 2.0
    %v648 = vmul.f32 %v523, 2.0
    %v649 = vmul.f32 %v525, 2.0
    %v650 = vmul.f32 %v527, 2.0
    %v651 = vmul.f32 %v529, 2.0
    %v652 = vmul.f32 %v531, 2.0
    %v653 = vmul.f32 %v533, 2.0
    %v654 = vmul.f32 %v535, 2.0
    %v655 = vmul.f32 %v537, 2.0
    %v656 = vmul.f32 %v539, 2.0
    %v657 = vmul.f32 %v541, 2.0
    %v658 = vmul.f32 %v543, 2.0
    %v659 = vmul.f32 %v545, 2.0
    %v660 = vadd.f32 %v603, 1.0
    %v661 = vadd.f32 %v604, 1.0
    %v662 = vadd.f32 %v605, 1.0
    %v663 = vadd.f32 %v606, 1.0
    %v664 = vadd.f32 %v607, 1.0
    %v665 = vadd.f32 %v608, 1.0
    %v666 = vadd.f32 %v609, 1.0
    %v667 = vadd.f32 %v610, 1.0
    %v668 = vadd.f32 %v611, 1.0
    %v669 = vadd.f32 %v612, 1.0
    %v670 = vadd.f32 %v613, 1.0
    %v671 = vadd.f32 %v614, 1.0
    %v672 = vadd.f32 %v615, 1.0
    %v673 = vadd.f32 %v616, 1.0
    %v674 = vadd.f32 %v617, 1.0
    %v675 = vadd.f32 %v618, 1.0
    %v676 = vadd.f32 %v619, 1.0
    %v677 = vadd.f32 %v620, 1.0
    %v678 = vadd.f32 %v621, 1.0
    %v679 = vadd.f32 %v622, 1.0
    %v680 = vadd.f32 %v623, 1.0
    %v681 = vadd.f32 %v624, 1.0
    %v682 = vadd.f32 %v625, 1.0
    %v683 = vadd.f32 %v626, 1.0
    %v684 = vadd.f32 %v627, 1.0
    %v685 = vadd.f32 %v628, 1.0
    %v686 = vadd.f32 %v629, 1.0
    %v687 = vadd.f32 %v630, 1.0
    %v688 = vadd.f32 %v631, 1.0
    %v689 = vadd.f32 %v632, 1.0
    %v690 = vadd.f32 %v633, 1.0
    %v691 = vadd.f32 %v634, 1.0
    %v692 = vadd.f32 %v635, 1.0
    %v693 = vadd.f32 %v636, 1.0
    %v694 = vadd.f32 %v637, 1.0
    %v695 = vadd.f32 %v638, 1.0
    %v696 = vadd.f32 %v639, 1.0
    %v697 = vadd.f32 %v640, 1.0
    %v698 = vadd.f32 %v641, 1.0
    %v699 = vadd.f32 %v642, 1.0
    %v700 = vadd.f32 %v643, 1.0
    %v701 = vadd.f32 %v644, 1.0
    %v702 = vadd.f32 %v645, 1.0
    %v703 = vadd.f32 %v646, 1.0
    %v704 = vadd.f32 %v647, 1.0
    %v705 = vadd.f32 %v648, 1.0
    %v706 = vadd.f32 %v649, 1.0
    %v707 = vadd.f32 %v650, 1.0
    %v708 = vadd.f32 %v651, 1.0
    %v709 = vadd.f32 %v652, 1.0
    %v710 = vadd.f32 %v653, 1.0
    %v711 = vadd.f32 %v654, 1.0
    %v712 = vadd.f32 %v655, 1.0
    %v713 = vadd.f32 %v656, 1.0
    %v714 = vadd.f32 %v657, 1.0
    %v715 = vadd.f32 %v658, 1.0
    %v716 = vadd.f32 %v659, 1.0
    %v717 = vadd.f32 %v433, 2.0
    %v718 = vadd.f32 %v435, 2.0
    %v719 = vadd.f32 %v437, 2.0
    %v720 = vadd.f32 %v439, 2.0
    %v721 = vadd.f32 %v441, 2.0
    %v722 = vadd.f32 %v443, 2.0
    %v723 = vadd.f32 %v445, 2.0
    %v724 = vadd.f32 %v447, 2.0
    %v725 = vadd.f32 %v449, 2.0
    %v726 = vadd.f32 %v451, 2.0
    %v727 = vadd.f32 %v453, 2.0
    %v728 = vadd.f32 %v455, 2.0
    %v729 = vadd.f32 %v457, 2.0
    %v730 = vadd.f32 %v459, 2.0
    %v731 = vadd.f32 %v461, 2.0
    %v732 = vadd.f32 %v463, 2.0
    %v733 = vadd.f32 %v465, 2.0
    %v734 = vadd.f32 %v467, 2.0
    %v735 = vadd.f32 %v469, 2.0
    %v736 = vadd.f32 %v471, 2.0
    %v737 = vadd.f32 %v473, 2.0
    %v738 = vadd.f32 %v475, 2.0
    %v739 = vadd.f32 %v477, 2.0
    %v740 = vadd.f32 %v479, 2.0
    %v741 = vadd.f32 %v481, 2.0
    %v742 = vadd.f32 %v483, 2.0
    %v743 = vadd.f32 %v485, 2.0
    %v744 = vadd.f32 %v487, 2.0
    %v745 = vadd.f32 %v489, 2.0
    %v746 = vadd.f32 %v491, 2.0
    %v747 = vadd.f32 %v493, 2.0
    %v748 = vadd.f32 %v495, 2.0
    %v749 = vadd.f32 %v497, 2.0
    %v750 = vadd.f32 %v499, 2.0
    %v751 = vadd.f32 %v501, 2.0
    %v752 = vadd.f32 %v503, 2.0
    %v753 = vadd.f32 %v505, 2.0
    %v754 = vadd.f32 %v507, 2.0
    %v755 = vadd.f32 %v509, 2.0
    %v756 = vadd.f32 %v511, 2.0
    %v757 = vadd.f32 %v513, 2.0
    %v758 = vadd.f32 %v515, 2.0
    %v759 = vadd.f32 %v517, 2.0
    %v760 = vadd.f32 %v519, 2.0
    %v761 = vadd.f32 %v521, 2.0
    %v762 = vadd.f32 %v523, 2.0
    %v763 = vadd.f32 %v525, 2.0
    %v764 = vadd.f32 %v527, 2.0
    %v765 = vadd.f32 %v529, 2.0
    %v766 = vadd.f32 %v531, 2.0
    %v767 = vadd.f32 %v533, 2.0
    %v768 = vadd.f32 %v535, 2.0
    %v769 = vadd.f32 %v537, 2.0
    %v770 = vadd.f32 %v539, 2.0
    %v771 = vadd.f32 %v541, 2.0
    %v772 = vadd.f32 %v543, 2.0
    %v773 = vadd.f32 %v545, 2.0
    %v774 = vmul.f32 %v433, %v717
    %v775 = vmul.f32 %v435, %v718
    %v776 = vmul.f32 %v437, %v719
    %v777 = vmul.f32 %v439, %v720
    %v778 = vmul.f32 %v441, %v721
    %v779 = vmul.f32 %v443, %v722
    %v780 = vmul.f32 %v445, %v723
    %v781 = vmul.f32 %v447, %v724
    %v782 = vmul.f32 %v449, %v725
    %v783 = vmul.f32 %v451, %v726
    %v784 = vmul.f32 %v453, %v727
    %v785 = vmul.f32 %v455, %v728
    %v786 = vmul.f32 %v457, %v729
    %v787 = vmul.f32 %v459, %v730
    %v788 = vmul.f32 %v461, %v731
    %v789 = vmul.f32 %v463, %v732
    %v790 = vmul.f32 %v465, %v733
    %v791 = vmul.f32 %v467, %v734
    %v792 = vmul.f32 %v469, %v735
    %v793 = vmul.f32 %v471, %v736
    %v794 = vmul.f32 %v473, %v737
    %v795 = vmul.f32 %v475, %v738
    %v796 = vmul.f32 %v477, %v739
    %v797 = vmul.f32 %v479, %v740
    %v798 = vmul.f32 %v481, %v741
    %v799 = vmul.f32 %v483, %v742
    %v800 = vmul.f32 %v485, %v743
    %v801 = vmul.f32 %v487, %v744
    %v802 = vmul.f32 %v489, %v745
    %v803 = vmul.f32 %v491, %v746
    %v804 = vmul.f32 %v493, %v747
    %v805 = vmul.f32 %v495, %v748
    %v806 = vmul.f32 %v497, %v749
    %v807 = vmul.f32 %v499, %v750
    %v808 = vmul.f32 %v501, %v751
    %v809 = vmul.f32 %v503, %v752
    %v810 = vmul.f32 %v505, %v753
    %v811 = vmul.f32 %v507, %v754
    %v812 = vmul.f32 %v509, %v755
    %v813 = vmul.f32 %v511, %v756
    %v814 = vmul.f32 %v513, %v757
    %v815 = vmul.f32 %v515, %v758
    %v816 = vmul.f32 %v517, %v759
    %v817 = vmul.f32 %v519, %v760
    %v818 = vmul.f32 %v521, %v761
    %v819 = vmul.f32 %v523, %v762
    %v820 = vmul.f32 %v525, %v763
    %v821 = vmul.f32 %v527, %v764
    %v822 = vmul.f32 %v529, %v765
    %v823 = vmul.f32 %v531, %v766
    %v824 = vmul.f32 %v533, %v767
    %v825 = vmul.f32 %v535, %v768
    %v826 = vmul.f32 %v537, %v769
    %v827 = vmul.f32 %v539, %v770
    %v828 = vmul.f32 %v541, %v771
    %v829 = vmul.f32 %v543, %v772
    %v830 = vmul.f32 %v545, %v773
    %v831 = vsel %vm546, %v660, %v774
    %v832 = vsel %vm547, %v661, %v775
    %v833 = vsel %vm548, %v662, %v776
    %v834 = vsel %vm549, %v663, %v777
    %v835 = vsel %vm550, %v664, %v778
    %v836 = vsel %vm551, %v665, %v779
    %v837 = vsel %vm552, %v666, %v780
    %v838 = vsel %vm553, %v667, %v781
    %v839 = vsel %vm554, %v668, %v782
    %v840 = vsel %vm555, %v669, %v783
    %v841 = vsel %vm556, %v670, %v784
    %v842 = vsel %vm557, %v671, %v785
    %v843 = vsel %vm558, %v672, %v786
    %v844 = vsel %vm559, %v673, %v787
    %v845 = vsel %vm560, %v674, %v788
    %v846 = vsel %vm561, %v675, %v789
    %v847 = vsel %vm562, %v676, %v790
    %v848 = vsel %vm563, %v677, %v791
    %v849 = vsel %vm564, %v678, %v792
    %v850 = vsel %vm565, %v679, %v793
    %v851 = vsel %vm566, %v680, %v794
    %v852 = vsel %vm567, %v681, %v795
    %v853 = vsel %vm568, %v682, %v796
    %v854 = vsel %vm569, %v683, %v797
    %v855 = vsel %vm570, %v684, %v798
    %v856 = vsel %vm571, %v685, %v799
    %v857 = vsel %vm572, %v686, %v800
    %v858 = vsel %vm573, %v687, %v801
    %v859 = vsel %vm574, %v688, %v802
    %v860 = vsel %vm575, %v689, %v803
    %v861 = vsel %vm576, %v690, %v804
    %v862 = vsel %vm577, %v691, %v805
    %v863 = vsel %vm578, %v692, %v806
    %v864 = vsel %vm579, %v693, %v807
    %v865 = vsel %vm580, %v694, %v808
    %v866 = vsel %vm581, %v695, %v809
    %v867 = vsel %vm582, %v696, %v810
    %v868 = vsel %vm583, %v697, %v811
    %v869 = vsel %vm584, %v698, %v812
    %v870 = vsel %vm585, %v699, %v813
    %v871 = vsel %vm586, %v700, %v814
    %v872 = vsel %vm587, %v701, %v815
    %v873 = vsel %vm588, %v702, %v816
    %v874 = vsel %vm589, %v703, %v817
    %v875 = vsel %vm590, %v704, %v818
    %v876 = vsel %vm591, %v705, %v819
    %v877 = vsel %vm592, %v706, %v820
    %v878 = vsel %vm593, %v707, %v821
    %v879 = vsel %vm594, %v708, %v822
    %v880 = vsel %vm595, %v709, %v823
    %v881 = vsel %vm596, %v710, %v824
    %v882 = vsel %vm597, %v711, %v825
    %v883 = vsel %vm598, %v712, %v826
    %v884 = vsel %vm599, %v713, %v827
    %v885 = vsel %vm600, %v714, %v828
    %v886 = vsel %vm601, %v715, %v829
    %v887 = vsel %vm602, %v716, %v830
    %v888 = vmul.f32 %v603, %v433
    %v889 = vmul.f32 %v604, %v435
    %v890 = vmul.f32 %v605, %v437
    %v891 = vmul.f32 %v606, %v439
    %v892 = vmul.f32 %v607, %v441
    %v893 = vmul.f32 %v608, %v443
    %v894 = vmul.f32 %v609, %v445
    %v895 = vmul.f32 %v610, %v447
    %v896 = vmul.f32 %v611, %v449
    %v897 = vmul.f32 %v612, %v451
    %v898 = vmul.f32 %v613, %v453
    %v899 = vmul.f32 %v614, %v455
    %v900 = vmul.f32 %v615, %v457
    %v901 = vmul.f32 %v616, %v459
    %v902 = vmul.f32 %v617, %v461
    %v903 = vmul.f32 %v618, %v463
    %v904 = vmul.f32 %v619, %v465
    %v905 = vmul.f32 %v620, %v467
    %v906 = vmul.f32 %v621, %v469
    %v907 = vmul.f32 %v622, %v471
    %v908 = vmul.f32 %v623, %v473
    %v909 = vmul.f32 %v624, %v475
    %v910 = vmul.f32 %v625, %v477
    %v911 = vmul.f32 %v626, %v479
    %v912 = vmul.f32 %v627, %v481
    %v913 = vmul.f32 %v628, %v483
    %v914 = vmul.f32 %v629, %v485
    %v915 = vmul.f32 %v630, %v487
    %v916 = vmul.f32 %v631, %v489
    %v917 = vmul.f32 %v632, %v491
    %v918 = vmul.f32 %v633, %v493
    %v919 = vmul.f32 %v634, %v495
    %v920 = vmul.f32 %v635, %v497
    %v921 = vmul.f32 %v636, %v499
    %v922 = vmul.f32 %v637, %v501
    %v923 = vmul.f32 %v638, %v503
    %v924 = vmul.f32 %v639, %v505
    %v925 = vmul.f32 %v640, %v507
    %v926 = vmul.f32 %v641, %v509
    %v927 = vmul.f32 %v642, %v511
    %v928 = vmul.f32 %v643, %v513
    %v929 = vmul.f32 %v644, %v515
    %v930 = vmul.f32 %v645, %v517
    %v931 = vmul.f32 %v646, %v519
    %v932 = vmul.f32 %v647, %v521
    %v933 = vmul.f32 %v648, %v523
    %v934 = vmul.f32 %v649, %v525
    %v935 = vmul.f32 %v650, %v527
    %v936 = vmul.f32 %v651, %v529
    %v937 = vmul.f32 %v652, %v531
    %v938 = vmul.f32 %v653, %v533
    %v939 = vmul.f32 %v654, %v535
    %v940 = vmul.f32 %v655, %v537
    %v941 = vmul.f32 %v656, %v539
    %v942 = vmul.f32 %v657, %v541
    %v943 = vmul.f32 %v658, %v543
    %v944 = vmul.f32 %v659, %v545
    %v945 = vadd.f32 %v660, %v888
    %v946 = vadd.f32 %v661, %v889
    %v947 = vadd.f32 %v662, %v890
    %v948 = vadd.f32 %v663, %v891
    %v949 = vadd.f32 %v664, %v892
    %v950 = vadd.f32 %v665, %v893
    %v951 = vadd.f32 %v666, %v894
    %v952 = vadd.f32 %v667, %v895
    %v953 = vadd.f32 %v668, %v896
    %v954 = vadd.f32 %v669, %v897
    %v955 = vadd.f32 %v670, %v898
    %v956 = vadd.f32 %v671, %v899
    %v957 = vadd.f32 %v672, %v900
    %v958 = vadd.f32 %v673, %v901
    %v959 = vadd.f32 %v674, %v902
    %v960 = vadd.f32 %v675, %v903
    %v961 = vadd.f32 %v676, %v904
    %v962 = vadd.f32 %v677, %v905
    %v963 = vadd.f32 %v678, %v906
    %v964 = vadd.f32 %v679, %v907
    %v965 = vadd.f32 %v680, %v908
    %v966 = vadd.f32 %v681, %v909
    %v967 = vadd.f32 %v682, %v910
    %v968 = vadd.f32 %v683, %v911
    %v969 = vadd.f32 %v684, %v912
    %v970 = vadd.f32 %v685, %v913
    %v971 = vadd.f32 %v686, %v914
    %v972 = vadd.f32 %v687, %v915
    %v973 = vadd.f32 %v688, %v916
    %v974 = vadd.f32 %v689, %v917
    %v975 = vadd.f32 %v690, %v918
    %v976 = vadd.f32 %v691, %v919
    %v977 = vadd.f32 %v692, %v920
    %v978 = vadd.f32 %v693, %v921
    %v979 = vadd.f32 %v694, %v922
    %v980 = vadd.f32 %v695, %v923
    %v981 = vadd.f32 %v696, %v924
    %v982 = vadd.f32 %v697, %v925
    %v983 = vadd.f32 %v698, %v926
    %v984 = vadd.f32 %v699, %v927
    %v985 = vadd.f32 %v700, %v928
    %v986 = vadd.f32 %v701, %v929
    %v987 = vadd.f32 %v702, %v930
    %v988 = vadd.f32 %v703, %v931
    %v989 = vadd.f32 %v704, %v932
    %v990 = vadd.f32 %v705, %v933
    %v991 = vadd.f32 %v706, %v934
    %v992 = vadd.f32 %v707, %v935
    %v993 = vadd.f32 %v708, %v936
    %v994 = vadd.f32 %v709, %v937
    %v995 = vadd.f32 %v710, %v938
    %v996 = vadd.f32 %v711, %v939
    %v997 = vadd.f32 %v712, %v940
    %v998 = vadd.f32 %v713, %v941
    %v999 = vadd.f32 %v714, %v942
    %v1000 = vadd.f32 %v715, %v943
    %v1001 = vadd.f32 %v716, %v944
    %v1002 = vadd.f32 %v774, 2.0
    %v1003 = vadd.f32 %v775, 2.0
    %v1004 = vadd.f32 %v776, 2.0
    %v1005 = vadd.f32 %v777, 2.0
    %v1006 = vadd.f32 %v778, 2.0
    %v1007 = vadd.f32 %v779, 2.0
    %v1008 = vadd.f32 %v780, 2.0
    %v1009 = vadd.f32 %v781, 2.0
    %v1010 = vadd.f32 %v782, 2.0
    %v1011 = vadd.f32 %v783, 2.0
    %v1012 = vadd.f32 %v784, 2.0
    %v1013 = vadd.f32 %v785, 2.0
    %v1014 = vadd.f32 %v786, 2.0
    %v1015 = vadd.f32 %v787, 2.0
    %v1016 = vadd.f32 %v788, 2.0
    %v1017 = vadd.f32 %v789, 2.0
    %v1018 = vadd.f32 %v790, 2.0
    %v1019 = vadd.f32 %v791, 2.0
    %v1020 = vadd.f32 %v792, 2.0
    %v1021 = vadd.f32 %v793, 2.0
    %v1022 = vadd.f32 %v794, 2.0
    %v1023 = vadd.f32 %v795, 2.0
    %v1024 = vadd.f32 %v796, 2.0
    %v1025 = vadd.f32 %v797, 2.0
    %v1026 = vadd.f32 %v798, 2.0
    %v1027 = vadd.f32 %v799, 2.0
    %v1028 = vadd.f32 %v800, 2.0
    %v1029 = vadd.f32 %v801, 2.0
    %v1030 = vadd.f32 %v802, 2.0
    %v1031 = vadd.f32 %v803, 2.0
    %v1032 = vadd.f32 %v804, 2.0
    %v1033 = vadd.f32 %v805, 2.0
    %v1034 = vadd.f32 %v806, 2.0
    %v1035 = vadd.f32 %v807, 2.0
    %v1036 = vadd.f32 %v808, 2.0
    %v1037 = vadd.f32 %v809, 2.0
    %v1038 = vadd.f32 %v810, 2.0
    %v1039 = vadd.f32 %v811, 2.0
    %v1040 = vadd.f32 %v812, 2.0
    %v1041 = vadd.f32 %v813, 2.0
    %v1042 = vadd.f32 %v814, 2.0
    %v1043 = vadd.f32 %v815, 2.0
    %v1044 = vadd.f32 %v816, 2.0
    %v1045 = vadd.f32 %v817, 2.0
    %v1046 = vadd.f32 %v818, 2.0
    %v1047 = vadd.f32 %v819, 2.0
    %v1048 = vadd.f32 %v820, 2.0
    %v1049 = vadd.f32 %v821, 2.0
    %v1050 = vadd.f32 %v822, 2.0
    %v1051 = vadd.f32 %v823, 2.0
    %v1052 = vadd.f32 %v824, 2.0
    %v1053 = vadd.f32 %v825, 2.0
    %v1054 = vadd.f32 %v826, 2.0
    %v1055 = vadd.f32 %v827, 2.0
    %v1056 = vadd.f32 %v828, 2.0
    %v1057 = vadd.f32 %v829, 2.0
    %v1058 = vadd.f32 %v830, 2.0
    %v1059 = vsel %vm546, %v945, %v1002
    %v1060 = vsel %vm547, %v946, %v1003
    %v1061 = vsel %vm548, %v947, %v1004
    %v1062 = vsel %vm549, %v948, %v1005
    %v1063 = vsel %vm550, %v949, %v1006
    %v1064 = vsel %vm551, %v950, %v1007
    %v1065 = vsel %vm552, %v951, %v1008
    %v1066 = vsel %vm553, %v952, %v1009
    %v1067 = vsel %vm554, %v953, %v1010
    %v1068 = vsel %vm555, %v954, %v1011
    %v1069 = vsel %vm556, %v955, %v1012
    %v1070 = vsel %vm557, %v956, %v1013
    %v1071 = vsel %vm558, %v957, %v1014
    %v1072 = vsel %vm559, %v958, %v1015
    %v1073 = vsel %vm560, %v959, %v1016
    %v1074 = vsel %vm561, %v960, %v1017
    %v1075 = vsel %vm562, %v961, %v1018
    %v1076 = vsel %vm563, %v962, %v1019
    %v1077 = vsel %vm564, %v963, %v1020
    %v1078 = vsel %vm565, %v964, %v1021
    %v1079 = vsel %vm566, %v965, %v1022
    %v1080 = vsel %vm567, %v966, %v1023
    %v1081 = vsel %vm568, %v967, %v1024
    %v1082 = vsel %vm569, %v968, %v1025
    %v1083 = vsel %vm570, %v969, %v1026
    %v1084 = vsel %vm571, %v970, %v1027
    %v1085 = vsel %vm572, %v971, %v1028
    %v1086 = vsel %vm573, %v972, %v1029
    %v1087 = vsel %vm574, %v973, %v1030
    %v1088 = vsel %vm575, %v974, %v1031
    %v1089 = vsel %vm576, %v975, %v1032
    %v1090 = vsel %vm577, %v976, %v1033
    %v1091 = vsel %vm578, %v977, %v1034
    %v1092 = vsel %vm579, %v978, %v1035
    %v1093 = vsel %vm580, %v979, %v1036
    %v1094 = vsel %vm581, %v980, %v1037
    %v1095 = vsel %vm582, %v981, %v1038
    %v1096 = vsel %vm583, %v982, %v1039
    %v1097 = vsel %vm584, %v983, %v1040
    %v1098 = vsel %vm585, %v984, %v1041
    %v1099 = vsel %vm586, %v985, %v1042
    %v1100 = vsel %vm587, %v986, %v1043
    %v1101 = vsel %vm588, %v987, %v1044
    %v1102 = vsel %vm589, %v988, %v1045
    %v1103 = vsel %vm590, %v989, %v1046
    %v1104 = vsel %vm591, %v990, %v1047
    %v1105 = vsel %vm592, %v991, %v1048
    %v1106 = vsel %vm593, %v992, %v1049
    %v1107 = vsel %vm594, %v993, %v1050
    %v1108 = vsel %vm595, %v994, %v1051
    %v1109 = vsel %vm596, %v995, %v1052
    %v1110 = vsel %vm597, %v996, %v1053
    %v1111 = vsel %vm598, %v997, %v1054
    %v1112 = vsel %vm599, %v998, %v1055
    %v1113 = vsel %vm600, %v999, %v1056
    %v1114 = vsel %vm601, %v1000, %v1057
    %v1115 = vsel %vm602, %v1001, %v1058
    %v1116 = vmul.f32 %v148, %v831
    %v1117 = vmul.f32 %v151, %v832
    %v1118 = vmul.f32 %v154, %v833
    %v1119 = vmul.f32 %v157, %v834
    %v1120 = vmul.f32 %v160, %v835
    %v1121 = vmul.f32 %v163, %v836
    %v1122 = vmul.f32 %v166, %v837
    %v1123 = vmul.f32 %v169, %v838
    %v1124 = vmul.f32 %v172, %v839
    %v1125 = vmul.f32 %v175, %v840
    %v1126 = vmul.f32 %v178, %v841
    %v1127 = vmul.f32 %v181, %v842
    %v1128 = vmul.f32 %v184, %v843
    %v1129 = vmul.f32 %v187, %v844
    %v1130 = vmul.f32 %v190, %v845
    %v1131 = vmul.f32 %v193, %v846
    %v1132 = vmul.f32 %v196, %v847
    %v1133 = vmul.f32 %v199, %v848
    %v1134 = vmul.f32 %v202, %v849
    %v1135 = vmul.f32 %v205, %v850
    %v1136 = vmul.f32 %v208, %v851
    %v1137 = vmul.f32 %v211, %v852
    %v1138 = vmul.f32 %v214, %v853
    %v1139 = vmul.f32 %v217, %v854
    %v1140 = vmul.f32 %v220, %v855
    %v1141 = vmul.f32 %v223, %v856
    %v1142 = vmul.f32 %v226, %v857
    %v1143 = vmul.f32 %v229, %v858
    %v1144 = vmul.f32 %v232, %v859
    %v1145 = vmul.f32 %v235, %v860
    %v1146 = vmul.f32 %v238, %v861
    %v1147 = vmul.f32 %v241, %v862
    %v1148 = vmul.f32 %v244, %v863
    %v1149 = vmul.f32 %v247, %v864
    %v1150 = vmul.f32 %v250, %v865
    %v1151 = vmul.f32 %v253, %v866
    %v1152 = vmul.f32 %v256, %v867
    %v1153 = vmul.f32 %v259, %v868
    %v1154 = vmul.f32 %v262, %v869
    %v1155 = vmul.f32 %v265, %v870
    %v1156 = vmul.f32 %v268, %v871
    %v1157 = vmul.f32 %v271, %v872
    %v1158 = vmul.f32 %v274, %v873
    %v1159 = vmul.f32 %v277, %v874
    %v1160 = vmul.f32 %v280, %v875
    %v1161 = vmul.f32 %v283, %v876
    %v1162 = vmul.f32 %v286, %v877
    %v1163 = vmul.f32 %v289, %v878
    %v1164 = vmul.f32 %v292, %v879
    %v1165 = vmul.f32 %v295, %v880
    %v1166 = vmul.f32 %v298, %v881
    %v1167 = vmul.f32 %v301, %v882
    %v1168 = vmul.f32 %v304, %v883
    %v1169 = vmul.f32 %v307, %v884
    %v1170 = vmul.f32 %v310, %v885
    %v1171 = vmul.f32 %v313, %v886
    %v1172 = vmul.f32 %v316, %v887
    %v1173 = vrcp.pop %v1059
    %v1174 = vrcp.pop %v1060
    %v1175 = vrcp.pop %v1061
    %v1176 = vrcp.pop %v1062
    %v1177 = vrcp.pop %v1063
    %v1178 = vrcp.pop %v1064
    %v1179 = vrcp.pop %v1065
    %v1180 = vrcp.pop %v1066
    %v1181 = vrcp.pop %v1067
    %v1182 = vrcp.pop %v1068
    %v1183 = vrcp.pop %v1069
    %v1184 = vrcp.pop %v1070
    %v1185 = vrcp.pop %v1071
    %v1186 = vrcp.pop %v1072
    %v1187 = vrcp.pop %v1073
    %v1188 = vrcp.pop %v1074
    %v1189 = vrcp.pop %v1075
    %v1190 = vrcp.pop %v1076
    %v1191 = vrcp.pop %v1077
    %v1192 = vrcp.pop %v1078
    %v1193 = vrcp.pop %v1079
    %v1194 = vrcp.pop %v1080
    %v1195 = vrcp.pop %v1081
    %v1196 = vrcp.pop %v1082
    %v1197 = vrcp.pop %v1083
    %v1198 = vrcp.pop %v1084
    %v1199 = vrcp.pop %v1085
    %v1200 = vrcp.pop %v1086
    %v1201 = vrcp.pop %v1087
    %v1202 = vrcp.pop %v1088
    %v1203 = vrcp.pop %v1089
    %v1204 = vrcp.pop %v1090
    %v1205 = vrcp.pop %v1091
    %v1206 = vrcp.pop %v1092
    %v1207 = vrcp.pop %v1093
    %v1208 = vrcp.pop %v1094
    %v1209 = vrcp.pop %v1095
    %v1210 = vrcp.pop %v1096
    %v1211 = vrcp.pop %v1097
    %v1212 = vrcp.pop %v1098
    %v1213 = vrcp.pop %v1099
    %v1214 = vrcp.pop %v1100
    %v1215 = vrcp.pop %v1101
    %v1216 = vrcp.pop %v1102
    %v1217 = vrcp.pop %v1103
    %v1218 = vrcp.pop %v1104
    %v1219 = vrcp.pop %v1105
    %v1220 = vrcp.pop %v1106
    %v1221 = vrcp.pop %v1107
    %v1222 = vrcp.pop %v1108
    %v1223 = vrcp.pop %v1109
    %v1224 = vrcp.pop %v1110
    %v1225 = vrcp.pop %v1111
    %v1226 = vrcp.pop %v1112
    %v1227 = vrcp.pop %v1113
    %v1228 = vrcp.pop %v1114
    %v1229 = vrcp.pop %v1115
    %v1230 = vmul.f32 %v1116, %v1173
    %v1231 = vmul.f32 %v1117, %v1174
    %v1232 = vmul.f32 %v1118, %v1175
    %v1233 = vmul.f32 %v1119, %v1176
    %v1234 = vmul.f32 %v1120, %v1177
    %v1235 = vmul.f32 %v1121, %v1178
    %v1236 = vmul.f32 %v1122, %v1179
    %v1237 = vmul.f32 %v1123, %v1180
    %v1238 = vmul.f32 %v1124, %v1181
    %v1239 = vmul.f32 %v1125, %v1182
    %v1240 = vmul.f32 %v1126, %v1183
    %v1241 = vmul.f32 %v1127, %v1184
    %v1242 = vmul.f32 %v1128, %v1185
    %v1243 = vmul.f32 %v1129, %v1186
    %v1244 = vmul.f32 %v1130, %v1187
    %v1245 = vmul.f32 %v1131, %v1188
    %v1246 = vmul.f32 %v1132, %v1189
    %v1247 = vmul.f32 %v1133, %v1190
    %v1248 = vmul.f32 %v1134, %v1191
    %v1249 = vmul.f32 %v1135, %v1192
    %v1250 = vmul.f32 %v1136, %v1193
    %v1251 = vmul.f32 %v1137, %v1194
    %v1252 = vmul.f32 %v1138, %v1195
    %v1253 = vmul.f32 %v1139, %v1196
    %v1254 = vmul.f32 %v1140, %v1197
    %v1255 = vmul.f32 %v1141, %v1198
    %v1256 = vmul.f32 %v1142, %v1199
    %v1257 = vmul.f32 %v1143, %v1200
    %v1258 = vmul.f32 %v1144, %v1201
    %v1259 = vmul.f32 %v1145, %v1202
    %v1260 = vmul.f32 %v1146, %v1203
    %v1261 = vmul.f32 %v1147, %v1204
    %v1262 = vmul.f32 %v1148, %v1205
    %v1263 = vmul.f32 %v1149, %v1206
    %v1264 = vmul.f32 %v1150, %v1207
    %v1265 = vmul.f32 %v1151, %v1208
    %v1266 = vmul.f32 %v1152, %v1209
    %v1267 = vmul.f32 %v1153, %v1210
    %v1268 = vmul.f32 %v1154, %v1211
    %v1269 = vmul.f32 %v1155, %v1212
    %v1270 = vmul.f32 %v1156, %v1213
    %v1271 = vmul.f32 %v1157, %v1214
    %v1272 = vmul.f32 %v1158, %v1215
    %v1273 = vmul.f32 %v1159, %v1216
    %v1274 = vmul.f32 %v1160, %v1217
    %v1275 = vmul.f32 %v1161, %v1218
    %v1276 = vmul.f32 %v1162, %v1219
    %v1277 = vmul.f32 %v1163, %v1220
    %v1278 = vmul.f32 %v1164, %v1221
    %v1279 = vmul.f32 %v1165, %v1222
    %v1280 = vmul.f32 %v1166, %v1223
    %v1281 = vmul.f32 %v1167, %v1224
    %v1282 = vmul.f32 %v1168, %v1225
    %v1283 = vmul.f32 %v1169, %v1226
    %v1284 = vmul.f32 %v1170, %v1227
    %v1285 = vmul.f32 %v1171, %v1228
    %v1286 = vmul.f32 %v1172, %v1229
    %v1287 = vadd.f32 %v1230, %v1231
    %v1288 = vadd.f32 %v1287, %v1232
    %v1289 = vadd.f32 %v1288, %v1233
    %v1290 = vadd.f32 %v1289, %v1234
    %v1291 = vadd.f32 %v1290, %v1235
    %v1292 = vadd.f32 %v1291, %v1236
    %v1293 = vadd.f32 %v1292, %v1237
    %v1294 = vadd.f32 %v1293, %v1238
    %v1295 = vadd.f32 %v1294, %v1239
    %v1296 = vadd.f32 %v1295, %v1240
    %v1297 = vadd.f32 %v1296, %v1241
    %v1298 = vadd.f32 %v1297, %v1242
    %v1299 = vadd.f32 %v1298, %v1243
    %v1300 = vadd.f32 %v1299, %v1244
    %v1301 = vadd.f32 %v1300, %v1245
    %v1302 = vadd.f32 %v1301, %v1246
    %v1303 = vadd.f32 %v1302, %v1247
    %v1304 = vadd.f32 %v1303, %v1248
    %v1305 = vadd.f32 %v1304, %v1249
    %v1306 = vadd.f32 %v1305, %v1250
    %v1307 = vadd.f32 %v1306, %v1251
    %v1308 = vadd.f32 %v1307, %v1252
    %v1309 = vadd.f32 %v1308, %v1253
    %v1310 = vadd.f32 %v1309, %v1254
    %v1311 = vadd.f32 %v1310, %v1255
    %v1312 = vadd.f32 %v1311, %v1256
    %v1313 = vadd.f32 %v1312, %v1257
    %v1314 = vadd.f32 %v1313, %v1258
    %v1315 = vadd.f32 %v1314, %v1259
    %v1316 = vadd.f32 %v1315, %v1260
    %v1317 = vadd.f32 %v1316, %v1261
    %v1318 = vadd.f32 %v1317, %v1262
    %v1319 = vadd.f32 %v1318, %v1263
    %v1320 = vadd.f32 %v1319, %v1264
    %v1321 = vadd.f32 %v1320, %v1265
    %v1322 = vadd.f32 %v1321, %v1266
    %v1323 = vadd.f32 %v1322, %v1267
    %v1324 = vadd.f32 %v1323, %v1268
    %v1325 = vadd.f32 %v1324, %v1269
    %v1326 = vadd.f32 %v1325, %v1270
    %v1327 = vadd.f32 %v1326, %v1271
    %v1328 = vadd.f32 %v1327, %v1272
    %v1329 = vadd.f32 %v1328, %v1273
    %v1330 = vadd.f32 %v1329, %v1274
    %v1331 = vadd.f32 %v1330, %v1275
    %v1332 = vadd.f32 %v1331, %v1276
    %v1333 = vadd.f32 %v1332, %v1277
    %v1334 = vadd.f32 %v1333, %v1278
    %v1335 = vadd.f32 %v1334, %v1279
    %v1336 = vadd.f32 %v1335, %v1280
    %v1337 = vadd.f32 %v1336, %v1281
    %v1338 = vadd.f32 %v1337, %v1282
    %v1339 = vadd.f32 %v1338, %v1283
    %v1340 = vadd.f32 %v1339, %v1284
    %v1341 = vadd.f32 %v1340, %v1285
    %vm1342 = vcmask 1041408
    %v1343 = vsel %vm1342, %v1286, 0.0
    %v1344 = vadd.f32 %v1341, %v1343
    %v1345 = vrot.slane %v1344, 4
    %v1346 = vadd.f32 %v1344, %v1345
    %v1347 = vrot.slane %v1346, 2
    %v1348 = vadd.f32 %v1346, %v1347
    %v1349 = vrot.slane %v1348, 1
    %v1350 = vadd.f32 %v1348, %v1349
    %v1351 = vmul.f32 %v1350, 0.0022222223
    %v1352 = vmul.f32 %v1230, %v1230
    %v1353 = vmul.f32 %v1231, %v1231
    %v1354 = vmul.f32 %v1232, %v1232
    %v1355 = vmul.f32 %v1233, %v1233
    %v1356 = vmul.f32 %v1234, %v1234
    %v1357 = vmul.f32 %v1235, %v1235
    %v1358 = vmul.f32 %v1236, %v1236
    %v1359 = vmul.f32 %v1237, %v1237
    %v1360 = vmul.f32 %v1238, %v1238
    %v1361 = vmul.f32 %v1239, %v1239
    %v1362 = vmul.f32 %v1240, %v1240
    %v1363 = vmul.f32 %v1241, %v1241
    %v1364 = vmul.f32 %v1242, %v1242
    %v1365 = vmul.f32 %v1243, %v1243
    %v1366 = vmul.f32 %v1244, %v1244
    %v1367 = vmul.f32 %v1245, %v1245
    %v1368 = vmul.f32 %v1246, %v1246
    %v1369 = vmul.f32 %v1247, %v1247
    %v1370 = vmul.f32 %v1248, %v1248
    %v1371 = vmul.f32 %v1249, %v1249
    %v1372 = vmul.f32 %v1250, %v1250
    %v1373 = vmul.f32 %v1251, %v1251
    %v1374 = vmul.f32 %v1252, %v1252
    %v1375 = vmul.f32 %v1253, %v1253
    %v1376 = vmul.f32 %v1254, %v1254
    %v1377 = vmul.f32 %v1255, %v1255
    %v1378 = vmul.f32 %v1256, %v1256
    %v1379 = vmul.f32 %v1257, %v1257
    %v1380 = vmul.f32 %v1258, %v1258
    %v1381 = vmul.f32 %v1259, %v1259
    %v1382 = vmul.f32 %v1260, %v1260
    %v1383 = vmul.f32 %v1261, %v1261
    %v1384 = vmul.f32 %v1262, %v1262
    %v1385 = vmul.f32 %v1263, %v1263
    %v1386 = vmul.f32 %v1264, %v1264
    %v1387 = vmul.f32 %v1265, %v1265
    %v1388 = vmul.f32 %v1266, %v1266
    %v1389 = vmul.f32 %v1267, %v1267
    %v1390 = vmul.f32 %v1268, %v1268
    %v1391 = vmul.f32 %v1269, %v1269
    %v1392 = vmul.f32 %v1270, %v1270
    %v1393 = vmul.f32 %v1271, %v1271
    %v1394 = vmul.f32 %v1272, %v1272
    %v1395 = vmul.f32 %v1273, %v1273
    %v1396 = vmul.f32 %v1274, %v1274
    %v1397 = vmul.f32 %v1275, %v1275
    %v1398 = vmul.f32 %v1276, %v1276
    %v1399 = vmul.f32 %v1277, %v1277
    %v1400 = vmul.f32 %v1278, %v1278
    %v1401 = vmul.f32 %v1279, %v1279
    %v1402 = vmul.f32 %v1280, %v1280
    %v1403 = vmul.f32 %v1281, %v1281
    %v1404 = vmul.f32 %v1282, %v1282
    %v1405 = vmul.f32 %v1283, %v1283
    %v1406 = vmul.f32 %v1284, %v1284
    %v1407 = vmul.f32 %v1285, %v1285
    %v1408 = vmul.f32 %v1286, %v1286
    %v1409 = vadd.f32 %v1352, %v1353
    %v1410 = vadd.f32 %v1409, %v1354
    %v1411 = vadd.f32 %v1410, %v1355
    %v1412 = vadd.f32 %v1411, %v1356
    %v1413 = vadd.f32 %v1412, %v1357
    %v1414 = vadd.f32 %v1413, %v1358
    %v1415 = vadd.f32 %v1414, %v1359
    %v1416 = vadd.f32 %v1415, %v1360
    %v1417 = vadd.f32 %v1416, %v1361
    %v1418 = vadd.f32 %v1417, %v1362
    %v1419 = vadd.f32 %v1418, %v1363
    %v1420 = vadd.f32 %v1419, %v1364
    %v1421 = vadd.f32 %v1420, %v1365
    %v1422 = vadd.f32 %v1421, %v1366
    %v1423 = vadd.f32 %v1422, %v1367
    %v1424 = vadd.f32 %v1423, %v1368
    %v1425 = vadd.f32 %v1424, %v1369
    %v1426 = vadd.f32 %v1425, %v1370
    %v1427 = vadd.f32 %v1426, %v1371
    %v1428 = vadd.f32 %v1427, %v1372
    %v1429 = vadd.f32 %v1428, %v1373
    %v1430 = vadd.f32 %v1429, %v1374
    %v1431 = vadd.f32 %v1430, %v1375
    %v1432 = vadd.f32 %v1431, %v1376
    %v1433 = vadd.f32 %v1432, %v1377
    %v1434 = vadd.f32 %v1433, %v1378
    %v1435 = vadd.f32 %v1434, %v1379
    %v1436 = vadd.f32 %v1435, %v1380
    %v1437 = vadd.f32 %v1436, %v1381
    %v1438 = vadd.f32 %v1437, %v1382
    %v1439 = vadd.f32 %v1438, %v1383
    %v1440 = vadd.f32 %v1439, %v1384
    %v1441 = vadd.f32 %v1440, %v1385
    %v1442 = vadd.f32 %v1441, %v1386
    %v1443 = vadd.f32 %v1442, %v1387
    %v1444 = vadd.f32 %v1443, %v1388
    %v1445 = vadd.f32 %v1444, %v1389
    %v1446 = vadd.f32 %v1445, %v1390
    %v1447 = vadd.f32 %v1446, %v1391
    %v1448 = vadd.f32 %v1447, %v1392
    %v1449 = vadd.f32 %v1448, %v1393
    %v1450 = vadd.f32 %v1449, %v1394
    %v1451 = vadd.f32 %v1450, %v1395
    %v1452 = vadd.f32 %v1451, %v1396
    %v1453 = vadd.f32 %v1452, %v1397
    %v1454 = vadd.f32 %v1453, %v1398
    %v1455 = vadd.f32 %v1454, %v1399
    %v1456 = vadd.f32 %v1455, %v1400
    %v1457 = vadd.f32 %v1456, %v1401
    %v1458 = vadd.f32 %v1457, %v1402
    %v1459 = vadd.f32 %v1458, %v1403
    %v1460 = vadd.f32 %v1459, %v1404
    %v1461 = vadd.f32 %v1460, %v1405
    %v1462 = vadd.f32 %v1461, %v1406
    %v1463 = vadd.f32 %v1462, %v1407
    %v1464 = vsel %vm1342, %v1408, 0.0
    %v1465 = vadd.f32 %v1463, %v1464
    %v1466 = vrot.slane %v1465, 4
    %v1467 = vadd.f32 %v1465, %v1466
    %v1468 = vrot.slane %v1467, 2
    %v1469 = vadd.f32 %v1467, %v1468
    %v1470 = vrot.slane %v1469, 1
    %v1471 = vadd.f32 %v1469, %v1470
    %v1472 = vmul.f32 %v1471, 0.0022222223
    %v1473 = vmul.f32 %v1351, %v1351
    %v1474 = vsub.f32 %v1472, %v1473
    %v1475 = vmax.f32 %v1474, 0.0
    %v1476 = vadd.f32 %v1475, 1e-05
    %v1477 = vrsqrt.pop %v1476
    %v1478 = vmul.f32 %v1477, %v1476
    %v1479 = vmul.f32 %v1478, %v1477
    %v1480 = vmul.f32 0.5, %v1479
    %v1481 = vsub.f32 1.5, %v1480
    %v1482 = vmul.f32 %v1477, %v1481
    %vm1483 = vweird.f32 %v1476
    %vm1484 = vweird.f32 %v1477
    %vm1485 = vmor %vm1483, %vm1484
    %v1486 = vsel %vm1485, %v1477, %v1482
    %v1487 = vld [vmem:[%s9] sm:$0x1]
    %v1488 = vmul.f32 %v1486, %v1487
    %v1489 = vld [vmem:[%s10] sm:$0x1]
    %v1490 = vmul.f32 %v1351, %v1488
    %v1491 = vsub.f32 %v1489, %v1490
    %v1492 = vperm.slane %v1488, 0
    %v1493 = vmul.f32 %v1230, %v1492
    %v1494 = vmul.f32 %v1231, %v1492
    %v1495 = vmul.f32 %v1232, %v1492
    %v1496 = vmul.f32 %v1233, %v1492
    %v1497 = vmul.f32 %v1234, %v1492
    %v1498 = vmul.f32 %v1235, %v1492
    %v1499 = vmul.f32 %v1236, %v1492
    %v1500 = vmul.f32 %v1237, %v1492
    %v1501 = vmul.f32 %v1238, %v1492
    %v1502 = vmul.f32 %v1239, %v1492
    %v1503 = vmul.f32 %v1240, %v1492
    %v1504 = vmul.f32 %v1241, %v1492
    %v1505 = vmul.f32 %v1242, %v1492
    %v1506 = vmul.f32 %v1243, %v1492
    %v1507 = vmul.f32 %v1244, %v1492
    %v1508 = vmul.f32 %v1245, %v1492
    %v1509 = vmul.f32 %v1246, %v1492
    %v1510 = vmul.f32 %v1247, %v1492
    %v1511 = vmul.f32 %v1248, %v1492
    %v1512 = vmul.f32 %v1249, %v1492
    %v1513 = vmul.f32 %v1250, %v1492
    %v1514 = vmul.f32 %v1251, %v1492
    %v1515 = vmul.f32 %v1252, %v1492
    %v1516 = vmul.f32 %v1253, %v1492
    %v1517 = vmul.f32 %v1254, %v1492
    %v1518 = vmul.f32 %v1255, %v1492
    %v1519 = vmul.f32 %v1256, %v1492
    %v1520 = vmul.f32 %v1257, %v1492
    %v1521 = vmul.f32 %v1258, %v1492
    %v1522 = vmul.f32 %v1259, %v1492
    %v1523 = vmul.f32 %v1260, %v1492
    %v1524 = vmul.f32 %v1261, %v1492
    %v1525 = vmul.f32 %v1262, %v1492
    %v1526 = vmul.f32 %v1263, %v1492
    %v1527 = vmul.f32 %v1264, %v1492
    %v1528 = vmul.f32 %v1265, %v1492
    %v1529 = vmul.f32 %v1266, %v1492
    %v1530 = vmul.f32 %v1267, %v1492
    %v1531 = vmul.f32 %v1268, %v1492
    %v1532 = vmul.f32 %v1269, %v1492
    %v1533 = vmul.f32 %v1270, %v1492
    %v1534 = vmul.f32 %v1271, %v1492
    %v1535 = vmul.f32 %v1272, %v1492
    %v1536 = vmul.f32 %v1273, %v1492
    %v1537 = vmul.f32 %v1274, %v1492
    %v1538 = vmul.f32 %v1275, %v1492
    %v1539 = vmul.f32 %v1276, %v1492
    %v1540 = vmul.f32 %v1277, %v1492
    %v1541 = vmul.f32 %v1278, %v1492
    %v1542 = vmul.f32 %v1279, %v1492
    %v1543 = vmul.f32 %v1280, %v1492
    %v1544 = vmul.f32 %v1281, %v1492
    %v1545 = vmul.f32 %v1282, %v1492
    %v1546 = vmul.f32 %v1283, %v1492
    %v1547 = vmul.f32 %v1284, %v1492
    %v1548 = vmul.f32 %v1285, %v1492
    %v1549 = vmul.f32 %v1286, %v1492
    %v1550 = vperm.slane %v1491, 0
    %v1551 = vadd.f32 %v1493, %v1550
    %v1552 = vadd.f32 %v1494, %v1550
    %v1553 = vadd.f32 %v1495, %v1550
    %v1554 = vadd.f32 %v1496, %v1550
    %v1555 = vadd.f32 %v1497, %v1550
    %v1556 = vadd.f32 %v1498, %v1550
    %v1557 = vadd.f32 %v1499, %v1550
    %v1558 = vadd.f32 %v1500, %v1550
    %v1559 = vadd.f32 %v1501, %v1550
    %v1560 = vadd.f32 %v1502, %v1550
    %v1561 = vadd.f32 %v1503, %v1550
    %v1562 = vadd.f32 %v1504, %v1550
    %v1563 = vadd.f32 %v1505, %v1550
    %v1564 = vadd.f32 %v1506, %v1550
    %v1565 = vadd.f32 %v1507, %v1550
    %v1566 = vadd.f32 %v1508, %v1550
    %v1567 = vadd.f32 %v1509, %v1550
    %v1568 = vadd.f32 %v1510, %v1550
    %v1569 = vadd.f32 %v1511, %v1550
    %v1570 = vadd.f32 %v1512, %v1550
    %v1571 = vadd.f32 %v1513, %v1550
    %v1572 = vadd.f32 %v1514, %v1550
    %v1573 = vadd.f32 %v1515, %v1550
    %v1574 = vadd.f32 %v1516, %v1550
    %v1575 = vadd.f32 %v1517, %v1550
    %v1576 = vadd.f32 %v1518, %v1550
    %v1577 = vadd.f32 %v1519, %v1550
    %v1578 = vadd.f32 %v1520, %v1550
    %v1579 = vadd.f32 %v1521, %v1550
    %v1580 = vadd.f32 %v1522, %v1550
    %v1581 = vadd.f32 %v1523, %v1550
    %v1582 = vadd.f32 %v1524, %v1550
    %v1583 = vadd.f32 %v1525, %v1550
    %v1584 = vadd.f32 %v1526, %v1550
    %v1585 = vadd.f32 %v1527, %v1550
    %v1586 = vadd.f32 %v1528, %v1550
    %v1587 = vadd.f32 %v1529, %v1550
    %v1588 = vadd.f32 %v1530, %v1550
    %v1589 = vadd.f32 %v1531, %v1550
    %v1590 = vadd.f32 %v1532, %v1550
    %v1591 = vadd.f32 %v1533, %v1550
    %v1592 = vadd.f32 %v1534, %v1550
    %v1593 = vadd.f32 %v1535, %v1550
    %v1594 = vadd.f32 %v1536, %v1550
    %v1595 = vadd.f32 %v1537, %v1550
    %v1596 = vadd.f32 %v1538, %v1550
    %v1597 = vadd.f32 %v1539, %v1550
    %v1598 = vadd.f32 %v1540, %v1550
    %v1599 = vadd.f32 %v1541, %v1550
    %v1600 = vadd.f32 %v1542, %v1550
    %v1601 = vadd.f32 %v1543, %v1550
    %v1602 = vadd.f32 %v1544, %v1550
    %v1603 = vadd.f32 %v1545, %v1550
    %v1604 = vadd.f32 %v1546, %v1550
    %v1605 = vadd.f32 %v1547, %v1550
    %v1606 = vadd.f32 %v1548, %v1550
    %v1607 = vadd.f32 %v1549, %v1550
    %v1608 = vld [vmem:[%s3] sm:$0xff]
    %v1609 = vld [vmem:[%s3 + $0x8] sm:$0xff]
    %v1610 = vld [vmem:[%s3 + $0x10] sm:$0xff]
    %v1611 = vld [vmem:[%s3 + $0x18] sm:$0xff]
    %v1612 = vld [vmem:[%s3 + $0x20] sm:$0xff]
    %v1613 = vld [vmem:[%s3 + $0x28] sm:$0xff]
    %v1614 = vld [vmem:[%s3 + $0x30] sm:$0xff]
    %v1615 = vld [vmem:[%s3 + $0x38] sm:$0xff]
    %v1616 = vld [vmem:[%s3 + $0x40] sm:$0xff]
    %v1617 = vld [vmem:[%s3 + $0x48] sm:$0xff]
    %v1618 = vld [vmem:[%s3 + $0x50] sm:$0xff]
    %v1619 = vld [vmem:[%s3 + $0x58] sm:$0xff]
    %v1620 = vld [vmem:[%s3 + $0x60] sm:$0xff]
    %v1621 = vld [vmem:[%s3 + $0x68] sm:$0xff]
    %v1622 = vld [vmem:[%s3 + $0x70] sm:$0xff]
    %v1623 = vld [vmem:[%s3 + $0x78] sm:$0xff]
    %v1624 = vld [vmem:[%s3 + $0x80] sm:$0xff]
    %v1625 = vld [vmem:[%s3 + $0x88] sm:$0xff]
    %v1626 = vld [vmem:[%s3 + $0x90] sm:$0xff]
    %v1627 = vld [vmem:[%s3 + $0x98] sm:$0xff]
    %v1628 = vld [vmem:[%s3 + $0xa0] sm:$0xff]
    %v1629 = vld [vmem:[%s3 + $0xa8] sm:$0xff]
    %v1630 = vld [vmem:[%s3 + $0xb0] sm:$0xff]
    %v1631 = vld [vmem:[%s3 + $0xb8] sm:$0xff]
    %v1632 = vld [vmem:[%s3 + $0xc0] sm:$0xff]
    %v1633 = vld [vmem:[%s3 + $0xc8] sm:$0xff]
    %v1634 = vld [vmem:[%s3 + $0xd0] sm:$0xff]
    %v1635 = vld [vmem:[%s3 + $0xd8] sm:$0xff]
    %v1636 = vld [vmem:[%s3 + $0xe0] sm:$0xff]
    %v1637 = vld [vmem:[%s3 + $0xe8] sm:$0xff]
    %v1638 = vld [vmem:[%s3 + $0xf0] sm:$0xff]
    %v1639 = vld [vmem:[%s3 + $0xf8] sm:$0xff]
    %v1640 = vld [vmem:[%s3 + $0x100] sm:$0xff]
    %v1641 = vld [vmem:[%s3 + $0x108] sm:$0xff]
    %v1642 = vld [vmem:[%s3 + $0x110] sm:$0xff]
    %v1643 = vld [vmem:[%s3 + $0x118] sm:$0xff]
    %v1644 = vld [vmem:[%s3 + $0x120] sm:$0xff]
    %v1645 = vld [vmem:[%s3 + $0x128] sm:$0xff]
    %v1646 = vld [vmem:[%s3 + $0x130] sm:$0xff]
    %v1647 = vld [vmem:[%s3 + $0x138] sm:$0xff]
    %v1648 = vld [vmem:[%s3 + $0x140] sm:$0xff]
    %v1649 = vld [vmem:[%s3 + $0x148] sm:$0xff]
    %v1650 = vld [vmem:[%s3 + $0x150] sm:$0xff]
    %v1651 = vld [vmem:[%s3 + $0x158] sm:$0xff]
    %v1652 = vld [vmem:[%s3 + $0x160] sm:$0xff]
    %v1653 = vld [vmem:[%s3 + $0x168] sm:$0xff]
    %v1654 = vld [vmem:[%s3 + $0x170] sm:$0xff]
    %v1655 = vld [vmem:[%s3 + $0x178] sm:$0xff]
    %v1656 = vld [vmem:[%s3 + $0x180] sm:$0x3]
    %v1657 = vld [vmem:[%s3 + $0x188] sm:$0x3]
    %v1658 = vld [vmem:[%s3 + $0x190] sm:$0x3]
    %v1659 = vld [vmem:[%s3 + $0x198] sm:$0x3]
    %vm1660 = vcmask 539648
    %v1662 = vsel %vm1660, %v1611, 0
    %v1665 = vsel %vm1660, %v1615, 0
    %v1668 = vsel %vm1660, %v1619, 0
    %v1671 = vsel %vm1660, %v1623, 0
    %v1674 = vsel %vm1660, %v1627, 0
    %v1677 = vsel %vm1660, %v1631, 0
    %v1680 = vsel %vm1660, %v1635, 0
    %v1683 = vsel %vm1660, %v1639, 0
    %v1686 = vsel %vm1660, %v1643, 0
    %v1689 = vsel %vm1660, %v1647, 0
    %v1692 = vsel %vm1660, %v1651, 0
    %v1695 = vsel %vm1660, %v1655, 0
    %v1698 = vsel %vm1660, %v1659, 0
    %v1701 = vsel %vm1342, %v1607, 0
    %1703 = vmatpush.msra.mxu0 %v1566
    %1704 = vmatpush.msra.mxu0 %v1565
    %1705 = vmatpush.msra.mxu0 %v1564
    %1706 = vmatpush.msra.mxu0 %v1563
    %1707 = vmatpush.msra.mxu0 %v1562
    %1708 = vmatpush.msra.mxu0 %v1561
    %1709 = vmatpush.msra.mxu0 %v1560
    %1710 = vmatpush.msra.mxu0 %v1559
    %1711 = vmatpush.msra.mxu0 %v1558
    %1712 = vmatpush.msra.mxu0 %v1557
    %1713 = vmatpush.msra.mxu0 %v1556
    %1714 = vmatpush.msra.mxu0 %v1555
    %1715 = vmatpush.msra.mxu0 %v1554
    %1716 = vmatpush.msra.mxu0 %v1553
    %1717 = vmatpush.msra.mxu0 %v1552
    %1718 = vmatpush.msra.mxu0 %v1551
    %1719 = vmatmul.f32.gmra.mxu0 %v1608
    %v1720 = vpop.f32.mrf.mxu0
    %v1721 = vadd.f32 0.0, %v1720
    %1722 = vmatmul.f32.gmra.mxu0 %v1612
    %v1723 = vpop.f32.mrf.mxu0
    %v1724 = vadd.f32 0.0, %v1723
    %1725 = vmatmul.f32.gmra.mxu0 %v1616
    %v1726 = vpop.f32.mrf.mxu0
    %v1727 = vadd.f32 0.0, %v1726
    %1728 = vmatmul.f32.gmra.mxu0 %v1620
    %v1729 = vpop.f32.mrf.mxu0
    %v1730 = vadd.f32 0.0, %v1729
    %1731 = vmatmul.f32.gmra.mxu0 %v1624
    %v1732 = vpop.f32.mrf.mxu0
    %v1733 = vadd.f32 0.0, %v1732
    %1734 = vmatmul.f32.gmra.mxu0 %v1628
    %v1735 = vpop.f32.mrf.mxu0
    %v1736 = vadd.f32 0.0, %v1735
    %1737 = vmatmul.f32.gmra.mxu0 %v1632
    %v1738 = vpop.f32.mrf.mxu0
    %v1739 = vadd.f32 0.0, %v1738
    %1740 = vmatmul.f32.gmra.mxu0 %v1636
    %v1741 = vpop.f32.mrf.mxu0
    %v1742 = vadd.f32 0.0, %v1741
    %1743 = vmatmul.f32.gmra.mxu0 %v1640
    %v1744 = vpop.f32.mrf.mxu0
    %v1745 = vadd.f32 0.0, %v1744
    %1746 = vmatmul.f32.gmra.mxu0 %v1644
    %v1747 = vpop.f32.mrf.mxu0
    %v1748 = vadd.f32 0.0, %v1747
    %1749 = vmatmul.f32.gmra.mxu0 %v1648
    %v1750 = vpop.f32.mrf.mxu0
    %v1751 = vadd.f32 0.0, %v1750
    %1752 = vmatmul.f32.gmra.mxu0 %v1652
    %v1753 = vpop.f32.mrf.mxu0
    %v1754 = vadd.f32 0.0, %v1753
    %1755 = vmatmul.f32.gmra.mxu0 %v1656
    %v1756 = vpop.f32.mrf.mxu0
    %v1757 = vadd.f32 0.0, %v1756
    %1758 = vdwg.mxu0
    %1759 = vmatpush.msra.mxu0 %v1582
    %1760 = vmatpush.msra.mxu0 %v1581
    %1761 = vmatpush.msra.mxu0 %v1580
    %1762 = vmatpush.msra.mxu0 %v1579
    %1763 = vmatpush.msra.mxu0 %v1578
    %1764 = vmatpush.msra.mxu0 %v1577
    %1765 = vmatpush.msra.mxu0 %v1576
    %1766 = vmatpush.msra.mxu0 %v1575
    %1767 = vmatpush.msra.mxu0 %v1574
    %1768 = vmatpush.msra.mxu0 %v1573
    %1769 = vmatpush.msra.mxu0 %v1572
    %1770 = vmatpush.msra.mxu0 %v1571
    %1771 = vmatpush.msra.mxu0 %v1570
    %1772 = vmatpush.msra.mxu0 %v1569
    %1773 = vmatpush.msra.mxu0 %v1568
    %1774 = vmatpush.msra.mxu0 %v1567
    %1775 = vmatmul.f32.gmra.mxu0 %v1609
    %v1776 = vpop.f32.mrf.mxu0
    %v1777 = vadd.f32 %v1721, %v1776
    %1778 = vmatmul.f32.gmra.mxu0 %v1613
    %v1779 = vpop.f32.mrf.mxu0
    %v1780 = vadd.f32 %v1724, %v1779
    %1781 = vmatmul.f32.gmra.mxu0 %v1617
    %v1782 = vpop.f32.mrf.mxu0
    %v1783 = vadd.f32 %v1727, %v1782
    %1784 = vmatmul.f32.gmra.mxu0 %v1621
    %v1785 = vpop.f32.mrf.mxu0
    %v1786 = vadd.f32 %v1730, %v1785
    %1787 = vmatmul.f32.gmra.mxu0 %v1625
    %v1788 = vpop.f32.mrf.mxu0
    %v1789 = vadd.f32 %v1733, %v1788
    %1790 = vmatmul.f32.gmra.mxu0 %v1629
    %v1791 = vpop.f32.mrf.mxu0
    %v1792 = vadd.f32 %v1736, %v1791
    %1793 = vmatmul.f32.gmra.mxu0 %v1633
    %v1794 = vpop.f32.mrf.mxu0
    %v1795 = vadd.f32 %v1739, %v1794
    %1796 = vmatmul.f32.gmra.mxu0 %v1637
    %v1797 = vpop.f32.mrf.mxu0
    %v1798 = vadd.f32 %v1742, %v1797
    %1799 = vmatmul.f32.gmra.mxu0 %v1641
    %v1800 = vpop.f32.mrf.mxu0
    %v1801 = vadd.f32 %v1745, %v1800
    %1802 = vmatmul.f32.gmra.mxu0 %v1645
    %v1803 = vpop.f32.mrf.mxu0
    %v1804 = vadd.f32 %v1748, %v1803
    %1805 = vmatmul.f32.gmra.mxu0 %v1649
    %v1806 = vpop.f32.mrf.mxu0
    %v1807 = vadd.f32 %v1751, %v1806
    %1808 = vmatmul.f32.gmra.mxu0 %v1653
    %v1809 = vpop.f32.mrf.mxu0
    %v1810 = vadd.f32 %v1754, %v1809
    %1811 = vmatmul.f32.gmra.mxu0 %v1657
    %v1812 = vpop.f32.mrf.mxu0
    %v1813 = vadd.f32 %v1757, %v1812
    %1814 = vdwg.mxu0
    %1815 = vmatpush.msra.mxu0 %v1598
    %1816 = vmatpush.msra.mxu0 %v1597
    %1817 = vmatpush.msra.mxu0 %v1596
    %1818 = vmatpush.msra.mxu0 %v1595
    %1819 = vmatpush.msra.mxu0 %v1594
    %1820 = vmatpush.msra.mxu0 %v1593
    %1821 = vmatpush.msra.mxu0 %v1592
    %1822 = vmatpush.msra.mxu0 %v1591
    %1823 = vmatpush.msra.mxu0 %v1590
    %1824 = vmatpush.msra.mxu0 %v1589
    %1825 = vmatpush.msra.mxu0 %v1588
    %1826 = vmatpush.msra.mxu0 %v1587
    %1827 = vmatpush.msra.mxu0 %v1586
    %1828 = vmatpush.msra.mxu0 %v1585
    %1829 = vmatpush.msra.mxu0 %v1584
    %1830 = vmatpush.msra.mxu0 %v1583
    %1831 = vmatmul.f32.gmra.mxu0 %v1610
    %v1832 = vpop.f32.mrf.mxu0
    %v1833 = vadd.f32 %v1777, %v1832
    %1834 = vmatmul.f32.gmra.mxu0 %v1614
    %v1835 = vpop.f32.mrf.mxu0
    %v1836 = vadd.f32 %v1780, %v1835
    %1837 = vmatmul.f32.gmra.mxu0 %v1618
    %v1838 = vpop.f32.mrf.mxu0
    %v1839 = vadd.f32 %v1783, %v1838
    %1840 = vmatmul.f32.gmra.mxu0 %v1622
    %v1841 = vpop.f32.mrf.mxu0
    %v1842 = vadd.f32 %v1786, %v1841
    %1843 = vmatmul.f32.gmra.mxu0 %v1626
    %v1844 = vpop.f32.mrf.mxu0
    %v1845 = vadd.f32 %v1789, %v1844
    %1846 = vmatmul.f32.gmra.mxu0 %v1630
    %v1847 = vpop.f32.mrf.mxu0
    %v1848 = vadd.f32 %v1792, %v1847
    %1849 = vmatmul.f32.gmra.mxu0 %v1634
    %v1850 = vpop.f32.mrf.mxu0
    %v1851 = vadd.f32 %v1795, %v1850
    %1852 = vmatmul.f32.gmra.mxu0 %v1638
    %v1853 = vpop.f32.mrf.mxu0
    %v1854 = vadd.f32 %v1798, %v1853
    %1855 = vmatmul.f32.gmra.mxu0 %v1642
    %v1856 = vpop.f32.mrf.mxu0
    %v1857 = vadd.f32 %v1801, %v1856
    %1858 = vmatmul.f32.gmra.mxu0 %v1646
    %v1859 = vpop.f32.mrf.mxu0
    %v1860 = vadd.f32 %v1804, %v1859
    %1861 = vmatmul.f32.gmra.mxu0 %v1650
    %v1862 = vpop.f32.mrf.mxu0
    %v1863 = vadd.f32 %v1807, %v1862
    %1864 = vmatmul.f32.gmra.mxu0 %v1654
    %v1865 = vpop.f32.mrf.mxu0
    %v1866 = vadd.f32 %v1810, %v1865
    %1867 = vmatmul.f32.gmra.mxu0 %v1658
    %v1868 = vpop.f32.mrf.mxu0
    %v1869 = vadd.f32 %v1813, %v1868
    %1870 = vdwg.mxu0
    %1871 = vmatpush.msra.mxu0 0.0
    %1872 = vmatpush.msra.mxu0 0.0
    %1873 = vmatpush.msra.mxu0 0.0
    %1874 = vmatpush.msra.mxu0 0.0
    %1875 = vmatpush.msra.mxu0 0.0
    %1876 = vmatpush.msra.mxu0 0.0
    %1877 = vmatpush.msra.mxu0 0.0
    %1878 = vmatpush.msra.mxu0 %v1701
    %1879 = vmatpush.msra.mxu0 %v1606
    %1880 = vmatpush.msra.mxu0 %v1605
    %1881 = vmatpush.msra.mxu0 %v1604
    %1882 = vmatpush.msra.mxu0 %v1603
    %1883 = vmatpush.msra.mxu0 %v1602
    %1884 = vmatpush.msra.mxu0 %v1601
    %1885 = vmatpush.msra.mxu0 %v1600
    %1886 = vmatpush.msra.mxu0 %v1599
    %1887 = vmatmul.f32.gmra.mxu0 %v1662
    %v1888 = vpop.f32.mrf.mxu0
    %v1889 = vadd.f32 %v1833, %v1888
    %1890 = vmatmul.f32.gmra.mxu0 %v1665
    %v1891 = vpop.f32.mrf.mxu0
    %v1892 = vadd.f32 %v1836, %v1891
    %1893 = vmatmul.f32.gmra.mxu0 %v1668
    %v1894 = vpop.f32.mrf.mxu0
    %v1895 = vadd.f32 %v1839, %v1894
    %1896 = vmatmul.f32.gmra.mxu0 %v1671
    %v1897 = vpop.f32.mrf.mxu0
    %v1898 = vadd.f32 %v1842, %v1897
    %1899 = vmatmul.f32.gmra.mxu0 %v1674
    %v1900 = vpop.f32.mrf.mxu0
    %v1901 = vadd.f32 %v1845, %v1900
    %1902 = vmatmul.f32.gmra.mxu0 %v1677
    %v1903 = vpop.f32.mrf.mxu0
    %v1904 = vadd.f32 %v1848, %v1903
    %1905 = vmatmul.f32.gmra.mxu0 %v1680
    %v1906 = vpop.f32.mrf.mxu0
    %v1907 = vadd.f32 %v1851, %v1906
    %1908 = vmatmul.f32.gmra.mxu0 %v1683
    %v1909 = vpop.f32.mrf.mxu0
    %v1910 = vadd.f32 %v1854, %v1909
    %1911 = vmatmul.f32.gmra.mxu0 %v1686
    %v1912 = vpop.f32.mrf.mxu0
    %v1913 = vadd.f32 %v1857, %v1912
    %1914 = vmatmul.f32.gmra.mxu0 %v1689
    %v1915 = vpop.f32.mrf.mxu0
    %v1916 = vadd.f32 %v1860, %v1915
    %1917 = vmatmul.f32.gmra.mxu0 %v1692
    %v1918 = vpop.f32.mrf.mxu0
    %v1919 = vadd.f32 %v1863, %v1918
    %1920 = vmatmul.f32.gmra.mxu0 %v1695
    %v1921 = vpop.f32.mrf.mxu0
    %v1922 = vadd.f32 %v1866, %v1921
    %1923 = vmatmul.f32.gmra.mxu0 %v1698
    %v1924 = vpop.f32.mrf.mxu0
    %v1925 = vadd.f32 %v1869, %v1924
    %1926 = vdwg.mxu0
    %v1927 = vld [vmem:[%s2] sm:$0xff]
    %v1928 = vld [vmem:[%s2 + $0x8] sm:$0xff]
    %v1929 = vld [vmem:[%s2 + $0x10] sm:$0xff]
    %v1930 = vld [vmem:[%s2 + $0x18] sm:$0xff]
    %v1931 = vld [vmem:[%s2 + $0x20] sm:$0xff]
    %v1932 = vld [vmem:[%s2 + $0x28] sm:$0xff]
    %v1933 = vld [vmem:[%s2 + $0x30] sm:$0xff]
    %v1934 = vld [vmem:[%s2 + $0x38] sm:$0xff]
    %v1935 = vld [vmem:[%s2 + $0x40] sm:$0xff]
    %v1936 = vld [vmem:[%s2 + $0x48] sm:$0xff]
    %v1937 = vld [vmem:[%s2 + $0x50] sm:$0xff]
    %v1938 = vld [vmem:[%s2 + $0x58] sm:$0xff]
    %v1939 = vld [vmem:[%s2 + $0x60] sm:$0xff]
    %v1940 = vld [vmem:[%s2 + $0x68] sm:$0xff]
    %v1941 = vld [vmem:[%s2 + $0x70] sm:$0xff]
    %v1942 = vld [vmem:[%s2 + $0x78] sm:$0xff]
    %s1943 = scalar_lea.vmem %s3, 416
    %v1944 = vld [vmem:[%s1943] sm:$0xff]
    %v1945 = vld [vmem:[%s1943 + $0x8] sm:$0xff]
    %v1946 = vld [vmem:[%s1943 + $0x10] sm:$0xff]
    %v1947 = vld [vmem:[%s1943 + $0x18] sm:$0xff]
    %v1948 = vld [vmem:[%s1943 + $0x20] sm:$0xff]
    %v1949 = vld [vmem:[%s1943 + $0x28] sm:$0xff]
    %v1950 = vld [vmem:[%s1943 + $0x30] sm:$0xff]
    %v1951 = vld [vmem:[%s1943 + $0x38] sm:$0xff]
    %v1952 = vld [vmem:[%s1943 + $0x40] sm:$0xff]
    %v1953 = vld [vmem:[%s1943 + $0x48] sm:$0xff]
    %v1954 = vld [vmem:[%s1943 + $0x50] sm:$0xff]
    %v1955 = vld [vmem:[%s1943 + $0x58] sm:$0xff]
    %v1956 = vld [vmem:[%s1943 + $0x60] sm:$0xff]
    %v1957 = vld [vmem:[%s1943 + $0x68] sm:$0xff]
    %v1958 = vld [vmem:[%s1943 + $0x70] sm:$0xff]
    %v1959 = vld [vmem:[%s1943 + $0x78] sm:$0xff]
    %v1960 = vld [vmem:[%s1943 + $0x80] sm:$0xff]
    %v1961 = vld [vmem:[%s1943 + $0x88] sm:$0xff]
    %v1962 = vld [vmem:[%s1943 + $0x90] sm:$0xff]
    %v1963 = vld [vmem:[%s1943 + $0x98] sm:$0xff]
    %v1964 = vld [vmem:[%s1943 + $0xa0] sm:$0xff]
    %v1965 = vld [vmem:[%s1943 + $0xa8] sm:$0xff]
    %v1966 = vld [vmem:[%s1943 + $0xb0] sm:$0xff]
    %v1967 = vld [vmem:[%s1943 + $0xb8] sm:$0xff]
    %v1968 = vld [vmem:[%s1943 + $0xc0] sm:$0xff]
    %v1969 = vld [vmem:[%s1943 + $0xc8] sm:$0xff]
    %v1970 = vld [vmem:[%s1943 + $0xd0] sm:$0xff]
    %v1971 = vld [vmem:[%s1943 + $0xd8] sm:$0xff]
    %v1972 = vld [vmem:[%s1943 + $0xe0] sm:$0xff]
    %v1973 = vld [vmem:[%s1943 + $0xe8] sm:$0xff]
    %v1974 = vld [vmem:[%s1943 + $0xf0] sm:$0xff]
    %v1975 = vld [vmem:[%s1943 + $0xf8] sm:$0xff]
    %v1976 = vld [vmem:[%s1943 + $0x100] sm:$0xff]
    %v1977 = vld [vmem:[%s1943 + $0x108] sm:$0xff]
    %v1978 = vld [vmem:[%s1943 + $0x110] sm:$0xff]
    %v1979 = vld [vmem:[%s1943 + $0x118] sm:$0xff]
    %v1980 = vld [vmem:[%s1943 + $0x120] sm:$0xff]
    %v1981 = vld [vmem:[%s1943 + $0x128] sm:$0xff]
    %v1982 = vld [vmem:[%s1943 + $0x130] sm:$0xff]
    %v1983 = vld [vmem:[%s1943 + $0x138] sm:$0xff]
    %v1984 = vld [vmem:[%s1943 + $0x140] sm:$0xff]
    %v1985 = vld [vmem:[%s1943 + $0x148] sm:$0xff]
    %v1986 = vld [vmem:[%s1943 + $0x150] sm:$0xff]
    %v1987 = vld [vmem:[%s1943 + $0x158] sm:$0xff]
    %v1988 = vld [vmem:[%s1943 + $0x160] sm:$0xff]
    %v1989 = vld [vmem:[%s1943 + $0x168] sm:$0xff]
    %v1990 = vld [vmem:[%s1943 + $0x170] sm:$0xff]
    %v1991 = vld [vmem:[%s1943 + $0x178] sm:$0xff]
    %v1992 = vld [vmem:[%s1943 + $0x180] sm:$0x3]
    %v1993 = vld [vmem:[%s1943 + $0x188] sm:$0x3]
    %v1994 = vld [vmem:[%s1943 + $0x190] sm:$0x3]
    %v1995 = vld [vmem:[%s1943 + $0x198] sm:$0x3]
    %v1997 = vsel %vm1660, %v1947, 0
    %v2000 = vsel %vm1660, %v1951, 0
    %v2003 = vsel %vm1660, %v1955, 0
    %v2006 = vsel %vm1660, %v1959, 0
    %v2009 = vsel %vm1660, %v1963, 0
    %v2012 = vsel %vm1660, %v1967, 0
    %v2015 = vsel %vm1660, %v1971, 0
    %v2018 = vsel %vm1660, %v1975, 0
    %v2021 = vsel %vm1660, %v1979, 0
    %v2024 = vsel %vm1660, %v1983, 0
    %v2027 = vsel %vm1660, %v1987, 0
    %v2030 = vsel %vm1660, %v1991, 0
    %v2033 = vsel %vm1660, %v1995, 0
    %2035 = vmatpush.msra.mxu0 %v1566
    %2036 = vmatpush.msra.mxu0 %v1565
    %2037 = vmatpush.msra.mxu0 %v1564
    %2038 = vmatpush.msra.mxu0 %v1563
    %2039 = vmatpush.msra.mxu0 %v1562
    %2040 = vmatpush.msra.mxu0 %v1561
    %2041 = vmatpush.msra.mxu0 %v1560
    %2042 = vmatpush.msra.mxu0 %v1559
    %2043 = vmatpush.msra.mxu0 %v1558
    %2044 = vmatpush.msra.mxu0 %v1557
    %2045 = vmatpush.msra.mxu0 %v1556
    %2046 = vmatpush.msra.mxu0 %v1555
    %2047 = vmatpush.msra.mxu0 %v1554
    %2048 = vmatpush.msra.mxu0 %v1553
    %2049 = vmatpush.msra.mxu0 %v1552
    %2050 = vmatpush.msra.mxu0 %v1551
    %2051 = vmatmul.f32.gmra.mxu0 %v1944
    %v2052 = vpop.f32.mrf.mxu0
    %v2053 = vadd.f32 0.0, %v2052
    %2054 = vmatmul.f32.gmra.mxu0 %v1948
    %v2055 = vpop.f32.mrf.mxu0
    %v2056 = vadd.f32 0.0, %v2055
    %2057 = vmatmul.f32.gmra.mxu0 %v1952
    %v2058 = vpop.f32.mrf.mxu0
    %v2059 = vadd.f32 0.0, %v2058
    %2060 = vmatmul.f32.gmra.mxu0 %v1956
    %v2061 = vpop.f32.mrf.mxu0
    %v2062 = vadd.f32 0.0, %v2061
    %2063 = vmatmul.f32.gmra.mxu0 %v1960
    %v2064 = vpop.f32.mrf.mxu0
    %v2065 = vadd.f32 0.0, %v2064
    %2066 = vmatmul.f32.gmra.mxu0 %v1964
    %v2067 = vpop.f32.mrf.mxu0
    %v2068 = vadd.f32 0.0, %v2067
    %2069 = vmatmul.f32.gmra.mxu0 %v1968
    %v2070 = vpop.f32.mrf.mxu0
    %v2071 = vadd.f32 0.0, %v2070
    %2072 = vmatmul.f32.gmra.mxu0 %v1972
    %v2073 = vpop.f32.mrf.mxu0
    %v2074 = vadd.f32 0.0, %v2073
    %2075 = vmatmul.f32.gmra.mxu0 %v1976
    %v2076 = vpop.f32.mrf.mxu0
    %v2077 = vadd.f32 0.0, %v2076
    %2078 = vmatmul.f32.gmra.mxu0 %v1980
    %v2079 = vpop.f32.mrf.mxu0
    %v2080 = vadd.f32 0.0, %v2079
    %2081 = vmatmul.f32.gmra.mxu0 %v1984
    %v2082 = vpop.f32.mrf.mxu0
    %v2083 = vadd.f32 0.0, %v2082
    %2084 = vmatmul.f32.gmra.mxu0 %v1988
    %v2085 = vpop.f32.mrf.mxu0
    %v2086 = vadd.f32 0.0, %v2085
    %2087 = vmatmul.f32.gmra.mxu0 %v1992
    %v2088 = vpop.f32.mrf.mxu0
    %v2089 = vadd.f32 0.0, %v2088
    %2090 = vdwg.mxu0
    %2091 = vmatpush.msra.mxu0 %v1582
    %2092 = vmatpush.msra.mxu0 %v1581
    %2093 = vmatpush.msra.mxu0 %v1580
    %2094 = vmatpush.msra.mxu0 %v1579
    %2095 = vmatpush.msra.mxu0 %v1578
    %2096 = vmatpush.msra.mxu0 %v1577
    %2097 = vmatpush.msra.mxu0 %v1576
    %2098 = vmatpush.msra.mxu0 %v1575
    %2099 = vmatpush.msra.mxu0 %v1574
    %2100 = vmatpush.msra.mxu0 %v1573
    %2101 = vmatpush.msra.mxu0 %v1572
    %2102 = vmatpush.msra.mxu0 %v1571
    %2103 = vmatpush.msra.mxu0 %v1570
    %2104 = vmatpush.msra.mxu0 %v1569
    %2105 = vmatpush.msra.mxu0 %v1568
    %2106 = vmatpush.msra.mxu0 %v1567
    %2107 = vmatmul.f32.gmra.mxu0 %v1945
    %v2108 = vpop.f32.mrf.mxu0
    %v2109 = vadd.f32 %v2053, %v2108
    %2110 = vmatmul.f32.gmra.mxu0 %v1949
    %v2111 = vpop.f32.mrf.mxu0
    %v2112 = vadd.f32 %v2056, %v2111
    %2113 = vmatmul.f32.gmra.mxu0 %v1953
    %v2114 = vpop.f32.mrf.mxu0
    %v2115 = vadd.f32 %v2059, %v2114
    %2116 = vmatmul.f32.gmra.mxu0 %v1957
    %v2117 = vpop.f32.mrf.mxu0
    %v2118 = vadd.f32 %v2062, %v2117
    %2119 = vmatmul.f32.gmra.mxu0 %v1961
    %v2120 = vpop.f32.mrf.mxu0
    %v2121 = vadd.f32 %v2065, %v2120
    %2122 = vmatmul.f32.gmra.mxu0 %v1965
    %v2123 = vpop.f32.mrf.mxu0
    %v2124 = vadd.f32 %v2068, %v2123
    %2125 = vmatmul.f32.gmra.mxu0 %v1969
    %v2126 = vpop.f32.mrf.mxu0
    %v2127 = vadd.f32 %v2071, %v2126
    %2128 = vmatmul.f32.gmra.mxu0 %v1973
    %v2129 = vpop.f32.mrf.mxu0
    %v2130 = vadd.f32 %v2074, %v2129
    %2131 = vmatmul.f32.gmra.mxu0 %v1977
    %v2132 = vpop.f32.mrf.mxu0
    %v2133 = vadd.f32 %v2077, %v2132
    %2134 = vmatmul.f32.gmra.mxu0 %v1981
    %v2135 = vpop.f32.mrf.mxu0
    %v2136 = vadd.f32 %v2080, %v2135
    %2137 = vmatmul.f32.gmra.mxu0 %v1985
    %v2138 = vpop.f32.mrf.mxu0
    %v2139 = vadd.f32 %v2083, %v2138
    %2140 = vmatmul.f32.gmra.mxu0 %v1989
    %v2141 = vpop.f32.mrf.mxu0
    %v2142 = vadd.f32 %v2086, %v2141
    %2143 = vmatmul.f32.gmra.mxu0 %v1993
    %v2144 = vpop.f32.mrf.mxu0
    %v2145 = vadd.f32 %v2089, %v2144
    %2146 = vdwg.mxu0
    %2147 = vmatpush.msra.mxu0 %v1598
    %2148 = vmatpush.msra.mxu0 %v1597
    %2149 = vmatpush.msra.mxu0 %v1596
    %2150 = vmatpush.msra.mxu0 %v1595
    %2151 = vmatpush.msra.mxu0 %v1594
    %2152 = vmatpush.msra.mxu0 %v1593
    %2153 = vmatpush.msra.mxu0 %v1592
    %2154 = vmatpush.msra.mxu0 %v1591
    %2155 = vmatpush.msra.mxu0 %v1590
    %2156 = vmatpush.msra.mxu0 %v1589
    %2157 = vmatpush.msra.mxu0 %v1588
    %2158 = vmatpush.msra.mxu0 %v1587
    %2159 = vmatpush.msra.mxu0 %v1586
    %2160 = vmatpush.msra.mxu0 %v1585
    %2161 = vmatpush.msra.mxu0 %v1584
    %2162 = vmatpush.msra.mxu0 %v1583
    %2163 = vmatmul.f32.gmra.mxu0 %v1946
    %v2164 = vpop.f32.mrf.mxu0
    %v2165 = vadd.f32 %v2109, %v2164
    %2166 = vmatmul.f32.gmra.mxu0 %v1950
    %v2167 = vpop.f32.mrf.mxu0
    %v2168 = vadd.f32 %v2112, %v2167
    %2169 = vmatmul.f32.gmra.mxu0 %v1954
    %v2170 = vpop.f32.mrf.mxu0
    %v2171 = vadd.f32 %v2115, %v2170
    %2172 = vmatmul.f32.gmra.mxu0 %v1958
    %v2173 = vpop.f32.mrf.mxu0
    %v2174 = vadd.f32 %v2118, %v2173
    %2175 = vmatmul.f32.gmra.mxu0 %v1962
    %v2176 = vpop.f32.mrf.mxu0
    %v2177 = vadd.f32 %v2121, %v2176
    %2178 = vmatmul.f32.gmra.mxu0 %v1966
    %v2179 = vpop.f32.mrf.mxu0
    %v2180 = vadd.f32 %v2124, %v2179
    %2181 = vmatmul.f32.gmra.mxu0 %v1970
    %v2182 = vpop.f32.mrf.mxu0
    %v2183 = vadd.f32 %v2127, %v2182
    %2184 = vmatmul.f32.gmra.mxu0 %v1974
    %v2185 = vpop.f32.mrf.mxu0
    %v2186 = vadd.f32 %v2130, %v2185
    %2187 = vmatmul.f32.gmra.mxu0 %v1978
    %v2188 = vpop.f32.mrf.mxu0
    %v2189 = vadd.f32 %v2133, %v2188
    %2190 = vmatmul.f32.gmra.mxu0 %v1982
    %v2191 = vpop.f32.mrf.mxu0
    %v2192 = vadd.f32 %v2136, %v2191
    %2193 = vmatmul.f32.gmra.mxu0 %v1986
    %v2194 = vpop.f32.mrf.mxu0
    %v2195 = vadd.f32 %v2139, %v2194
    %2196 = vmatmul.f32.gmra.mxu0 %v1990
    %v2197 = vpop.f32.mrf.mxu0
    %v2198 = vadd.f32 %v2142, %v2197
    %2199 = vmatmul.f32.gmra.mxu0 %v1994
    %v2200 = vpop.f32.mrf.mxu0
    %v2201 = vadd.f32 %v2145, %v2200
    %2202 = vdwg.mxu0
    %2203 = vmatpush.msra.mxu0 0.0
    %2204 = vmatpush.msra.mxu0 0.0
    %2205 = vmatpush.msra.mxu0 0.0
    %2206 = vmatpush.msra.mxu0 0.0
    %2207 = vmatpush.msra.mxu0 0.0
    %2208 = vmatpush.msra.mxu0 0.0
    %2209 = vmatpush.msra.mxu0 0.0
    %2210 = vmatpush.msra.mxu0 %v1701
    %2211 = vmatpush.msra.mxu0 %v1606
    %2212 = vmatpush.msra.mxu0 %v1605
    %2213 = vmatpush.msra.mxu0 %v1604
    %2214 = vmatpush.msra.mxu0 %v1603
    %2215 = vmatpush.msra.mxu0 %v1602
    %2216 = vmatpush.msra.mxu0 %v1601
    %2217 = vmatpush.msra.mxu0 %v1600
    %2218 = vmatpush.msra.mxu0 %v1599
    %2219 = vmatmul.f32.gmra.mxu0 %v1997
    %v2220 = vpop.f32.mrf.mxu0
    %v2221 = vadd.f32 %v2165, %v2220
    %2222 = vmatmul.f32.gmra.mxu0 %v2000
    %v2223 = vpop.f32.mrf.mxu0
    %v2224 = vadd.f32 %v2168, %v2223
    %2225 = vmatmul.f32.gmra.mxu0 %v2003
    %v2226 = vpop.f32.mrf.mxu0
    %v2227 = vadd.f32 %v2171, %v2226
    %2228 = vmatmul.f32.gmra.mxu0 %v2006
    %v2229 = vpop.f32.mrf.mxu0
    %v2230 = vadd.f32 %v2174, %v2229
    %2231 = vmatmul.f32.gmra.mxu0 %v2009
    %v2232 = vpop.f32.mrf.mxu0
    %v2233 = vadd.f32 %v2177, %v2232
    %2234 = vmatmul.f32.gmra.mxu0 %v2012
    %v2235 = vpop.f32.mrf.mxu0
    %v2236 = vadd.f32 %v2180, %v2235
    %2237 = vmatmul.f32.gmra.mxu0 %v2015
    %v2238 = vpop.f32.mrf.mxu0
    %v2239 = vadd.f32 %v2183, %v2238
    %2240 = vmatmul.f32.gmra.mxu0 %v2018
    %v2241 = vpop.f32.mrf.mxu0
    %v2242 = vadd.f32 %v2186, %v2241
    %2243 = vmatmul.f32.gmra.mxu0 %v2021
    %v2244 = vpop.f32.mrf.mxu0
    %v2245 = vadd.f32 %v2189, %v2244
    %2246 = vmatmul.f32.gmra.mxu0 %v2024
    %v2247 = vpop.f32.mrf.mxu0
    %v2248 = vadd.f32 %v2192, %v2247
    %2249 = vmatmul.f32.gmra.mxu0 %v2027
    %v2250 = vpop.f32.mrf.mxu0
    %v2251 = vadd.f32 %v2195, %v2250
    %2252 = vmatmul.f32.gmra.mxu0 %v2030
    %v2253 = vpop.f32.mrf.mxu0
    %v2254 = vadd.f32 %v2198, %v2253
    %2255 = vmatmul.f32.gmra.mxu0 %v2033
    %v2256 = vpop.f32.mrf.mxu0
    %v2257 = vadd.f32 %v2201, %v2256
    %2258 = vdwg.mxu0
    %s2259 = scalar_lea.vmem %s2, 128
    %v2260 = vld [vmem:[%s2259] sm:$0xff]
    %v2261 = vld [vmem:[%s2259 + $0x8] sm:$0xff]
    %v2262 = vld [vmem:[%s2259 + $0x10] sm:$0xff]
    %v2263 = vld [vmem:[%s2259 + $0x18] sm:$0xff]
    %v2264 = vld [vmem:[%s2259 + $0x20] sm:$0xff]
    %v2265 = vld [vmem:[%s2259 + $0x28] sm:$0xff]
    %v2266 = vld [vmem:[%s2259 + $0x30] sm:$0xff]
    %v2267 = vld [vmem:[%s2259 + $0x38] sm:$0xff]
    %v2268 = vld [vmem:[%s2259 + $0x40] sm:$0xff]
    %v2269 = vld [vmem:[%s2259 + $0x48] sm:$0xff]
    %v2270 = vld [vmem:[%s2259 + $0x50] sm:$0xff]
    %v2271 = vld [vmem:[%s2259 + $0x58] sm:$0xff]
    %v2272 = vld [vmem:[%s2259 + $0x60] sm:$0xff]
    %v2273 = vld [vmem:[%s2259 + $0x68] sm:$0xff]
    %v2274 = vld [vmem:[%s2259 + $0x70] sm:$0xff]
    %v2275 = vld [vmem:[%s2259 + $0x78] sm:$0xff]
    %2276 = vmatpush.msra.mxu0 %v2275
    %2277 = vmatpush.msra.mxu0 %v2274
    %2278 = vmatpush.msra.mxu0 %v2273
    %2279 = vmatpush.msra.mxu0 %v2272
    %2280 = vmatpush.msra.mxu0 %v2271
    %2281 = vmatpush.msra.mxu0 %v2270
    %2282 = vmatpush.msra.mxu0 %v2269
    %2283 = vmatpush.msra.mxu0 %v2268
    %2284 = vmatpush.msra.mxu0 %v2267
    %2285 = vmatpush.msra.mxu0 %v2266
    %2286 = vmatpush.msra.mxu0 %v2265
    %2287 = vmatpush.msra.mxu0 %v2264
    %2288 = vmatpush.msra.mxu0 %v2263
    %2289 = vmatpush.msra.mxu0 %v2262
    %2290 = vmatpush.msra.mxu0 %v2261
    %2291 = vmatpush.msra.mxu0 %v2260
    %2292 = vmatmul.f32.gmra.mxu0 %v2221
    %v2293 = vpop.f32.mrf.mxu0
    %v2294 = vadd.f32 0.0, %v2293
    %2295 = vmatmul.f32.gmra.mxu0 %v2224
    %v2296 = vpop.f32.mrf.mxu0
    %v2297 = vadd.f32 0.0, %v2296
    %2298 = vmatmul.f32.gmra.mxu0 %v2227
    %v2299 = vpop.f32.mrf.mxu0
    %v2300 = vadd.f32 0.0, %v2299
    %2301 = vmatmul.f32.gmra.mxu0 %v2230
    %v2302 = vpop.f32.mrf.mxu0
    %v2303 = vadd.f32 0.0, %v2302
    %2304 = vmatmul.f32.gmra.mxu0 %v2233
    %v2305 = vpop.f32.mrf.mxu0
    %v2306 = vadd.f32 0.0, %v2305
    %2307 = vmatmul.f32.gmra.mxu0 %v2236
    %v2308 = vpop.f32.mrf.mxu0
    %v2309 = vadd.f32 0.0, %v2308
    %2310 = vmatmul.f32.gmra.mxu0 %v2239
    %v2311 = vpop.f32.mrf.mxu0
    %v2312 = vadd.f32 0.0, %v2311
    %2313 = vmatmul.f32.gmra.mxu0 %v2242
    %v2314 = vpop.f32.mrf.mxu0
    %v2315 = vadd.f32 0.0, %v2314
    %2316 = vmatmul.f32.gmra.mxu0 %v2245
    %v2317 = vpop.f32.mrf.mxu0
    %v2318 = vadd.f32 0.0, %v2317
    %2319 = vmatmul.f32.gmra.mxu0 %v2248
    %v2320 = vpop.f32.mrf.mxu0
    %v2321 = vadd.f32 0.0, %v2320
    %2322 = vmatmul.f32.gmra.mxu0 %v2251
    %v2323 = vpop.f32.mrf.mxu0
    %v2324 = vadd.f32 0.0, %v2323
    %2325 = vmatmul.f32.gmra.mxu0 %v2254
    %v2326 = vpop.f32.mrf.mxu0
    %v2327 = vadd.f32 0.0, %v2326
    %2328 = vmatmul.f32.gmra.mxu0 %v2257
    %v2329 = vpop.f32.mrf.mxu0
    %v2330 = vadd.f32 0.0, %v2329
    %2331 = vdwg.mxu0
    %2332 = vmatpush.msra.mxu0 %v1942
    %2333 = vmatpush.msra.mxu0 %v1941
    %2334 = vmatpush.msra.mxu0 %v1940
    %2335 = vmatpush.msra.mxu0 %v1939
    %2336 = vmatpush.msra.mxu0 %v1938
    %2337 = vmatpush.msra.mxu0 %v1937
    %2338 = vmatpush.msra.mxu0 %v1936
    %2339 = vmatpush.msra.mxu0 %v1935
    %2340 = vmatpush.msra.mxu0 %v1934
    %2341 = vmatpush.msra.mxu0 %v1933
    %2342 = vmatpush.msra.mxu0 %v1932
    %2343 = vmatpush.msra.mxu0 %v1931
    %2344 = vmatpush.msra.mxu0 %v1930
    %2345 = vmatpush.msra.mxu0 %v1929
    %2346 = vmatpush.msra.mxu0 %v1928
    %2347 = vmatpush.msra.mxu0 %v1927
    %2348 = vmatmul.f32.gmra.mxu0 %v1889
    %v2349 = vpop.f32.mrf.mxu0
    %v2350 = vadd.f32 %v2294, %v2349
    %2351 = vmatmul.f32.gmra.mxu0 %v1892
    %v2352 = vpop.f32.mrf.mxu0
    %v2353 = vadd.f32 %v2297, %v2352
    %2354 = vmatmul.f32.gmra.mxu0 %v1895
    %v2355 = vpop.f32.mrf.mxu0
    %v2356 = vadd.f32 %v2300, %v2355
    %2357 = vmatmul.f32.gmra.mxu0 %v1898
    %v2358 = vpop.f32.mrf.mxu0
    %v2359 = vadd.f32 %v2303, %v2358
    %2360 = vmatmul.f32.gmra.mxu0 %v1901
    %v2361 = vpop.f32.mrf.mxu0
    %v2362 = vadd.f32 %v2306, %v2361
    %2363 = vmatmul.f32.gmra.mxu0 %v1904
    %v2364 = vpop.f32.mrf.mxu0
    %v2365 = vadd.f32 %v2309, %v2364
    %2366 = vmatmul.f32.gmra.mxu0 %v1907
    %v2367 = vpop.f32.mrf.mxu0
    %v2368 = vadd.f32 %v2312, %v2367
    %2369 = vmatmul.f32.gmra.mxu0 %v1910
    %v2370 = vpop.f32.mrf.mxu0
    %v2371 = vadd.f32 %v2315, %v2370
    %2372 = vmatmul.f32.gmra.mxu0 %v1913
    %v2373 = vpop.f32.mrf.mxu0
    %v2374 = vadd.f32 %v2318, %v2373
    %2375 = vmatmul.f32.gmra.mxu0 %v1916
    %v2376 = vpop.f32.mrf.mxu0
    %v2377 = vadd.f32 %v2321, %v2376
    %2378 = vmatmul.f32.gmra.mxu0 %v1919
    %v2379 = vpop.f32.mrf.mxu0
    %v2380 = vadd.f32 %v2324, %v2379
    %2381 = vmatmul.f32.gmra.mxu0 %v1922
    %v2382 = vpop.f32.mrf.mxu0
    %v2383 = vadd.f32 %v2327, %v2382
    %2384 = vmatmul.f32.gmra.mxu0 %v1925
    %v2385 = vpop.f32.mrf.mxu0
    %v2386 = vadd.f32 %v2330, %v2385
    %2387 = vdwg.mxu0
    %s2388 = scalar_lea.vmem %s3, 832
    %v2389 = vld [vmem:[%s2388] sm:$0xff]
    %v2390 = vld [vmem:[%s2388 + $0x8] sm:$0xff]
    %v2391 = vld [vmem:[%s2388 + $0x10] sm:$0xff]
    %v2392 = vld [vmem:[%s2388 + $0x18] sm:$0xff]
    %v2393 = vld [vmem:[%s2388 + $0x20] sm:$0xff]
    %v2394 = vld [vmem:[%s2388 + $0x28] sm:$0xff]
    %v2395 = vld [vmem:[%s2388 + $0x30] sm:$0xff]
    %v2396 = vld [vmem:[%s2388 + $0x38] sm:$0xff]
    %v2397 = vld [vmem:[%s2388 + $0x40] sm:$0xff]
    %v2398 = vld [vmem:[%s2388 + $0x48] sm:$0xff]
    %v2399 = vld [vmem:[%s2388 + $0x50] sm:$0xff]
    %v2400 = vld [vmem:[%s2388 + $0x58] sm:$0xff]
    %v2401 = vld [vmem:[%s2388 + $0x60] sm:$0xff]
    %v2402 = vld [vmem:[%s2388 + $0x68] sm:$0xff]
    %v2403 = vld [vmem:[%s2388 + $0x70] sm:$0xff]
    %v2404 = vld [vmem:[%s2388 + $0x78] sm:$0xff]
    %v2405 = vld [vmem:[%s2388 + $0x80] sm:$0xff]
    %v2406 = vld [vmem:[%s2388 + $0x88] sm:$0xff]
    %v2407 = vld [vmem:[%s2388 + $0x90] sm:$0xff]
    %v2408 = vld [vmem:[%s2388 + $0x98] sm:$0xff]
    %v2409 = vld [vmem:[%s2388 + $0xa0] sm:$0xff]
    %v2410 = vld [vmem:[%s2388 + $0xa8] sm:$0xff]
    %v2411 = vld [vmem:[%s2388 + $0xb0] sm:$0xff]
    %v2412 = vld [vmem:[%s2388 + $0xb8] sm:$0xff]
    %v2413 = vld [vmem:[%s2388 + $0xc0] sm:$0xff]
    %v2414 = vld [vmem:[%s2388 + $0xc8] sm:$0xff]
    %v2415 = vld [vmem:[%s2388 + $0xd0] sm:$0xff]
    %v2416 = vld [vmem:[%s2388 + $0xd8] sm:$0xff]
    %v2417 = vld [vmem:[%s2388 + $0xe0] sm:$0xff]
    %v2418 = vld [vmem:[%s2388 + $0xe8] sm:$0xff]
    %v2419 = vld [vmem:[%s2388 + $0xf0] sm:$0xff]
    %v2420 = vld [vmem:[%s2388 + $0xf8] sm:$0xff]
    %v2421 = vld [vmem:[%s2388 + $0x100] sm:$0xff]
    %v2422 = vld [vmem:[%s2388 + $0x108] sm:$0xff]
    %v2423 = vld [vmem:[%s2388 + $0x110] sm:$0xff]
    %v2424 = vld [vmem:[%s2388 + $0x118] sm:$0xff]
    %v2425 = vld [vmem:[%s2388 + $0x120] sm:$0xff]
    %v2426 = vld [vmem:[%s2388 + $0x128] sm:$0xff]
    %v2427 = vld [vmem:[%s2388 + $0x130] sm:$0xff]
    %v2428 = vld [vmem:[%s2388 + $0x138] sm:$0xff]
    %v2429 = vld [vmem:[%s2388 + $0x140] sm:$0xff]
    %v2430 = vld [vmem:[%s2388 + $0x148] sm:$0xff]
    %v2431 = vld [vmem:[%s2388 + $0x150] sm:$0xff]
    %v2432 = vld [vmem:[%s2388 + $0x158] sm:$0xff]
    %v2433 = vld [vmem:[%s2388 + $0x160] sm:$0xff]
    %v2434 = vld [vmem:[%s2388 + $0x168] sm:$0xff]
    %v2435 = vld [vmem:[%s2388 + $0x170] sm:$0xff]
    %v2436 = vld [vmem:[%s2388 + $0x178] sm:$0xff]
    %v2437 = vld [vmem:[%s2388 + $0x180] sm:$0x3]
    %v2438 = vld [vmem:[%s2388 + $0x188] sm:$0x3]
    %v2439 = vld [vmem:[%s2388 + $0x190] sm:$0x3]
    %v2440 = vld [vmem:[%s2388 + $0x198] sm:$0x3]
    %v2442 = vsel %vm1660, %v2392, 0
    %v2445 = vsel %vm1660, %v2396, 0
    %v2448 = vsel %vm1660, %v2400, 0
    %v2451 = vsel %vm1660, %v2404, 0
    %v2454 = vsel %vm1660, %v2408, 0
    %v2457 = vsel %vm1660, %v2412, 0
    %v2460 = vsel %vm1660, %v2416, 0
    %v2463 = vsel %vm1660, %v2420, 0
    %v2466 = vsel %vm1660, %v2424, 0
    %v2469 = vsel %vm1660, %v2428, 0
    %v2472 = vsel %vm1660, %v2432, 0
    %v2475 = vsel %vm1660, %v2436, 0
    %v2478 = vsel %vm1660, %v2440, 0
    %2480 = vmatpush.msra.mxu0 %v1566
    %2481 = vmatpush.msra.mxu0 %v1565
    %2482 = vmatpush.msra.mxu0 %v1564
    %2483 = vmatpush.msra.mxu0 %v1563
    %2484 = vmatpush.msra.mxu0 %v1562
    %2485 = vmatpush.msra.mxu0 %v1561
    %2486 = vmatpush.msra.mxu0 %v1560
    %2487 = vmatpush.msra.mxu0 %v1559
    %2488 = vmatpush.msra.mxu0 %v1558
    %2489 = vmatpush.msra.mxu0 %v1557
    %2490 = vmatpush.msra.mxu0 %v1556
    %2491 = vmatpush.msra.mxu0 %v1555
    %2492 = vmatpush.msra.mxu0 %v1554
    %2493 = vmatpush.msra.mxu0 %v1553
    %2494 = vmatpush.msra.mxu0 %v1552
    %2495 = vmatpush.msra.mxu0 %v1551
    %2496 = vmatmul.f32.gmra.mxu0 %v2389
    %v2497 = vpop.f32.mrf.mxu0
    %v2498 = vadd.f32 0.0, %v2497
    %2499 = vmatmul.f32.gmra.mxu0 %v2393
    %v2500 = vpop.f32.mrf.mxu0
    %v2501 = vadd.f32 0.0, %v2500
    %2502 = vmatmul.f32.gmra.mxu0 %v2397
    %v2503 = vpop.f32.mrf.mxu0
    %v2504 = vadd.f32 0.0, %v2503
    %2505 = vmatmul.f32.gmra.mxu0 %v2401
    %v2506 = vpop.f32.mrf.mxu0
    %v2507 = vadd.f32 0.0, %v2506
    %2508 = vmatmul.f32.gmra.mxu0 %v2405
    %v2509 = vpop.f32.mrf.mxu0
    %v2510 = vadd.f32 0.0, %v2509
    %2511 = vmatmul.f32.gmra.mxu0 %v2409
    %v2512 = vpop.f32.mrf.mxu0
    %v2513 = vadd.f32 0.0, %v2512
    %2514 = vmatmul.f32.gmra.mxu0 %v2413
    %v2515 = vpop.f32.mrf.mxu0
    %v2516 = vadd.f32 0.0, %v2515
    %2517 = vmatmul.f32.gmra.mxu0 %v2417
    %v2518 = vpop.f32.mrf.mxu0
    %v2519 = vadd.f32 0.0, %v2518
    %2520 = vmatmul.f32.gmra.mxu0 %v2421
    %v2521 = vpop.f32.mrf.mxu0
    %v2522 = vadd.f32 0.0, %v2521
    %2523 = vmatmul.f32.gmra.mxu0 %v2425
    %v2524 = vpop.f32.mrf.mxu0
    %v2525 = vadd.f32 0.0, %v2524
    %2526 = vmatmul.f32.gmra.mxu0 %v2429
    %v2527 = vpop.f32.mrf.mxu0
    %v2528 = vadd.f32 0.0, %v2527
    %2529 = vmatmul.f32.gmra.mxu0 %v2433
    %v2530 = vpop.f32.mrf.mxu0
    %v2531 = vadd.f32 0.0, %v2530
    %2532 = vmatmul.f32.gmra.mxu0 %v2437
    %v2533 = vpop.f32.mrf.mxu0
    %v2534 = vadd.f32 0.0, %v2533
    %2535 = vdwg.mxu0
    %2536 = vmatpush.msra.mxu0 %v1582
    %2537 = vmatpush.msra.mxu0 %v1581
    %2538 = vmatpush.msra.mxu0 %v1580
    %2539 = vmatpush.msra.mxu0 %v1579
    %2540 = vmatpush.msra.mxu0 %v1578
    %2541 = vmatpush.msra.mxu0 %v1577
    %2542 = vmatpush.msra.mxu0 %v1576
    %2543 = vmatpush.msra.mxu0 %v1575
    %2544 = vmatpush.msra.mxu0 %v1574
    %2545 = vmatpush.msra.mxu0 %v1573
    %2546 = vmatpush.msra.mxu0 %v1572
    %2547 = vmatpush.msra.mxu0 %v1571
    %2548 = vmatpush.msra.mxu0 %v1570
    %2549 = vmatpush.msra.mxu0 %v1569
    %2550 = vmatpush.msra.mxu0 %v1568
    %2551 = vmatpush.msra.mxu0 %v1567
    %2552 = vmatmul.f32.gmra.mxu0 %v2390
    %v2553 = vpop.f32.mrf.mxu0
    %v2554 = vadd.f32 %v2498, %v2553
    %2555 = vmatmul.f32.gmra.mxu0 %v2394
    %v2556 = vpop.f32.mrf.mxu0
    %v2557 = vadd.f32 %v2501, %v2556
    %2558 = vmatmul.f32.gmra.mxu0 %v2398
    %v2559 = vpop.f32.mrf.mxu0
    %v2560 = vadd.f32 %v2504, %v2559
    %2561 = vmatmul.f32.gmra.mxu0 %v2402
    %v2562 = vpop.f32.mrf.mxu0
    %v2563 = vadd.f32 %v2507, %v2562
    %2564 = vmatmul.f32.gmra.mxu0 %v2406
    %v2565 = vpop.f32.mrf.mxu0
    %v2566 = vadd.f32 %v2510, %v2565
    %2567 = vmatmul.f32.gmra.mxu0 %v2410
    %v2568 = vpop.f32.mrf.mxu0
    %v2569 = vadd.f32 %v2513, %v2568
    %2570 = vmatmul.f32.gmra.mxu0 %v2414
    %v2571 = vpop.f32.mrf.mxu0
    %v2572 = vadd.f32 %v2516, %v2571
    %2573 = vmatmul.f32.gmra.mxu0 %v2418
    %v2574 = vpop.f32.mrf.mxu0
    %v2575 = vadd.f32 %v2519, %v2574
    %2576 = vmatmul.f32.gmra.mxu0 %v2422
    %v2577 = vpop.f32.mrf.mxu0
    %v2578 = vadd.f32 %v2522, %v2577
    %2579 = vmatmul.f32.gmra.mxu0 %v2426
    %v2580 = vpop.f32.mrf.mxu0
    %v2581 = vadd.f32 %v2525, %v2580
    %2582 = vmatmul.f32.gmra.mxu0 %v2430
    %v2583 = vpop.f32.mrf.mxu0
    %v2584 = vadd.f32 %v2528, %v2583
    %2585 = vmatmul.f32.gmra.mxu0 %v2434
    %v2586 = vpop.f32.mrf.mxu0
    %v2587 = vadd.f32 %v2531, %v2586
    %2588 = vmatmul.f32.gmra.mxu0 %v2438
    %v2589 = vpop.f32.mrf.mxu0
    %v2590 = vadd.f32 %v2534, %v2589
    %2591 = vdwg.mxu0
    %2592 = vmatpush.msra.mxu0 %v1598
    %2593 = vmatpush.msra.mxu0 %v1597
    %2594 = vmatpush.msra.mxu0 %v1596
    %2595 = vmatpush.msra.mxu0 %v1595
    %2596 = vmatpush.msra.mxu0 %v1594
    %2597 = vmatpush.msra.mxu0 %v1593
    %2598 = vmatpush.msra.mxu0 %v1592
    %2599 = vmatpush.msra.mxu0 %v1591
    %2600 = vmatpush.msra.mxu0 %v1590
    %2601 = vmatpush.msra.mxu0 %v1589
    %2602 = vmatpush.msra.mxu0 %v1588
    %2603 = vmatpush.msra.mxu0 %v1587
    %2604 = vmatpush.msra.mxu0 %v1586
    %2605 = vmatpush.msra.mxu0 %v1585
    %2606 = vmatpush.msra.mxu0 %v1584
    %2607 = vmatpush.msra.mxu0 %v1583
    %2608 = vmatmul.f32.gmra.mxu0 %v2391
    %v2609 = vpop.f32.mrf.mxu0
    %v2610 = vadd.f32 %v2554, %v2609
    %2611 = vmatmul.f32.gmra.mxu0 %v2395
    %v2612 = vpop.f32.mrf.mxu0
    %v2613 = vadd.f32 %v2557, %v2612
    %2614 = vmatmul.f32.gmra.mxu0 %v2399
    %v2615 = vpop.f32.mrf.mxu0
    %v2616 = vadd.f32 %v2560, %v2615
    %2617 = vmatmul.f32.gmra.mxu0 %v2403
    %v2618 = vpop.f32.mrf.mxu0
    %v2619 = vadd.f32 %v2563, %v2618
    %2620 = vmatmul.f32.gmra.mxu0 %v2407
    %v2621 = vpop.f32.mrf.mxu0
    %v2622 = vadd.f32 %v2566, %v2621
    %2623 = vmatmul.f32.gmra.mxu0 %v2411
    %v2624 = vpop.f32.mrf.mxu0
    %v2625 = vadd.f32 %v2569, %v2624
    %2626 = vmatmul.f32.gmra.mxu0 %v2415
    %v2627 = vpop.f32.mrf.mxu0
    %v2628 = vadd.f32 %v2572, %v2627
    %2629 = vmatmul.f32.gmra.mxu0 %v2419
    %v2630 = vpop.f32.mrf.mxu0
    %v2631 = vadd.f32 %v2575, %v2630
    %2632 = vmatmul.f32.gmra.mxu0 %v2423
    %v2633 = vpop.f32.mrf.mxu0
    %v2634 = vadd.f32 %v2578, %v2633
    %2635 = vmatmul.f32.gmra.mxu0 %v2427
    %v2636 = vpop.f32.mrf.mxu0
    %v2637 = vadd.f32 %v2581, %v2636
    %2638 = vmatmul.f32.gmra.mxu0 %v2431
    %v2639 = vpop.f32.mrf.mxu0
    %v2640 = vadd.f32 %v2584, %v2639
    %2641 = vmatmul.f32.gmra.mxu0 %v2435
    %v2642 = vpop.f32.mrf.mxu0
    %v2643 = vadd.f32 %v2587, %v2642
    %2644 = vmatmul.f32.gmra.mxu0 %v2439
    %v2645 = vpop.f32.mrf.mxu0
    %v2646 = vadd.f32 %v2590, %v2645
    %2647 = vdwg.mxu0
    %2648 = vmatpush.msra.mxu0 0.0
    %2649 = vmatpush.msra.mxu0 0.0
    %2650 = vmatpush.msra.mxu0 0.0
    %2651 = vmatpush.msra.mxu0 0.0
    %2652 = vmatpush.msra.mxu0 0.0
    %2653 = vmatpush.msra.mxu0 0.0
    %2654 = vmatpush.msra.mxu0 0.0
    %2655 = vmatpush.msra.mxu0 %v1701
    %2656 = vmatpush.msra.mxu0 %v1606
    %2657 = vmatpush.msra.mxu0 %v1605
    %2658 = vmatpush.msra.mxu0 %v1604
    %2659 = vmatpush.msra.mxu0 %v1603
    %2660 = vmatpush.msra.mxu0 %v1602
    %2661 = vmatpush.msra.mxu0 %v1601
    %2662 = vmatpush.msra.mxu0 %v1600
    %2663 = vmatpush.msra.mxu0 %v1599
    %2664 = vmatmul.f32.gmra.mxu0 %v2442
    %v2665 = vpop.f32.mrf.mxu0
    %v2666 = vadd.f32 %v2610, %v2665
    %2667 = vmatmul.f32.gmra.mxu0 %v2445
    %v2668 = vpop.f32.mrf.mxu0
    %v2669 = vadd.f32 %v2613, %v2668
    %2670 = vmatmul.f32.gmra.mxu0 %v2448
    %v2671 = vpop.f32.mrf.mxu0
    %v2672 = vadd.f32 %v2616, %v2671
    %2673 = vmatmul.f32.gmra.mxu0 %v2451
    %v2674 = vpop.f32.mrf.mxu0
    %v2675 = vadd.f32 %v2619, %v2674
    %2676 = vmatmul.f32.gmra.mxu0 %v2454
    %v2677 = vpop.f32.mrf.mxu0
    %v2678 = vadd.f32 %v2622, %v2677
    %2679 = vmatmul.f32.gmra.mxu0 %v2457
    %v2680 = vpop.f32.mrf.mxu0
    %v2681 = vadd.f32 %v2625, %v2680
    %2682 = vmatmul.f32.gmra.mxu0 %v2460
    %v2683 = vpop.f32.mrf.mxu0
    %v2684 = vadd.f32 %v2628, %v2683
    %2685 = vmatmul.f32.gmra.mxu0 %v2463
    %v2686 = vpop.f32.mrf.mxu0
    %v2687 = vadd.f32 %v2631, %v2686
    %2688 = vmatmul.f32.gmra.mxu0 %v2466
    %v2689 = vpop.f32.mrf.mxu0
    %v2690 = vadd.f32 %v2634, %v2689
    %2691 = vmatmul.f32.gmra.mxu0 %v2469
    %v2692 = vpop.f32.mrf.mxu0
    %v2693 = vadd.f32 %v2637, %v2692
    %2694 = vmatmul.f32.gmra.mxu0 %v2472
    %v2695 = vpop.f32.mrf.mxu0
    %v2696 = vadd.f32 %v2640, %v2695
    %2697 = vmatmul.f32.gmra.mxu0 %v2475
    %v2698 = vpop.f32.mrf.mxu0
    %v2699 = vadd.f32 %v2643, %v2698
    %2700 = vmatmul.f32.gmra.mxu0 %v2478
    %v2701 = vpop.f32.mrf.mxu0
    %v2702 = vadd.f32 %v2646, %v2701
    %2703 = vdwg.mxu0
    %s2704 = scalar_lea.vmem %s2, 256
    %v2705 = vld [vmem:[%s2704] sm:$0xff]
    %v2706 = vld [vmem:[%s2704 + $0x8] sm:$0xff]
    %v2707 = vld [vmem:[%s2704 + $0x10] sm:$0xff]
    %v2708 = vld [vmem:[%s2704 + $0x18] sm:$0xff]
    %v2709 = vld [vmem:[%s2704 + $0x20] sm:$0xff]
    %v2710 = vld [vmem:[%s2704 + $0x28] sm:$0xff]
    %v2711 = vld [vmem:[%s2704 + $0x30] sm:$0xff]
    %v2712 = vld [vmem:[%s2704 + $0x38] sm:$0xff]
    %v2713 = vld [vmem:[%s2704 + $0x40] sm:$0xff]
    %v2714 = vld [vmem:[%s2704 + $0x48] sm:$0xff]
    %v2715 = vld [vmem:[%s2704 + $0x50] sm:$0xff]
    %v2716 = vld [vmem:[%s2704 + $0x58] sm:$0xff]
    %v2717 = vld [vmem:[%s2704 + $0x60] sm:$0xff]
    %v2718 = vld [vmem:[%s2704 + $0x68] sm:$0xff]
    %v2719 = vld [vmem:[%s2704 + $0x70] sm:$0xff]
    %v2720 = vld [vmem:[%s2704 + $0x78] sm:$0xff]
    %2721 = vmatpush.msra.mxu0 %v2720
    %2722 = vmatpush.msra.mxu0 %v2719
    %2723 = vmatpush.msra.mxu0 %v2718
    %2724 = vmatpush.msra.mxu0 %v2717
    %2725 = vmatpush.msra.mxu0 %v2716
    %2726 = vmatpush.msra.mxu0 %v2715
    %2727 = vmatpush.msra.mxu0 %v2714
    %2728 = vmatpush.msra.mxu0 %v2713
    %2729 = vmatpush.msra.mxu0 %v2712
    %2730 = vmatpush.msra.mxu0 %v2711
    %2731 = vmatpush.msra.mxu0 %v2710
    %2732 = vmatpush.msra.mxu0 %v2709
    %2733 = vmatpush.msra.mxu0 %v2708
    %2734 = vmatpush.msra.mxu0 %v2707
    %2735 = vmatpush.msra.mxu0 %v2706
    %2736 = vmatpush.msra.mxu0 %v2705
    %2737 = vmatmul.f32.gmra.mxu0 %v2666
    %v2738 = vpop.f32.mrf.mxu0
    %v2739 = vadd.f32 0.0, %v2738
    %2740 = vmatmul.f32.gmra.mxu0 %v2669
    %v2741 = vpop.f32.mrf.mxu0
    %v2742 = vadd.f32 0.0, %v2741
    %2743 = vmatmul.f32.gmra.mxu0 %v2672
    %v2744 = vpop.f32.mrf.mxu0
    %v2745 = vadd.f32 0.0, %v2744
    %2746 = vmatmul.f32.gmra.mxu0 %v2675
    %v2747 = vpop.f32.mrf.mxu0
    %v2748 = vadd.f32 0.0, %v2747
    %2749 = vmatmul.f32.gmra.mxu0 %v2678
    %v2750 = vpop.f32.mrf.mxu0
    %v2751 = vadd.f32 0.0, %v2750
    %2752 = vmatmul.f32.gmra.mxu0 %v2681
    %v2753 = vpop.f32.mrf.mxu0
    %v2754 = vadd.f32 0.0, %v2753
    %2755 = vmatmul.f32.gmra.mxu0 %v2684
    %v2756 = vpop.f32.mrf.mxu0
    %v2757 = vadd.f32 0.0, %v2756
    %2758 = vmatmul.f32.gmra.mxu0 %v2687
    %v2759 = vpop.f32.mrf.mxu0
    %v2760 = vadd.f32 0.0, %v2759
    %2761 = vmatmul.f32.gmra.mxu0 %v2690
    %v2762 = vpop.f32.mrf.mxu0
    %v2763 = vadd.f32 0.0, %v2762
    %2764 = vmatmul.f32.gmra.mxu0 %v2693
    %v2765 = vpop.f32.mrf.mxu0
    %v2766 = vadd.f32 0.0, %v2765
    %2767 = vmatmul.f32.gmra.mxu0 %v2696
    %v2768 = vpop.f32.mrf.mxu0
    %v2769 = vadd.f32 0.0, %v2768
    %2770 = vmatmul.f32.gmra.mxu0 %v2699
    %v2771 = vpop.f32.mrf.mxu0
    %v2772 = vadd.f32 0.0, %v2771
    %2773 = vmatmul.f32.gmra.mxu0 %v2702
    %v2774 = vpop.f32.mrf.mxu0
    %v2775 = vadd.f32 0.0, %v2774
    %2776 = vdwg.mxu0
    %v2777 = vadd.f32 %v2350, %v2739
    %v2778 = vadd.f32 %v2353, %v2742
    %v2779 = vadd.f32 %v2356, %v2745
    %v2780 = vadd.f32 %v2359, %v2748
    %v2781 = vadd.f32 %v2362, %v2751
    %v2782 = vadd.f32 %v2365, %v2754
    %v2783 = vadd.f32 %v2368, %v2757
    %v2784 = vadd.f32 %v2371, %v2760
    %v2785 = vadd.f32 %v2374, %v2763
    %v2786 = vadd.f32 %v2377, %v2766
    %v2787 = vadd.f32 %v2380, %v2769
    %v2788 = vadd.f32 %v2383, %v2772
    %v2789 = vadd.f32 %v2386, %v2775
    %s2790 = scalar_lea.vmem %s3, 1248
    %v2791 = vld [vmem:[%s2790] sm:$0xff]
    %v2792 = vld [vmem:[%s2790 + $0x8] sm:$0xff]
    %v2793 = vld [vmem:[%s2790 + $0x10] sm:$0xff]
    %v2794 = vld [vmem:[%s2790 + $0x18] sm:$0xff]
    %v2795 = vld [vmem:[%s2790 + $0x20] sm:$0xff]
    %v2796 = vld [vmem:[%s2790 + $0x28] sm:$0xff]
    %v2797 = vld [vmem:[%s2790 + $0x30] sm:$0xff]
    %v2798 = vld [vmem:[%s2790 + $0x38] sm:$0xff]
    %v2799 = vld [vmem:[%s2790 + $0x40] sm:$0xff]
    %v2800 = vld [vmem:[%s2790 + $0x48] sm:$0xff]
    %v2801 = vld [vmem:[%s2790 + $0x50] sm:$0xff]
    %v2802 = vld [vmem:[%s2790 + $0x58] sm:$0xff]
    %v2803 = vld [vmem:[%s2790 + $0x60] sm:$0xff]
    %v2804 = vld [vmem:[%s2790 + $0x68] sm:$0xff]
    %v2805 = vld [vmem:[%s2790 + $0x70] sm:$0xff]
    %v2806 = vld [vmem:[%s2790 + $0x78] sm:$0xff]
    %v2807 = vld [vmem:[%s2790 + $0x80] sm:$0xff]
    %v2808 = vld [vmem:[%s2790 + $0x88] sm:$0xff]
    %v2809 = vld [vmem:[%s2790 + $0x90] sm:$0xff]
    %v2810 = vld [vmem:[%s2790 + $0x98] sm:$0xff]
    %v2811 = vld [vmem:[%s2790 + $0xa0] sm:$0xff]
    %v2812 = vld [vmem:[%s2790 + $0xa8] sm:$0xff]
    %v2813 = vld [vmem:[%s2790 + $0xb0] sm:$0xff]
    %v2814 = vld [vmem:[%s2790 + $0xb8] sm:$0xff]
    %v2815 = vld [vmem:[%s2790 + $0xc0] sm:$0xff]
    %v2816 = vld [vmem:[%s2790 + $0xc8] sm:$0xff]
    %v2817 = vld [vmem:[%s2790 + $0xd0] sm:$0xff]
    %v2818 = vld [vmem:[%s2790 + $0xd8] sm:$0xff]
    %v2819 = vld [vmem:[%s2790 + $0xe0] sm:$0xff]
    %v2820 = vld [vmem:[%s2790 + $0xe8] sm:$0xff]
    %v2821 = vld [vmem:[%s2790 + $0xf0] sm:$0xff]
    %v2822 = vld [vmem:[%s2790 + $0xf8] sm:$0xff]
    %v2823 = vld [vmem:[%s2790 + $0x100] sm:$0xff]
    %v2824 = vld [vmem:[%s2790 + $0x108] sm:$0xff]
    %v2825 = vld [vmem:[%s2790 + $0x110] sm:$0xff]
    %v2826 = vld [vmem:[%s2790 + $0x118] sm:$0xff]
    %v2827 = vld [vmem:[%s2790 + $0x120] sm:$0xff]
    %v2828 = vld [vmem:[%s2790 + $0x128] sm:$0xff]
    %v2829 = vld [vmem:[%s2790 + $0x130] sm:$0xff]
    %v2830 = vld [vmem:[%s2790 + $0x138] sm:$0xff]
    %v2831 = vld [vmem:[%s2790 + $0x140] sm:$0xff]
    %v2832 = vld [vmem:[%s2790 + $0x148] sm:$0xff]
    %v2833 = vld [vmem:[%s2790 + $0x150] sm:$0xff]
    %v2834 = vld [vmem:[%s2790 + $0x158] sm:$0xff]
    %v2835 = vld [vmem:[%s2790 + $0x160] sm:$0xff]
    %v2836 = vld [vmem:[%s2790 + $0x168] sm:$0xff]
    %v2837 = vld [vmem:[%s2790 + $0x170] sm:$0xff]
    %v2838 = vld [vmem:[%s2790 + $0x178] sm:$0xff]
    %v2839 = vld [vmem:[%s2790 + $0x180] sm:$0x3]
    %v2840 = vld [vmem:[%s2790 + $0x188] sm:$0x3]
    %v2841 = vld [vmem:[%s2790 + $0x190] sm:$0x3]
    %v2842 = vld [vmem:[%s2790 + $0x198] sm:$0x3]
    %v2844 = vsel %vm1660, %v2794, 0
    %v2847 = vsel %vm1660, %v2798, 0
    %v2850 = vsel %vm1660, %v2802, 0
    %v2853 = vsel %vm1660, %v2806, 0
    %v2856 = vsel %vm1660, %v2810, 0
    %v2859 = vsel %vm1660, %v2814, 0
    %v2862 = vsel %vm1660, %v2818, 0
    %v2865 = vsel %vm1660, %v2822, 0
    %v2868 = vsel %vm1660, %v2826, 0
    %v2871 = vsel %vm1660, %v2830, 0
    %v2874 = vsel %vm1660, %v2834, 0
    %v2877 = vsel %vm1660, %v2838, 0
    %v2880 = vsel %vm1660, %v2842, 0
    %2882 = vmatpush.msra.mxu0 %v1566
    %2883 = vmatpush.msra.mxu0 %v1565
    %2884 = vmatpush.msra.mxu0 %v1564
    %2885 = vmatpush.msra.mxu0 %v1563
    %2886 = vmatpush.msra.mxu0 %v1562
    %2887 = vmatpush.msra.mxu0 %v1561
    %2888 = vmatpush.msra.mxu0 %v1560
    %2889 = vmatpush.msra.mxu0 %v1559
    %2890 = vmatpush.msra.mxu0 %v1558
    %2891 = vmatpush.msra.mxu0 %v1557
    %2892 = vmatpush.msra.mxu0 %v1556
    %2893 = vmatpush.msra.mxu0 %v1555
    %2894 = vmatpush.msra.mxu0 %v1554
    %2895 = vmatpush.msra.mxu0 %v1553
    %2896 = vmatpush.msra.mxu0 %v1552
    %2897 = vmatpush.msra.mxu0 %v1551
    %2898 = vmatmul.f32.gmra.mxu0 %v2791
    %v2899 = vpop.f32.mrf.mxu0
    %v2900 = vadd.f32 0.0, %v2899
    %2901 = vmatmul.f32.gmra.mxu0 %v2795
    %v2902 = vpop.f32.mrf.mxu0
    %v2903 = vadd.f32 0.0, %v2902
    %2904 = vmatmul.f32.gmra.mxu0 %v2799
    %v2905 = vpop.f32.mrf.mxu0
    %v2906 = vadd.f32 0.0, %v2905
    %2907 = vmatmul.f32.gmra.mxu0 %v2803
    %v2908 = vpop.f32.mrf.mxu0
    %v2909 = vadd.f32 0.0, %v2908
    %2910 = vmatmul.f32.gmra.mxu0 %v2807
    %v2911 = vpop.f32.mrf.mxu0
    %v2912 = vadd.f32 0.0, %v2911
    %2913 = vmatmul.f32.gmra.mxu0 %v2811
    %v2914 = vpop.f32.mrf.mxu0
    %v2915 = vadd.f32 0.0, %v2914
    %2916 = vmatmul.f32.gmra.mxu0 %v2815
    %v2917 = vpop.f32.mrf.mxu0
    %v2918 = vadd.f32 0.0, %v2917
    %2919 = vmatmul.f32.gmra.mxu0 %v2819
    %v2920 = vpop.f32.mrf.mxu0
    %v2921 = vadd.f32 0.0, %v2920
    %2922 = vmatmul.f32.gmra.mxu0 %v2823
    %v2923 = vpop.f32.mrf.mxu0
    %v2924 = vadd.f32 0.0, %v2923
    %2925 = vmatmul.f32.gmra.mxu0 %v2827
    %v2926 = vpop.f32.mrf.mxu0
    %v2927 = vadd.f32 0.0, %v2926
    %2928 = vmatmul.f32.gmra.mxu0 %v2831
    %v2929 = vpop.f32.mrf.mxu0
    %v2930 = vadd.f32 0.0, %v2929
    %2931 = vmatmul.f32.gmra.mxu0 %v2835
    %v2932 = vpop.f32.mrf.mxu0
    %v2933 = vadd.f32 0.0, %v2932
    %2934 = vmatmul.f32.gmra.mxu0 %v2839
    %v2935 = vpop.f32.mrf.mxu0
    %v2936 = vadd.f32 0.0, %v2935
    %2937 = vdwg.mxu0
    %2938 = vmatpush.msra.mxu0 %v1582
    %2939 = vmatpush.msra.mxu0 %v1581
    %2940 = vmatpush.msra.mxu0 %v1580
    %2941 = vmatpush.msra.mxu0 %v1579
    %2942 = vmatpush.msra.mxu0 %v1578
    %2943 = vmatpush.msra.mxu0 %v1577
    %2944 = vmatpush.msra.mxu0 %v1576
    %2945 = vmatpush.msra.mxu0 %v1575
    %2946 = vmatpush.msra.mxu0 %v1574
    %2947 = vmatpush.msra.mxu0 %v1573
    %2948 = vmatpush.msra.mxu0 %v1572
    %2949 = vmatpush.msra.mxu0 %v1571
    %2950 = vmatpush.msra.mxu0 %v1570
    %2951 = vmatpush.msra.mxu0 %v1569
    %2952 = vmatpush.msra.mxu0 %v1568
    %2953 = vmatpush.msra.mxu0 %v1567
    %2954 = vmatmul.f32.gmra.mxu0 %v2792
    %v2955 = vpop.f32.mrf.mxu0
    %v2956 = vadd.f32 %v2900, %v2955
    %2957 = vmatmul.f32.gmra.mxu0 %v2796
    %v2958 = vpop.f32.mrf.mxu0
    %v2959 = vadd.f32 %v2903, %v2958
    %2960 = vmatmul.f32.gmra.mxu0 %v2800
    %v2961 = vpop.f32.mrf.mxu0
    %v2962 = vadd.f32 %v2906, %v2961
    %2963 = vmatmul.f32.gmra.mxu0 %v2804
    %v2964 = vpop.f32.mrf.mxu0
    %v2965 = vadd.f32 %v2909, %v2964
    %2966 = vmatmul.f32.gmra.mxu0 %v2808
    %v2967 = vpop.f32.mrf.mxu0
    %v2968 = vadd.f32 %v2912, %v2967
    %2969 = vmatmul.f32.gmra.mxu0 %v2812
    %v2970 = vpop.f32.mrf.mxu0
    %v2971 = vadd.f32 %v2915, %v2970
    %2972 = vmatmul.f32.gmra.mxu0 %v2816
    %v2973 = vpop.f32.mrf.mxu0
    %v2974 = vadd.f32 %v2918, %v2973
    %2975 = vmatmul.f32.gmra.mxu0 %v2820
    %v2976 = vpop.f32.mrf.mxu0
    %v2977 = vadd.f32 %v2921, %v2976
    %2978 = vmatmul.f32.gmra.mxu0 %v2824
    %v2979 = vpop.f32.mrf.mxu0
    %v2980 = vadd.f32 %v2924, %v2979
    %2981 = vmatmul.f32.gmra.mxu0 %v2828
    %v2982 = vpop.f32.mrf.mxu0
    %v2983 = vadd.f32 %v2927, %v2982
    %2984 = vmatmul.f32.gmra.mxu0 %v2832
    %v2985 = vpop.f32.mrf.mxu0
    %v2986 = vadd.f32 %v2930, %v2985
    %2987 = vmatmul.f32.gmra.mxu0 %v2836
    %v2988 = vpop.f32.mrf.mxu0
    %v2989 = vadd.f32 %v2933, %v2988
    %2990 = vmatmul.f32.gmra.mxu0 %v2840
    %v2991 = vpop.f32.mrf.mxu0
    %v2992 = vadd.f32 %v2936, %v2991
    %2993 = vdwg.mxu0
    %2994 = vmatpush.msra.mxu0 %v1598
    %2995 = vmatpush.msra.mxu0 %v1597
    %2996 = vmatpush.msra.mxu0 %v1596
    %2997 = vmatpush.msra.mxu0 %v1595
    %2998 = vmatpush.msra.mxu0 %v1594
    %2999 = vmatpush.msra.mxu0 %v1593
    %3000 = vmatpush.msra.mxu0 %v1592
    %3001 = vmatpush.msra.mxu0 %v1591
    %3002 = vmatpush.msra.mxu0 %v1590
    %3003 = vmatpush.msra.mxu0 %v1589
    %3004 = vmatpush.msra.mxu0 %v1588
    %3005 = vmatpush.msra.mxu0 %v1587
    %3006 = vmatpush.msra.mxu0 %v1586
    %3007 = vmatpush.msra.mxu0 %v1585
    %3008 = vmatpush.msra.mxu0 %v1584
    %3009 = vmatpush.msra.mxu0 %v1583
    %3010 = vmatmul.f32.gmra.mxu0 %v2793
    %v3011 = vpop.f32.mrf.mxu0
    %v3012 = vadd.f32 %v2956, %v3011
    %3013 = vmatmul.f32.gmra.mxu0 %v2797
    %v3014 = vpop.f32.mrf.mxu0
    %v3015 = vadd.f32 %v2959, %v3014
    %3016 = vmatmul.f32.gmra.mxu0 %v2801
    %v3017 = vpop.f32.mrf.mxu0
    %v3018 = vadd.f32 %v2962, %v3017
    %3019 = vmatmul.f32.gmra.mxu0 %v2805
    %v3020 = vpop.f32.mrf.mxu0
    %v3021 = vadd.f32 %v2965, %v3020
    %3022 = vmatmul.f32.gmra.mxu0 %v2809
    %v3023 = vpop.f32.mrf.mxu0
    %v3024 = vadd.f32 %v2968, %v3023
    %3025 = vmatmul.f32.gmra.mxu0 %v2813
    %v3026 = vpop.f32.mrf.mxu0
    %v3027 = vadd.f32 %v2971, %v3026
    %3028 = vmatmul.f32.gmra.mxu0 %v2817
    %v3029 = vpop.f32.mrf.mxu0
    %v3030 = vadd.f32 %v2974, %v3029
    %3031 = vmatmul.f32.gmra.mxu0 %v2821
    %v3032 = vpop.f32.mrf.mxu0
    %v3033 = vadd.f32 %v2977, %v3032
    %3034 = vmatmul.f32.gmra.mxu0 %v2825
    %v3035 = vpop.f32.mrf.mxu0
    %v3036 = vadd.f32 %v2980, %v3035
    %3037 = vmatmul.f32.gmra.mxu0 %v2829
    %v3038 = vpop.f32.mrf.mxu0
    %v3039 = vadd.f32 %v2983, %v3038
    %3040 = vmatmul.f32.gmra.mxu0 %v2833
    %v3041 = vpop.f32.mrf.mxu0
    %v3042 = vadd.f32 %v2986, %v3041
    %3043 = vmatmul.f32.gmra.mxu0 %v2837
    %v3044 = vpop.f32.mrf.mxu0
    %v3045 = vadd.f32 %v2989, %v3044
    %3046 = vmatmul.f32.gmra.mxu0 %v2841
    %v3047 = vpop.f32.mrf.mxu0
    %v3048 = vadd.f32 %v2992, %v3047
    %3049 = vdwg.mxu0
    %3050 = vmatpush.msra.mxu0 0.0
    %3051 = vmatpush.msra.mxu0 0.0
    %3052 = vmatpush.msra.mxu0 0.0
    %3053 = vmatpush.msra.mxu0 0.0
    %3054 = vmatpush.msra.mxu0 0.0
    %3055 = vmatpush.msra.mxu0 0.0
    %3056 = vmatpush.msra.mxu0 0.0
    %3057 = vmatpush.msra.mxu0 %v1701
    %3058 = vmatpush.msra.mxu0 %v1606
    %3059 = vmatpush.msra.mxu0 %v1605
    %3060 = vmatpush.msra.mxu0 %v1604
    %3061 = vmatpush.msra.mxu0 %v1603
    %3062 = vmatpush.msra.mxu0 %v1602
    %3063 = vmatpush.msra.mxu0 %v1601
    %3064 = vmatpush.msra.mxu0 %v1600
    %3065 = vmatpush.msra.mxu0 %v1599
    %3066 = vmatmul.f32.gmra.mxu0 %v2844
    %v3067 = vpop.f32.mrf.mxu0
    %v3068 = vadd.f32 %v3012, %v3067
    %3069 = vmatmul.f32.gmra.mxu0 %v2847
    %v3070 = vpop.f32.mrf.mxu0
    %v3071 = vadd.f32 %v3015, %v3070
    %3072 = vmatmul.f32.gmra.mxu0 %v2850
    %v3073 = vpop.f32.mrf.mxu0
    %v3074 = vadd.f32 %v3018, %v3073
    %3075 = vmatmul.f32.gmra.mxu0 %v2853
    %v3076 = vpop.f32.mrf.mxu0
    %v3077 = vadd.f32 %v3021, %v3076
    %3078 = vmatmul.f32.gmra.mxu0 %v2856
    %v3079 = vpop.f32.mrf.mxu0
    %v3080 = vadd.f32 %v3024, %v3079
    %3081 = vmatmul.f32.gmra.mxu0 %v2859
    %v3082 = vpop.f32.mrf.mxu0
    %v3083 = vadd.f32 %v3027, %v3082
    %3084 = vmatmul.f32.gmra.mxu0 %v2862
    %v3085 = vpop.f32.mrf.mxu0
    %v3086 = vadd.f32 %v3030, %v3085
    %3087 = vmatmul.f32.gmra.mxu0 %v2865
    %v3088 = vpop.f32.mrf.mxu0
    %v3089 = vadd.f32 %v3033, %v3088
    %3090 = vmatmul.f32.gmra.mxu0 %v2868
    %v3091 = vpop.f32.mrf.mxu0
    %v3092 = vadd.f32 %v3036, %v3091
    %3093 = vmatmul.f32.gmra.mxu0 %v2871
    %v3094 = vpop.f32.mrf.mxu0
    %v3095 = vadd.f32 %v3039, %v3094
    %3096 = vmatmul.f32.gmra.mxu0 %v2874
    %v3097 = vpop.f32.mrf.mxu0
    %v3098 = vadd.f32 %v3042, %v3097
    %3099 = vmatmul.f32.gmra.mxu0 %v2877
    %v3100 = vpop.f32.mrf.mxu0
    %v3101 = vadd.f32 %v3045, %v3100
    %3102 = vmatmul.f32.gmra.mxu0 %v2880
    %v3103 = vpop.f32.mrf.mxu0
    %v3104 = vadd.f32 %v3048, %v3103
    %3105 = vdwg.mxu0
    %s3106 = scalar_lea.vmem %s2, 384
    %v3107 = vld [vmem:[%s3106] sm:$0xff]
    %v3108 = vld [vmem:[%s3106 + $0x8] sm:$0xff]
    %v3109 = vld [vmem:[%s3106 + $0x10] sm:$0xff]
    %v3110 = vld [vmem:[%s3106 + $0x18] sm:$0xff]
    %v3111 = vld [vmem:[%s3106 + $0x20] sm:$0xff]
    %v3112 = vld [vmem:[%s3106 + $0x28] sm:$0xff]
    %v3113 = vld [vmem:[%s3106 + $0x30] sm:$0xff]
    %v3114 = vld [vmem:[%s3106 + $0x38] sm:$0xff]
    %v3115 = vld [vmem:[%s3106 + $0x40] sm:$0xff]
    %v3116 = vld [vmem:[%s3106 + $0x48] sm:$0xff]
    %v3117 = vld [vmem:[%s3106 + $0x50] sm:$0xff]
    %v3118 = vld [vmem:[%s3106 + $0x58] sm:$0xff]
    %v3119 = vld [vmem:[%s3106 + $0x60] sm:$0xff]
    %v3120 = vld [vmem:[%s3106 + $0x68] sm:$0xff]
    %v3121 = vld [vmem:[%s3106 + $0x70] sm:$0xff]
    %v3122 = vld [vmem:[%s3106 + $0x78] sm:$0xff]
    %3123 = vmatpush.msra.mxu0 %v3122
    %3124 = vmatpush.msra.mxu0 %v3121
    %3125 = vmatpush.msra.mxu0 %v3120
    %3126 = vmatpush.msra.mxu0 %v3119
    %3127 = vmatpush.msra.mxu0 %v3118
    %3128 = vmatpush.msra.mxu0 %v3117
    %3129 = vmatpush.msra.mxu0 %v3116
    %3130 = vmatpush.msra.mxu0 %v3115
    %3131 = vmatpush.msra.mxu0 %v3114
    %3132 = vmatpush.msra.mxu0 %v3113
    %3133 = vmatpush.msra.mxu0 %v3112
    %3134 = vmatpush.msra.mxu0 %v3111
    %3135 = vmatpush.msra.mxu0 %v3110
    %3136 = vmatpush.msra.mxu0 %v3109
    %3137 = vmatpush.msra.mxu0 %v3108
    %3138 = vmatpush.msra.mxu0 %v3107
    %3139 = vmatmul.f32.gmra.mxu0 %v3068
    %v3140 = vpop.f32.mrf.mxu0
    %v3141 = vadd.f32 0.0, %v3140
    %3142 = vmatmul.f32.gmra.mxu0 %v3071
    %v3143 = vpop.f32.mrf.mxu0
    %v3144 = vadd.f32 0.0, %v3143
    %3145 = vmatmul.f32.gmra.mxu0 %v3074
    %v3146 = vpop.f32.mrf.mxu0
    %v3147 = vadd.f32 0.0, %v3146
    %3148 = vmatmul.f32.gmra.mxu0 %v3077
    %v3149 = vpop.f32.mrf.mxu0
    %v3150 = vadd.f32 0.0, %v3149
    %3151 = vmatmul.f32.gmra.mxu0 %v3080
    %v3152 = vpop.f32.mrf.mxu0
    %v3153 = vadd.f32 0.0, %v3152
    %3154 = vmatmul.f32.gmra.mxu0 %v3083
    %v3155 = vpop.f32.mrf.mxu0
    %v3156 = vadd.f32 0.0, %v3155
    %3157 = vmatmul.f32.gmra.mxu0 %v3086
    %v3158 = vpop.f32.mrf.mxu0
    %v3159 = vadd.f32 0.0, %v3158
    %3160 = vmatmul.f32.gmra.mxu0 %v3089
    %v3161 = vpop.f32.mrf.mxu0
    %v3162 = vadd.f32 0.0, %v3161
    %3163 = vmatmul.f32.gmra.mxu0 %v3092
    %v3164 = vpop.f32.mrf.mxu0
    %v3165 = vadd.f32 0.0, %v3164
    %3166 = vmatmul.f32.gmra.mxu0 %v3095
    %v3167 = vpop.f32.mrf.mxu0
    %v3168 = vadd.f32 0.0, %v3167
    %3169 = vmatmul.f32.gmra.mxu0 %v3098
    %v3170 = vpop.f32.mrf.mxu0
    %v3171 = vadd.f32 0.0, %v3170
    %3172 = vmatmul.f32.gmra.mxu0 %v3101
    %v3173 = vpop.f32.mrf.mxu0
    %v3174 = vadd.f32 0.0, %v3173
    %3175 = vmatmul.f32.gmra.mxu0 %v3104
    %v3176 = vpop.f32.mrf.mxu0
    %v3177 = vadd.f32 0.0, %v3176
    %3178 = vdwg.mxu0
    %v3179 = vadd.f32 %v2777, %v3141
    %v3180 = vadd.f32 %v2778, %v3144
    %v3181 = vadd.f32 %v2779, %v3147
    %v3182 = vadd.f32 %v2780, %v3150
    %v3183 = vadd.f32 %v2781, %v3153
    %v3184 = vadd.f32 %v2782, %v3156
    %v3185 = vadd.f32 %v2783, %v3159
    %v3186 = vadd.f32 %v2784, %v3162
    %v3187 = vadd.f32 %v2785, %v3165
    %v3188 = vadd.f32 %v2786, %v3168
    %v3189 = vadd.f32 %v2787, %v3171
    %v3190 = vadd.f32 %v2788, %v3174
    %v3191 = vadd.f32 %v2789, %v3177
    %v3192 = vld [vmem:[%s8 + $0x1] sm:$0x1]
    %v3193 = vperm.slane %v3192, 0
    %v3194 = vadd.f32 %v3179, %v3193
    %v3195 = vadd.f32 %v3180, %v3193
    %v3196 = vadd.f32 %v3181, %v3193
    %v3197 = vadd.f32 %v3182, %v3193
    %v3198 = vadd.f32 %v3183, %v3193
    %v3199 = vadd.f32 %v3184, %v3193
    %v3200 = vadd.f32 %v3185, %v3193
    %v3201 = vadd.f32 %v3186, %v3193
    %v3202 = vadd.f32 %v3187, %v3193
    %v3203 = vadd.f32 %v3188, %v3193
    %v3204 = vadd.f32 %v3189, %v3193
    %v3205 = vadd.f32 %v3190, %v3193
    %v3206 = vadd.f32 %v3191, %v3193
    %v3207 = vand.u32 2147483647, %v3194
    %v3208 = vand.u32 2147483647, %v3195
    %v3209 = vand.u32 2147483647, %v3196
    %v3210 = vand.u32 2147483647, %v3197
    %v3211 = vand.u32 2147483647, %v3198
    %v3212 = vand.u32 2147483647, %v3199
    %v3213 = vand.u32 2147483647, %v3200
    %v3214 = vand.u32 2147483647, %v3201
    %v3215 = vand.u32 2147483647, %v3202
    %v3216 = vand.u32 2147483647, %v3203
    %v3217 = vand.u32 2147483647, %v3204
    %v3218 = vand.u32 2147483647, %v3205
    %v3219 = vand.u32 2147483647, %v3206
    %v3220 = vsub.f32 0.0, %v3207
    %v3221 = vsub.f32 0.0, %v3208
    %v3222 = vsub.f32 0.0, %v3209
    %v3223 = vsub.f32 0.0, %v3210
    %v3224 = vsub.f32 0.0, %v3211
    %v3225 = vsub.f32 0.0, %v3212
    %v3226 = vsub.f32 0.0, %v3213
    %v3227 = vsub.f32 0.0, %v3214
    %v3228 = vsub.f32 0.0, %v3215
    %v3229 = vsub.f32 0.0, %v3216
    %v3230 = vsub.f32 0.0, %v3217
    %v3231 = vsub.f32 0.0, %v3218
    %v3232 = vsub.f32 0.0, %v3219
    %v3233 = vmul.f32 %v3220, 1.442695
    %v3234 = vpow.pop %v3233
    %v3235 = vmul.f32 %v3221, 1.442695
    %v3236 = vpow.pop %v3235
    %v3237 = vmul.f32 %v3222, 1.442695
    %v3238 = vpow.pop %v3237
    %v3239 = vmul.f32 %v3223, 1.442695
    %v3240 = vpow.pop %v3239
    %v3241 = vmul.f32 %v3224, 1.442695
    %v3242 = vpow.pop %v3241
    %v3243 = vmul.f32 %v3225, 1.442695
    %v3244 = vpow.pop %v3243
    %v3245 = vmul.f32 %v3226, 1.442695
    %v3246 = vpow.pop %v3245
    %v3247 = vmul.f32 %v3227, 1.442695
    %v3248 = vpow.pop %v3247
    %v3249 = vmul.f32 %v3228, 1.442695
    %v3250 = vpow.pop %v3249
    %v3251 = vmul.f32 %v3229, 1.442695
    %v3252 = vpow.pop %v3251
    %v3253 = vmul.f32 %v3230, 1.442695
    %v3254 = vpow.pop %v3253
    %v3255 = vmul.f32 %v3231, 1.442695
    %v3256 = vpow.pop %v3255
    %v3257 = vmul.f32 %v3232, 1.442695
    %v3258 = vpow.pop %v3257
    %vm3259 = vcmp.ge.f32.partialorder %v3194, 0.0
    %vm3260 = vcmp.ge.f32.partialorder %v3195, 0.0
    %vm3261 = vcmp.ge.f32.partialorder %v3196, 0.0
    %vm3262 = vcmp.ge.f32.partialorder %v3197, 0.0
    %vm3263 = vcmp.ge.f32.partialorder %v3198, 0.0
    %vm3264 = vcmp.ge.f32.partialorder %v3199, 0.0
    %vm3265 = vcmp.ge.f32.partialorder %v3200, 0.0
    %vm3266 = vcmp.ge.f32.partialorder %v3201, 0.0
    %vm3267 = vcmp.ge.f32.partialorder %v3202, 0.0
    %vm3268 = vcmp.ge.f32.partialorder %v3203, 0.0
    %vm3269 = vcmp.ge.f32.partialorder %v3204, 0.0
    %vm3270 = vcmp.ge.f32.partialorder %v3205, 0.0
    %vm3271 = vcmp.ge.f32.partialorder %v3206, 0.0
    %v3272 = vmul.f32 %v3234, 2.0
    %v3273 = vmul.f32 %v3236, 2.0
    %v3274 = vmul.f32 %v3238, 2.0
    %v3275 = vmul.f32 %v3240, 2.0
    %v3276 = vmul.f32 %v3242, 2.0
    %v3277 = vmul.f32 %v3244, 2.0
    %v3278 = vmul.f32 %v3246, 2.0
    %v3279 = vmul.f32 %v3248, 2.0
    %v3280 = vmul.f32 %v3250, 2.0
    %v3281 = vmul.f32 %v3252, 2.0
    %v3282 = vmul.f32 %v3254, 2.0
    %v3283 = vmul.f32 %v3256, 2.0
    %v3284 = vmul.f32 %v3258, 2.0
    %v3285 = vadd.f32 %v3272, 1.0
    %v3286 = vadd.f32 %v3273, 1.0
    %v3287 = vadd.f32 %v3274, 1.0
    %v3288 = vadd.f32 %v3275, 1.0
    %v3289 = vadd.f32 %v3276, 1.0
    %v3290 = vadd.f32 %v3277, 1.0
    %v3291 = vadd.f32 %v3278, 1.0
    %v3292 = vadd.f32 %v3279, 1.0
    %v3293 = vadd.f32 %v3280, 1.0
    %v3294 = vadd.f32 %v3281, 1.0
    %v3295 = vadd.f32 %v3282, 1.0
    %v3296 = vadd.f32 %v3283, 1.0
    %v3297 = vadd.f32 %v3284, 1.0
    %v3298 = vadd.f32 %v3234, 2.0
    %v3299 = vadd.f32 %v3236, 2.0
    %v3300 = vadd.f32 %v3238, 2.0
    %v3301 = vadd.f32 %v3240, 2.0
    %v3302 = vadd.f32 %v3242, 2.0
    %v3303 = vadd.f32 %v3244, 2.0
    %v3304 = vadd.f32 %v3246, 2.0
    %v3305 = vadd.f32 %v3248, 2.0
    %v3306 = vadd.f32 %v3250, 2.0
    %v3307 = vadd.f32 %v3252, 2.0
    %v3308 = vadd.f32 %v3254, 2.0
    %v3309 = vadd.f32 %v3256, 2.0
    %v3310 = vadd.f32 %v3258, 2.0
    %v3311 = vmul.f32 %v3234, %v3298
    %v3312 = vmul.f32 %v3236, %v3299
    %v3313 = vmul.f32 %v3238, %v3300
    %v3314 = vmul.f32 %v3240, %v3301
    %v3315 = vmul.f32 %v3242, %v3302
    %v3316 = vmul.f32 %v3244, %v3303
    %v3317 = vmul.f32 %v3246, %v3304
    %v3318 = vmul.f32 %v3248, %v3305
    %v3319 = vmul.f32 %v3250, %v3306
    %v3320 = vmul.f32 %v3252, %v3307
    %v3321 = vmul.f32 %v3254, %v3308
    %v3322 = vmul.f32 %v3256, %v3309
    %v3323 = vmul.f32 %v3258, %v3310
    %v3324 = vsel %vm3259, %v3285, %v3311
    %v3325 = vsel %vm3260, %v3286, %v3312
    %v3326 = vsel %vm3261, %v3287, %v3313
    %v3327 = vsel %vm3262, %v3288, %v3314
    %v3328 = vsel %vm3263, %v3289, %v3315
    %v3329 = vsel %vm3264, %v3290, %v3316
    %v3330 = vsel %vm3265, %v3291, %v3317
    %v3331 = vsel %vm3266, %v3292, %v3318
    %v3332 = vsel %vm3267, %v3293, %v3319
    %v3333 = vsel %vm3268, %v3294, %v3320
    %v3334 = vsel %vm3269, %v3295, %v3321
    %v3335 = vsel %vm3270, %v3296, %v3322
    %v3336 = vsel %vm3271, %v3297, %v3323
    %v3337 = vmul.f32 %v3272, %v3234
    %v3338 = vmul.f32 %v3273, %v3236
    %v3339 = vmul.f32 %v3274, %v3238
    %v3340 = vmul.f32 %v3275, %v3240
    %v3341 = vmul.f32 %v3276, %v3242
    %v3342 = vmul.f32 %v3277, %v3244
    %v3343 = vmul.f32 %v3278, %v3246
    %v3344 = vmul.f32 %v3279, %v3248
    %v3345 = vmul.f32 %v3280, %v3250
    %v3346 = vmul.f32 %v3281, %v3252
    %v3347 = vmul.f32 %v3282, %v3254
    %v3348 = vmul.f32 %v3283, %v3256
    %v3349 = vmul.f32 %v3284, %v3258
    %v3350 = vadd.f32 %v3285, %v3337
    %v3351 = vadd.f32 %v3286, %v3338
    %v3352 = vadd.f32 %v3287, %v3339
    %v3353 = vadd.f32 %v3288, %v3340
    %v3354 = vadd.f32 %v3289, %v3341
    %v3355 = vadd.f32 %v3290, %v3342
    %v3356 = vadd.f32 %v3291, %v3343
    %v3357 = vadd.f32 %v3292, %v3344
    %v3358 = vadd.f32 %v3293, %v3345
    %v3359 = vadd.f32 %v3294, %v3346
    %v3360 = vadd.f32 %v3295, %v3347
    %v3361 = vadd.f32 %v3296, %v3348
    %v3362 = vadd.f32 %v3297, %v3349
    %v3363 = vadd.f32 %v3311, 2.0
    %v3364 = vadd.f32 %v3312, 2.0
    %v3365 = vadd.f32 %v3313, 2.0
    %v3366 = vadd.f32 %v3314, 2.0
    %v3367 = vadd.f32 %v3315, 2.0
    %v3368 = vadd.f32 %v3316, 2.0
    %v3369 = vadd.f32 %v3317, 2.0
    %v3370 = vadd.f32 %v3318, 2.0
    %v3371 = vadd.f32 %v3319, 2.0
    %v3372 = vadd.f32 %v3320, 2.0
    %v3373 = vadd.f32 %v3321, 2.0
    %v3374 = vadd.f32 %v3322, 2.0
    %v3375 = vadd.f32 %v3323, 2.0
    %v3376 = vsel %vm3259, %v3350, %v3363
    %v3377 = vsel %vm3260, %v3351, %v3364
    %v3378 = vsel %vm3261, %v3352, %v3365
    %v3379 = vsel %vm3262, %v3353, %v3366
    %v3380 = vsel %vm3263, %v3354, %v3367
    %v3381 = vsel %vm3264, %v3355, %v3368
    %v3382 = vsel %vm3265, %v3356, %v3369
    %v3383 = vsel %vm3266, %v3357, %v3370
    %v3384 = vsel %vm3267, %v3358, %v3371
    %v3385 = vsel %vm3268, %v3359, %v3372
    %v3386 = vsel %vm3269, %v3360, %v3373
    %v3387 = vsel %vm3270, %v3361, %v3374
    %v3388 = vsel %vm3271, %v3362, %v3375
    %v3389 = vmul.f32 %v3194, %v3324
    %v3390 = vmul.f32 %v3195, %v3325
    %v3391 = vmul.f32 %v3196, %v3326
    %v3392 = vmul.f32 %v3197, %v3327
    %v3393 = vmul.f32 %v3198, %v3328
    %v3394 = vmul.f32 %v3199, %v3329
    %v3395 = vmul.f32 %v3200, %v3330
    %v3396 = vmul.f32 %v3201, %v3331
    %v3397 = vmul.f32 %v3202, %v3332
    %v3398 = vmul.f32 %v3203, %v3333
    %v3399 = vmul.f32 %v3204, %v3334
    %v3400 = vmul.f32 %v3205, %v3335
    %v3401 = vmul.f32 %v3206, %v3336
    %v3402 = vrcp.pop %v3376
    %v3403 = vrcp.pop %v3377
    %v3404 = vrcp.pop %v3378
    %v3405 = vrcp.pop %v3379
    %v3406 = vrcp.pop %v3380
    %v3407 = vrcp.pop %v3381
    %v3408 = vrcp.pop %v3382
    %v3409 = vrcp.pop %v3383
    %v3410 = vrcp.pop %v3384
    %v3411 = vrcp.pop %v3385
    %v3412 = vrcp.pop %v3386
    %v3413 = vrcp.pop %v3387
    %v3414 = vrcp.pop %v3388
    %v3415 = vmul.f32 %v3389, %v3402
    %v3416 = vmul.f32 %v3390, %v3403
    %v3417 = vmul.f32 %v3391, %v3404
    %v3418 = vmul.f32 %v3392, %v3405
    %v3419 = vmul.f32 %v3393, %v3406
    %v3420 = vmul.f32 %v3394, %v3407
    %v3421 = vmul.f32 %v3395, %v3408
    %v3422 = vmul.f32 %v3396, %v3409
    %v3423 = vmul.f32 %v3397, %v3410
    %v3424 = vmul.f32 %v3398, %v3411
    %v3425 = vmul.f32 %v3399, %v3412
    %v3426 = vmul.f32 %v3400, %v3413
    %v3427 = vmul.f32 %v3401, %v3414
    %v3428 = vadd.f32 %v3415, %v3416
    %v3429 = vadd.f32 %v3428, %v3417
    %v3430 = vadd.f32 %v3429, %v3418
    %v3431 = vadd.f32 %v3430, %v3419
    %v3432 = vadd.f32 %v3431, %v3420
    %v3433 = vadd.f32 %v3432, %v3421
    %v3434 = vadd.f32 %v3433, %v3422
    %v3435 = vadd.f32 %v3434, %v3423
    %v3436 = vadd.f32 %v3435, %v3424
    %v3437 = vadd.f32 %v3436, %v3425
    %v3438 = vadd.f32 %v3437, %v3426
    %v3439 = vsel %vm1342, %v3427, 0.0
    %v3440 = vadd.f32 %v3438, %v3439
    %v3441 = vrot.slane %v3440, 4
    %v3442 = vadd.f32 %v3440, %v3441
    %v3443 = vrot.slane %v3442, 2
    %v3444 = vadd.f32 %v3442, %v3443
    %v3445 = vrot.slane %v3444, 1
    %v3446 = vadd.f32 %v3444, %v3445
    %v3447 = vmul.f32 %v3446, 0.010204081
    %v3448 = vmul.f32 %v3415, %v3415
    %v3449 = vmul.f32 %v3416, %v3416
    %v3450 = vmul.f32 %v3417, %v3417
    %v3451 = vmul.f32 %v3418, %v3418
    %v3452 = vmul.f32 %v3419, %v3419
    %v3453 = vmul.f32 %v3420, %v3420
    %v3454 = vmul.f32 %v3421, %v3421
    %v3455 = vmul.f32 %v3422, %v3422
    %v3456 = vmul.f32 %v3423, %v3423
    %v3457 = vmul.f32 %v3424, %v3424
    %v3458 = vmul.f32 %v3425, %v3425
    %v3459 = vmul.f32 %v3426, %v3426
    %v3460 = vmul.f32 %v3427, %v3427
    %v3461 = vadd.f32 %v3448, %v3449
    %v3462 = vadd.f32 %v3461, %v3450
    %v3463 = vadd.f32 %v3462, %v3451
    %v3464 = vadd.f32 %v3463, %v3452
    %v3465 = vadd.f32 %v3464, %v3453
    %v3466 = vadd.f32 %v3465, %v3454
    %v3467 = vadd.f32 %v3466, %v3455
    %v3468 = vadd.f32 %v3467, %v3456
    %v3469 = vadd.f32 %v3468, %v3457
    %v3470 = vadd.f32 %v3469, %v3458
    %v3471 = vadd.f32 %v3470, %v3459
    %v3472 = vsel %vm1342, %v3460, 0.0
    %v3473 = vadd.f32 %v3471, %v3472
    %v3474 = vrot.slane %v3473, 4
    %v3475 = vadd.f32 %v3473, %v3474
    %v3476 = vrot.slane %v3475, 2
    %v3477 = vadd.f32 %v3475, %v3476
    %v3478 = vrot.slane %v3477, 1
    %v3479 = vadd.f32 %v3477, %v3478
    %v3480 = vmul.f32 %v3479, 0.010204081
    %v3481 = vmul.f32 %v3447, %v3447
    %v3482 = vsub.f32 %v3480, %v3481
    %v3483 = vmax.f32 %v3482, 0.0
    %v3484 = vadd.f32 %v3483, 1e-05
    %v3485 = vrsqrt.pop %v3484
    %v3486 = vmul.f32 %v3485, %v3484
    %v3487 = vmul.f32 %v3486, %v3485
    %v3488 = vmul.f32 0.5, %v3487
    %v3489 = vsub.f32 1.5, %v3488
    %v3490 = vmul.f32 %v3485, %v3489
    %vm3491 = vweird.f32 %v3484
    %vm3492 = vweird.f32 %v3485
    %vm3493 = vmor %vm3491, %vm3492
    %v3494 = vsel %vm3493, %v3485, %v3490
    %v3495 = vld [vmem:[%s9 + $0x1] sm:$0x1]
    %v3496 = vmul.f32 %v3494, %v3495
    %v3497 = vld [vmem:[%s10 + $0x1] sm:$0x1]
    %v3498 = vmul.f32 %v3447, %v3496
    %v3499 = vsub.f32 %v3497, %v3498
    %v3500 = vperm.slane %v3496, 0
    %v3501 = vmul.f32 %v3415, %v3500
    %v3502 = vmul.f32 %v3416, %v3500
    %v3503 = vmul.f32 %v3417, %v3500
    %v3504 = vmul.f32 %v3418, %v3500
    %v3505 = vmul.f32 %v3419, %v3500
    %v3506 = vmul.f32 %v3420, %v3500
    %v3507 = vmul.f32 %v3421, %v3500
    %v3508 = vmul.f32 %v3422, %v3500
    %v3509 = vmul.f32 %v3423, %v3500
    %v3510 = vmul.f32 %v3424, %v3500
    %v3511 = vmul.f32 %v3425, %v3500
    %v3512 = vmul.f32 %v3426, %v3500
    %v3513 = vmul.f32 %v3427, %v3500
    %v3514 = vperm.slane %v3499, 0
    %v3515 = vadd.f32 %v3501, %v3514
    %v3516 = vadd.f32 %v3502, %v3514
    %v3517 = vadd.f32 %v3503, %v3514
    %v3518 = vadd.f32 %v3504, %v3514
    %v3519 = vadd.f32 %v3505, %v3514
    %v3520 = vadd.f32 %v3506, %v3514
    %v3521 = vadd.f32 %v3507, %v3514
    %v3522 = vadd.f32 %v3508, %v3514
    %v3523 = vadd.f32 %v3509, %v3514
    %v3524 = vadd.f32 %v3510, %v3514
    %v3525 = vadd.f32 %v3511, %v3514
    %v3526 = vadd.f32 %v3512, %v3514
    %v3527 = vadd.f32 %v3513, %v3514
    %v3528 = vld [vmem:[%s4] sm:$0xff]
    %v3529 = vld [vmem:[%s4 + $0x8] sm:$0xff]
    %v3530 = vld [vmem:[%s4 + $0x10] sm:$0xff]
    %v3531 = vld [vmem:[%s4 + $0x18] sm:$0xff]
    %v3532 = vld [vmem:[%s4 + $0x20] sm:$0xff]
    %v3533 = vld [vmem:[%s4 + $0x28] sm:$0xff]
    %v3534 = vld [vmem:[%s4 + $0x30] sm:$0xff]
    %v3535 = vld [vmem:[%s4 + $0x38] sm:$0xff]
    %v3536 = vld [vmem:[%s4 + $0x40] sm:$0xff]
    %vm3537 = vcmask 801792
    %v3539 = vsel %vm3537, %v3528, 0
    %v3542 = vsel %vm3537, %v3529, 0
    %v3545 = vsel %vm3537, %v3530, 0
    %v3548 = vsel %vm3537, %v3531, 0
    %v3551 = vsel %vm3537, %v3532, 0
    %v3554 = vsel %vm3537, %v3533, 0
    %v3557 = vsel %vm3537, %v3534, 0
    %v3560 = vsel %vm3537, %v3535, 0
    %v3563 = vsel %vm3537, %v3536, 0
    %v3566 = vsel %vm1342, %v3527, 0
    %3568 = vmatpush.msra.mxu0 0.0
    %3569 = vmatpush.msra.mxu0 0.0
    %3570 = vmatpush.msra.mxu0 0.0
    %3571 = vmatpush.msra.mxu0 %v3566
    %3572 = vmatpush.msra.mxu0 %v3526
    %3573 = vmatpush.msra.mxu0 %v3525
    %3574 = vmatpush.msra.mxu0 %v3524
    %3575 = vmatpush.msra.mxu0 %v3523
    %3576 = vmatpush.msra.mxu0 %v3522
    %3577 = vmatpush.msra.mxu0 %v3521
    %3578 = vmatpush.msra.mxu0 %v3520
    %3579 = vmatpush.msra.mxu0 %v3519
    %3580 = vmatpush.msra.mxu0 %v3518
    %3581 = vmatpush.msra.mxu0 %v3517
    %3582 = vmatpush.msra.mxu0 %v3516
    %3583 = vmatpush.msra.mxu0 %v3515
    %3584 = vmatmul.f32.gmra.mxu0 %v3539
    %v3585 = vpop.f32.mrf.mxu0
    %v3586 = vadd.f32 0.0, %v3585
    %3587 = vmatmul.f32.gmra.mxu0 %v3542
    %v3588 = vpop.f32.mrf.mxu0
    %v3589 = vadd.f32 0.0, %v3588
    %3590 = vmatmul.f32.gmra.mxu0 %v3545
    %v3591 = vpop.f32.mrf.mxu0
    %v3592 = vadd.f32 0.0, %v3591
    %3593 = vmatmul.f32.gmra.mxu0 %v3548
    %v3594 = vpop.f32.mrf.mxu0
    %v3595 = vadd.f32 0.0, %v3594
    %3596 = vmatmul.f32.gmra.mxu0 %v3551
    %v3597 = vpop.f32.mrf.mxu0
    %v3598 = vadd.f32 0.0, %v3597
    %3599 = vmatmul.f32.gmra.mxu0 %v3554
    %v3600 = vpop.f32.mrf.mxu0
    %v3601 = vadd.f32 0.0, %v3600
    %3602 = vmatmul.f32.gmra.mxu0 %v3557
    %v3603 = vpop.f32.mrf.mxu0
    %v3604 = vadd.f32 0.0, %v3603
    %3605 = vmatmul.f32.gmra.mxu0 %v3560
    %v3606 = vpop.f32.mrf.mxu0
    %v3607 = vadd.f32 0.0, %v3606
    %3608 = vmatmul.f32.gmra.mxu0 %v3563
    %v3609 = vpop.f32.mrf.mxu0
    %v3610 = vadd.f32 0.0, %v3609
    %3611 = vdwg.mxu0
    %s3612 = scalar_lea.vmem %s2, 512
    %v3613 = vld [vmem:[%s3612] sm:$0xff]
    %v3614 = vld [vmem:[%s3612 + $0x8] sm:$0xff]
    %v3615 = vld [vmem:[%s3612 + $0x10] sm:$0xff]
    %v3616 = vld [vmem:[%s3612 + $0x18] sm:$0xff]
    %v3617 = vld [vmem:[%s3612 + $0x20] sm:$0xff]
    %v3618 = vld [vmem:[%s3612 + $0x28] sm:$0xff]
    %v3619 = vld [vmem:[%s3612 + $0x30] sm:$0xff]
    %v3620 = vld [vmem:[%s3612 + $0x38] sm:$0xff]
    %v3621 = vld [vmem:[%s3612 + $0x40] sm:$0xff]
    %v3622 = vld [vmem:[%s3612 + $0x48] sm:$0xff]
    %v3623 = vld [vmem:[%s3612 + $0x50] sm:$0xff]
    %v3624 = vld [vmem:[%s3612 + $0x58] sm:$0xff]
    %v3625 = vld [vmem:[%s3612 + $0x60] sm:$0xff]
    %v3626 = vld [vmem:[%s3612 + $0x68] sm:$0xff]
    %v3627 = vld [vmem:[%s3612 + $0x70] sm:$0xff]
    %v3628 = vld [vmem:[%s3612 + $0x78] sm:$0xff]
    %s3629 = scalar_lea.vmem %s4, 72
    %v3630 = vld [vmem:[%s3629] sm:$0xff]
    %v3631 = vld [vmem:[%s3629 + $0x8] sm:$0xff]
    %v3632 = vld [vmem:[%s3629 + $0x10] sm:$0xff]
    %v3633 = vld [vmem:[%s3629 + $0x18] sm:$0xff]
    %v3634 = vld [vmem:[%s3629 + $0x20] sm:$0xff]
    %v3635 = vld [vmem:[%s3629 + $0x28] sm:$0xff]
    %v3636 = vld [vmem:[%s3629 + $0x30] sm:$0xff]
    %v3637 = vld [vmem:[%s3629 + $0x38] sm:$0xff]
    %v3638 = vld [vmem:[%s3629 + $0x40] sm:$0xff]
    %v3640 = vsel %vm3537, %v3630, 0
    %v3643 = vsel %vm3537, %v3631, 0
    %v3646 = vsel %vm3537, %v3632, 0
    %v3649 = vsel %vm3537, %v3633, 0
    %v3652 = vsel %vm3537, %v3634, 0
    %v3655 = vsel %vm3537, %v3635, 0
    %v3658 = vsel %vm3537, %v3636, 0
    %v3661 = vsel %vm3537, %v3637, 0
    %v3664 = vsel %vm3537, %v3638, 0
    %3666 = vmatpush.msra.mxu0 0.0
    %3667 = vmatpush.msra.mxu0 0.0
    %3668 = vmatpush.msra.mxu0 0.0
    %3669 = vmatpush.msra.mxu0 %v3566
    %3670 = vmatpush.msra.mxu0 %v3526
    %3671 = vmatpush.msra.mxu0 %v3525
    %3672 = vmatpush.msra.mxu0 %v3524
    %3673 = vmatpush.msra.mxu0 %v3523
    %3674 = vmatpush.msra.mxu0 %v3522
    %3675 = vmatpush.msra.mxu0 %v3521
    %3676 = vmatpush.msra.mxu0 %v3520
    %3677 = vmatpush.msra.mxu0 %v3519
    %3678 = vmatpush.msra.mxu0 %v3518
    %3679 = vmatpush.msra.mxu0 %v3517
    %3680 = vmatpush.msra.mxu0 %v3516
    %3681 = vmatpush.msra.mxu0 %v3515
    %3682 = vmatmul.f32.gmra.mxu0 %v3640
    %v3683 = vpop.f32.mrf.mxu0
    %v3684 = vadd.f32 0.0, %v3683
    %3685 = vmatmul.f32.gmra.mxu0 %v3643
    %v3686 = vpop.f32.mrf.mxu0
    %v3687 = vadd.f32 0.0, %v3686
    %3688 = vmatmul.f32.gmra.mxu0 %v3646
    %v3689 = vpop.f32.mrf.mxu0
    %v3690 = vadd.f32 0.0, %v3689
    %3691 = vmatmul.f32.gmra.mxu0 %v3649
    %v3692 = vpop.f32.mrf.mxu0
    %v3693 = vadd.f32 0.0, %v3692
    %3694 = vmatmul.f32.gmra.mxu0 %v3652
    %v3695 = vpop.f32.mrf.mxu0
    %v3696 = vadd.f32 0.0, %v3695
    %3697 = vmatmul.f32.gmra.mxu0 %v3655
    %v3698 = vpop.f32.mrf.mxu0
    %v3699 = vadd.f32 0.0, %v3698
    %3700 = vmatmul.f32.gmra.mxu0 %v3658
    %v3701 = vpop.f32.mrf.mxu0
    %v3702 = vadd.f32 0.0, %v3701
    %3703 = vmatmul.f32.gmra.mxu0 %v3661
    %v3704 = vpop.f32.mrf.mxu0
    %v3705 = vadd.f32 0.0, %v3704
    %3706 = vmatmul.f32.gmra.mxu0 %v3664
    %v3707 = vpop.f32.mrf.mxu0
    %v3708 = vadd.f32 0.0, %v3707
    %3709 = vdwg.mxu0
    %s3710 = scalar_lea.vmem %s2, 640
    %v3711 = vld [vmem:[%s3710] sm:$0xff]
    %v3712 = vld [vmem:[%s3710 + $0x8] sm:$0xff]
    %v3713 = vld [vmem:[%s3710 + $0x10] sm:$0xff]
    %v3714 = vld [vmem:[%s3710 + $0x18] sm:$0xff]
    %v3715 = vld [vmem:[%s3710 + $0x20] sm:$0xff]
    %v3716 = vld [vmem:[%s3710 + $0x28] sm:$0xff]
    %v3717 = vld [vmem:[%s3710 + $0x30] sm:$0xff]
    %v3718 = vld [vmem:[%s3710 + $0x38] sm:$0xff]
    %v3719 = vld [vmem:[%s3710 + $0x40] sm:$0xff]
    %v3720 = vld [vmem:[%s3710 + $0x48] sm:$0xff]
    %v3721 = vld [vmem:[%s3710 + $0x50] sm:$0xff]
    %v3722 = vld [vmem:[%s3710 + $0x58] sm:$0xff]
    %v3723 = vld [vmem:[%s3710 + $0x60] sm:$0xff]
    %v3724 = vld [vmem:[%s3710 + $0x68] sm:$0xff]
    %v3725 = vld [vmem:[%s3710 + $0x70] sm:$0xff]
    %v3726 = vld [vmem:[%s3710 + $0x78] sm:$0xff]
    %3727 = vmatpush.msra.mxu0 %v3726
    %3728 = vmatpush.msra.mxu0 %v3725
    %3729 = vmatpush.msra.mxu0 %v3724
    %3730 = vmatpush.msra.mxu0 %v3723
    %3731 = vmatpush.msra.mxu0 %v3722
    %3732 = vmatpush.msra.mxu0 %v3721
    %3733 = vmatpush.msra.mxu0 %v3720
    %3734 = vmatpush.msra.mxu0 %v3719
    %3735 = vmatpush.msra.mxu0 %v3718
    %3736 = vmatpush.msra.mxu0 %v3717
    %3737 = vmatpush.msra.mxu0 %v3716
    %3738 = vmatpush.msra.mxu0 %v3715
    %3739 = vmatpush.msra.mxu0 %v3714
    %3740 = vmatpush.msra.mxu0 %v3713
    %3741 = vmatpush.msra.mxu0 %v3712
    %3742 = vmatpush.msra.mxu0 %v3711
    %3743 = vmatmul.f32.gmra.mxu0 %v3684
    %v3744 = vpop.f32.mrf.mxu0
    %v3745 = vadd.f32 0.0, %v3744
    %3746 = vmatmul.f32.gmra.mxu0 %v3687
    %v3747 = vpop.f32.mrf.mxu0
    %v3748 = vadd.f32 0.0, %v3747
    %3749 = vmatmul.f32.gmra.mxu0 %v3690
    %v3750 = vpop.f32.mrf.mxu0
    %v3751 = vadd.f32 0.0, %v3750
    %3752 = vmatmul.f32.gmra.mxu0 %v3693
    %v3753 = vpop.f32.mrf.mxu0
    %v3754 = vadd.f32 0.0, %v3753
    %3755 = vmatmul.f32.gmra.mxu0 %v3696
    %v3756 = vpop.f32.mrf.mxu0
    %v3757 = vadd.f32 0.0, %v3756
    %3758 = vmatmul.f32.gmra.mxu0 %v3699
    %v3759 = vpop.f32.mrf.mxu0
    %v3760 = vadd.f32 0.0, %v3759
    %3761 = vmatmul.f32.gmra.mxu0 %v3702
    %v3762 = vpop.f32.mrf.mxu0
    %v3763 = vadd.f32 0.0, %v3762
    %3764 = vmatmul.f32.gmra.mxu0 %v3705
    %v3765 = vpop.f32.mrf.mxu0
    %v3766 = vadd.f32 0.0, %v3765
    %3767 = vmatmul.f32.gmra.mxu0 %v3708
    %v3768 = vpop.f32.mrf.mxu0
    %v3769 = vadd.f32 0.0, %v3768
    %3770 = vdwg.mxu0
    %3771 = vmatpush.msra.mxu0 %v3628
    %3772 = vmatpush.msra.mxu0 %v3627
    %3773 = vmatpush.msra.mxu0 %v3626
    %3774 = vmatpush.msra.mxu0 %v3625
    %3775 = vmatpush.msra.mxu0 %v3624
    %3776 = vmatpush.msra.mxu0 %v3623
    %3777 = vmatpush.msra.mxu0 %v3622
    %3778 = vmatpush.msra.mxu0 %v3621
    %3779 = vmatpush.msra.mxu0 %v3620
    %3780 = vmatpush.msra.mxu0 %v3619
    %3781 = vmatpush.msra.mxu0 %v3618
    %3782 = vmatpush.msra.mxu0 %v3617
    %3783 = vmatpush.msra.mxu0 %v3616
    %3784 = vmatpush.msra.mxu0 %v3615
    %3785 = vmatpush.msra.mxu0 %v3614
    %3786 = vmatpush.msra.mxu0 %v3613
    %3787 = vmatmul.f32.gmra.mxu0 %v3586
    %v3788 = vpop.f32.mrf.mxu0
    %v3789 = vadd.f32 %v3745, %v3788
    %3790 = vmatmul.f32.gmra.mxu0 %v3589
    %v3791 = vpop.f32.mrf.mxu0
    %v3792 = vadd.f32 %v3748, %v3791
    %3793 = vmatmul.f32.gmra.mxu0 %v3592
    %v3794 = vpop.f32.mrf.mxu0
    %v3795 = vadd.f32 %v3751, %v3794
    %3796 = vmatmul.f32.gmra.mxu0 %v3595
    %v3797 = vpop.f32.mrf.mxu0
    %v3798 = vadd.f32 %v3754, %v3797
    %3799 = vmatmul.f32.gmra.mxu0 %v3598
    %v3800 = vpop.f32.mrf.mxu0
    %v3801 = vadd.f32 %v3757, %v3800
    %3802 = vmatmul.f32.gmra.mxu0 %v3601
    %v3803 = vpop.f32.mrf.mxu0
    %v3804 = vadd.f32 %v3760, %v3803
    %3805 = vmatmul.f32.gmra.mxu0 %v3604
    %v3806 = vpop.f32.mrf.mxu0
    %v3807 = vadd.f32 %v3763, %v3806
    %3808 = vmatmul.f32.gmra.mxu0 %v3607
    %v3809 = vpop.f32.mrf.mxu0
    %v3810 = vadd.f32 %v3766, %v3809
    %3811 = vmatmul.f32.gmra.mxu0 %v3610
    %v3812 = vpop.f32.mrf.mxu0
    %v3813 = vadd.f32 %v3769, %v3812
    %3814 = vdwg.mxu0
    %s3815 = scalar_lea.vmem %s4, 144
    %v3816 = vld [vmem:[%s3815] sm:$0xff]
    %v3817 = vld [vmem:[%s3815 + $0x8] sm:$0xff]
    %v3818 = vld [vmem:[%s3815 + $0x10] sm:$0xff]
    %v3819 = vld [vmem:[%s3815 + $0x18] sm:$0xff]
    %v3820 = vld [vmem:[%s3815 + $0x20] sm:$0xff]
    %v3821 = vld [vmem:[%s3815 + $0x28] sm:$0xff]
    %v3822 = vld [vmem:[%s3815 + $0x30] sm:$0xff]
    %v3823 = vld [vmem:[%s3815 + $0x38] sm:$0xff]
    %v3824 = vld [vmem:[%s3815 + $0x40] sm:$0xff]
    %v3826 = vsel %vm3537, %v3816, 0
    %v3829 = vsel %vm3537, %v3817, 0
    %v3832 = vsel %vm3537, %v3818, 0
    %v3835 = vsel %vm3537, %v3819, 0
    %v3838 = vsel %vm3537, %v3820, 0
    %v3841 = vsel %vm3537, %v3821, 0
    %v3844 = vsel %vm3537, %v3822, 0
    %v3847 = vsel %vm3537, %v3823, 0
    %v3850 = vsel %vm3537, %v3824, 0
    %3852 = vmatpush.msra.mxu0 0.0
    %3853 = vmatpush.msra.mxu0 0.0
    %3854 = vmatpush.msra.mxu0 0.0
    %3855 = vmatpush.msra.mxu0 %v3566
    %3856 = vmatpush.msra.mxu0 %v3526
    %3857 = vmatpush.msra.mxu0 %v3525
    %3858 = vmatpush.msra.mxu0 %v3524
    %3859 = vmatpush.msra.mxu0 %v3523
    %3860 = vmatpush.msra.mxu0 %v3522
    %3861 = vmatpush.msra.mxu0 %v3521
    %3862 = vmatpush.msra.mxu0 %v3520
    %3863 = vmatpush.msra.mxu0 %v3519
    %3864 = vmatpush.msra.mxu0 %v3518
    %3865 = vmatpush.msra.mxu0 %v3517
    %3866 = vmatpush.msra.mxu0 %v3516
    %3867 = vmatpush.msra.mxu0 %v3515
    %3868 = vmatmul.f32.gmra.mxu0 %v3826
    %v3869 = vpop.f32.mrf.mxu0
    %v3870 = vadd.f32 0.0, %v3869
    %3871 = vmatmul.f32.gmra.mxu0 %v3829
    %v3872 = vpop.f32.mrf.mxu0
    %v3873 = vadd.f32 0.0, %v3872
    %3874 = vmatmul.f32.gmra.mxu0 %v3832
    %v3875 = vpop.f32.mrf.mxu0
    %v3876 = vadd.f32 0.0, %v3875
    %3877 = vmatmul.f32.gmra.mxu0 %v3835
    %v3878 = vpop.f32.mrf.mxu0
    %v3879 = vadd.f32 0.0, %v3878
    %3880 = vmatmul.f32.gmra.mxu0 %v3838
    %v3881 = vpop.f32.mrf.mxu0
    %v3882 = vadd.f32 0.0, %v3881
    %3883 = vmatmul.f32.gmra.mxu0 %v3841
    %v3884 = vpop.f32.mrf.mxu0
    %v3885 = vadd.f32 0.0, %v3884
    %3886 = vmatmul.f32.gmra.mxu0 %v3844
    %v3887 = vpop.f32.mrf.mxu0
    %v3888 = vadd.f32 0.0, %v3887
    %3889 = vmatmul.f32.gmra.mxu0 %v3847
    %v3890 = vpop.f32.mrf.mxu0
    %v3891 = vadd.f32 0.0, %v3890
    %3892 = vmatmul.f32.gmra.mxu0 %v3850
    %v3893 = vpop.f32.mrf.mxu0
    %v3894 = vadd.f32 0.0, %v3893
    %3895 = vdwg.mxu0
    %s3896 = scalar_lea.vmem %s2, 768
    %v3897 = vld [vmem:[%s3896] sm:$0xff]
    %v3898 = vld [vmem:[%s3896 + $0x8] sm:$0xff]
    %v3899 = vld [vmem:[%s3896 + $0x10] sm:$0xff]
    %v3900 = vld [vmem:[%s3896 + $0x18] sm:$0xff]
    %v3901 = vld [vmem:[%s3896 + $0x20] sm:$0xff]
    %v3902 = vld [vmem:[%s3896 + $0x28] sm:$0xff]
    %v3903 = vld [vmem:[%s3896 + $0x30] sm:$0xff]
    %v3904 = vld [vmem:[%s3896 + $0x38] sm:$0xff]
    %v3905 = vld [vmem:[%s3896 + $0x40] sm:$0xff]
    %v3906 = vld [vmem:[%s3896 + $0x48] sm:$0xff]
    %v3907 = vld [vmem:[%s3896 + $0x50] sm:$0xff]
    %v3908 = vld [vmem:[%s3896 + $0x58] sm:$0xff]
    %v3909 = vld [vmem:[%s3896 + $0x60] sm:$0xff]
    %v3910 = vld [vmem:[%s3896 + $0x68] sm:$0xff]
    %v3911 = vld [vmem:[%s3896 + $0x70] sm:$0xff]
    %v3912 = vld [vmem:[%s3896 + $0x78] sm:$0xff]
    %3913 = vmatpush.msra.mxu0 %v3912
    %3914 = vmatpush.msra.mxu0 %v3911
    %3915 = vmatpush.msra.mxu0 %v3910
    %3916 = vmatpush.msra.mxu0 %v3909
    %3917 = vmatpush.msra.mxu0 %v3908
    %3918 = vmatpush.msra.mxu0 %v3907
    %3919 = vmatpush.msra.mxu0 %v3906
    %3920 = vmatpush.msra.mxu0 %v3905
    %3921 = vmatpush.msra.mxu0 %v3904
    %3922 = vmatpush.msra.mxu0 %v3903
    %3923 = vmatpush.msra.mxu0 %v3902
    %3924 = vmatpush.msra.mxu0 %v3901
    %3925 = vmatpush.msra.mxu0 %v3900
    %3926 = vmatpush.msra.mxu0 %v3899
    %3927 = vmatpush.msra.mxu0 %v3898
    %3928 = vmatpush.msra.mxu0 %v3897
    %3929 = vmatmul.f32.gmra.mxu0 %v3870
    %v3930 = vpop.f32.mrf.mxu0
    %v3931 = vadd.f32 0.0, %v3930
    %3932 = vmatmul.f32.gmra.mxu0 %v3873
    %v3933 = vpop.f32.mrf.mxu0
    %v3934 = vadd.f32 0.0, %v3933
    %3935 = vmatmul.f32.gmra.mxu0 %v3876
    %v3936 = vpop.f32.mrf.mxu0
    %v3937 = vadd.f32 0.0, %v3936
    %3938 = vmatmul.f32.gmra.mxu0 %v3879
    %v3939 = vpop.f32.mrf.mxu0
    %v3940 = vadd.f32 0.0, %v3939
    %3941 = vmatmul.f32.gmra.mxu0 %v3882
    %v3942 = vpop.f32.mrf.mxu0
    %v3943 = vadd.f32 0.0, %v3942
    %3944 = vmatmul.f32.gmra.mxu0 %v3885
    %v3945 = vpop.f32.mrf.mxu0
    %v3946 = vadd.f32 0.0, %v3945
    %3947 = vmatmul.f32.gmra.mxu0 %v3888
    %v3948 = vpop.f32.mrf.mxu0
    %v3949 = vadd.f32 0.0, %v3948
    %3950 = vmatmul.f32.gmra.mxu0 %v3891
    %v3951 = vpop.f32.mrf.mxu0
    %v3952 = vadd.f32 0.0, %v3951
    %3953 = vmatmul.f32.gmra.mxu0 %v3894
    %v3954 = vpop.f32.mrf.mxu0
    %v3955 = vadd.f32 0.0, %v3954
    %3956 = vdwg.mxu0
    %v3957 = vadd.f32 %v3789, %v3931
    %v3958 = vadd.f32 %v3792, %v3934
    %v3959 = vadd.f32 %v3795, %v3937
    %v3960 = vadd.f32 %v3798, %v3940
    %v3961 = vadd.f32 %v3801, %v3943
    %v3962 = vadd.f32 %v3804, %v3946
    %v3963 = vadd.f32 %v3807, %v3949
    %v3964 = vadd.f32 %v3810, %v3952
    %v3965 = vadd.f32 %v3813, %v3955
    %s3966 = scalar_lea.vmem %s4, 216
    %v3967 = vld [vmem:[%s3966] sm:$0xff]
    %v3968 = vld [vmem:[%s3966 + $0x8] sm:$0xff]
    %v3969 = vld [vmem:[%s3966 + $0x10] sm:$0xff]
    %v3970 = vld [vmem:[%s3966 + $0x18] sm:$0xff]
    %v3971 = vld [vmem:[%s3966 + $0x20] sm:$0xff]
    %v3972 = vld [vmem:[%s3966 + $0x28] sm:$0xff]
    %v3973 = vld [vmem:[%s3966 + $0x30] sm:$0xff]
    %v3974 = vld [vmem:[%s3966 + $0x38] sm:$0xff]
    %v3975 = vld [vmem:[%s3966 + $0x40] sm:$0xff]
    %v3977 = vsel %vm3537, %v3967, 0
    %v3980 = vsel %vm3537, %v3968, 0
    %v3983 = vsel %vm3537, %v3969, 0
    %v3986 = vsel %vm3537, %v3970, 0
    %v3989 = vsel %vm3537, %v3971, 0
    %v3992 = vsel %vm3537, %v3972, 0
    %v3995 = vsel %vm3537, %v3973, 0
    %v3998 = vsel %vm3537, %v3974, 0
    %v4001 = vsel %vm3537, %v3975, 0
    %4003 = vmatpush.msra.mxu0 0.0
    %4004 = vmatpush.msra.mxu0 0.0
    %4005 = vmatpush.msra.mxu0 0.0
    %4006 = vmatpush.msra.mxu0 %v3566
    %4007 = vmatpush.msra.mxu0 %v3526
    %4008 = vmatpush.msra.mxu0 %v3525
    %4009 = vmatpush.msra.mxu0 %v3524
    %4010 = vmatpush.msra.mxu0 %v3523
    %4011 = vmatpush.msra.mxu0 %v3522
    %4012 = vmatpush.msra.mxu0 %v3521
    %4013 = vmatpush.msra.mxu0 %v3520
    %4014 = vmatpush.msra.mxu0 %v3519
    %4015 = vmatpush.msra.mxu0 %v3518
    %4016 = vmatpush.msra.mxu0 %v3517
    %4017 = vmatpush.msra.mxu0 %v3516
    %4018 = vmatpush.msra.mxu0 %v3515
    %4019 = vmatmul.f32.gmra.mxu0 %v3977
    %v4020 = vpop.f32.mrf.mxu0
    %v4021 = vadd.f32 0.0, %v4020
    %4022 = vmatmul.f32.gmra.mxu0 %v3980
    %v4023 = vpop.f32.mrf.mxu0
    %v4024 = vadd.f32 0.0, %v4023
    %4025 = vmatmul.f32.gmra.mxu0 %v3983
    %v4026 = vpop.f32.mrf.mxu0
    %v4027 = vadd.f32 0.0, %v4026
    %4028 = vmatmul.f32.gmra.mxu0 %v3986
    %v4029 = vpop.f32.mrf.mxu0
    %v4030 = vadd.f32 0.0, %v4029
    %4031 = vmatmul.f32.gmra.mxu0 %v3989
    %v4032 = vpop.f32.mrf.mxu0
    %v4033 = vadd.f32 0.0, %v4032
    %4034 = vmatmul.f32.gmra.mxu0 %v3992
    %v4035 = vpop.f32.mrf.mxu0
    %v4036 = vadd.f32 0.0, %v4035
    %4037 = vmatmul.f32.gmra.mxu0 %v3995
    %v4038 = vpop.f32.mrf.mxu0
    %v4039 = vadd.f32 0.0, %v4038
    %4040 = vmatmul.f32.gmra.mxu0 %v3998
    %v4041 = vpop.f32.mrf.mxu0
    %v4042 = vadd.f32 0.0, %v4041
    %4043 = vmatmul.f32.gmra.mxu0 %v4001
    %v4044 = vpop.f32.mrf.mxu0
    %v4045 = vadd.f32 0.0, %v4044
    %4046 = vdwg.mxu0
    %s4047 = scalar_lea.vmem %s2, 896
    %v4048 = vld [vmem:[%s4047] sm:$0xff]
    %v4049 = vld [vmem:[%s4047 + $0x8] sm:$0xff]
    %v4050 = vld [vmem:[%s4047 + $0x10] sm:$0xff]
    %v4051 = vld [vmem:[%s4047 + $0x18] sm:$0xff]
    %v4052 = vld [vmem:[%s4047 + $0x20] sm:$0xff]
    %v4053 = vld [vmem:[%s4047 + $0x28] sm:$0xff]
    %v4054 = vld [vmem:[%s4047 + $0x30] sm:$0xff]
    %v4055 = vld [vmem:[%s4047 + $0x38] sm:$0xff]
    %v4056 = vld [vmem:[%s4047 + $0x40] sm:$0xff]
    %v4057 = vld [vmem:[%s4047 + $0x48] sm:$0xff]
    %v4058 = vld [vmem:[%s4047 + $0x50] sm:$0xff]
    %v4059 = vld [vmem:[%s4047 + $0x58] sm:$0xff]
    %v4060 = vld [vmem:[%s4047 + $0x60] sm:$0xff]
    %v4061 = vld [vmem:[%s4047 + $0x68] sm:$0xff]
    %v4062 = vld [vmem:[%s4047 + $0x70] sm:$0xff]
    %v4063 = vld [vmem:[%s4047 + $0x78] sm:$0xff]
    %4064 = vmatpush.msra.mxu0 %v4063
    %4065 = vmatpush.msra.mxu0 %v4062
    %4066 = vmatpush.msra.mxu0 %v4061
    %4067 = vmatpush.msra.mxu0 %v4060
    %4068 = vmatpush.msra.mxu0 %v4059
    %4069 = vmatpush.msra.mxu0 %v4058
    %4070 = vmatpush.msra.mxu0 %v4057
    %4071 = vmatpush.msra.mxu0 %v4056
    %4072 = vmatpush.msra.mxu0 %v4055
    %4073 = vmatpush.msra.mxu0 %v4054
    %4074 = vmatpush.msra.mxu0 %v4053
    %4075 = vmatpush.msra.mxu0 %v4052
    %4076 = vmatpush.msra.mxu0 %v4051
    %4077 = vmatpush.msra.mxu0 %v4050
    %4078 = vmatpush.msra.mxu0 %v4049
    %4079 = vmatpush.msra.mxu0 %v4048
    %4080 = vmatmul.f32.gmra.mxu0 %v4021
    %v4081 = vpop.f32.mrf.mxu0
    %v4082 = vadd.f32 0.0, %v4081
    %4083 = vmatmul.f32.gmra.mxu0 %v4024
    %v4084 = vpop.f32.mrf.mxu0
    %v4085 = vadd.f32 0.0, %v4084
    %4086 = vmatmul.f32.gmra.mxu0 %v4027
    %v4087 = vpop.f32.mrf.mxu0
    %v4088 = vadd.f32 0.0, %v4087
    %4089 = vmatmul.f32.gmra.mxu0 %v4030
    %v4090 = vpop.f32.mrf.mxu0
    %v4091 = vadd.f32 0.0, %v4090
    %4092 = vmatmul.f32.gmra.mxu0 %v4033
    %v4093 = vpop.f32.mrf.mxu0
    %v4094 = vadd.f32 0.0, %v4093
    %4095 = vmatmul.f32.gmra.mxu0 %v4036
    %v4096 = vpop.f32.mrf.mxu0
    %v4097 = vadd.f32 0.0, %v4096
    %4098 = vmatmul.f32.gmra.mxu0 %v4039
    %v4099 = vpop.f32.mrf.mxu0
    %v4100 = vadd.f32 0.0, %v4099
    %4101 = vmatmul.f32.gmra.mxu0 %v4042
    %v4102 = vpop.f32.mrf.mxu0
    %v4103 = vadd.f32 0.0, %v4102
    %4104 = vmatmul.f32.gmra.mxu0 %v4045
    %v4105 = vpop.f32.mrf.mxu0
    %v4106 = vadd.f32 0.0, %v4105
    %4107 = vdwg.mxu0
    %v4108 = vadd.f32 %v3957, %v4082
    %v4109 = vadd.f32 %v3958, %v4085
    %v4110 = vadd.f32 %v3959, %v4088
    %v4111 = vadd.f32 %v3960, %v4091
    %v4112 = vadd.f32 %v3961, %v4094
    %v4113 = vadd.f32 %v3962, %v4097
    %v4114 = vadd.f32 %v3963, %v4100
    %v4115 = vadd.f32 %v3964, %v4103
    %v4116 = vadd.f32 %v3965, %v4106
    %v4117 = vld [vmem:[%s8 + $0x2] sm:$0x1]
    %v4118 = vperm.slane %v4117, 0
    %v4119 = vadd.f32 %v4108, %v4118
    %v4120 = vadd.f32 %v4109, %v4118
    %v4121 = vadd.f32 %v4110, %v4118
    %v4122 = vadd.f32 %v4111, %v4118
    %v4123 = vadd.f32 %v4112, %v4118
    %v4124 = vadd.f32 %v4113, %v4118
    %v4125 = vadd.f32 %v4114, %v4118
    %v4126 = vadd.f32 %v4115, %v4118
    %v4127 = vadd.f32 %v4116, %v4118
    %v4128 = vand.u32 2147483647, %v4119
    %v4129 = vand.u32 2147483647, %v4120
    %v4130 = vand.u32 2147483647, %v4121
    %v4131 = vand.u32 2147483647, %v4122
    %v4132 = vand.u32 2147483647, %v4123
    %v4133 = vand.u32 2147483647, %v4124
    %v4134 = vand.u32 2147483647, %v4125
    %v4135 = vand.u32 2147483647, %v4126
    %v4136 = vand.u32 2147483647, %v4127
    %v4137 = vsub.f32 0.0, %v4128
    %v4138 = vsub.f32 0.0, %v4129
    %v4139 = vsub.f32 0.0, %v4130
    %v4140 = vsub.f32 0.0, %v4131
    %v4141 = vsub.f32 0.0, %v4132
    %v4142 = vsub.f32 0.0, %v4133
    %v4143 = vsub.f32 0.0, %v4134
    %v4144 = vsub.f32 0.0, %v4135
    %v4145 = vsub.f32 0.0, %v4136
    %v4146 = vmul.f32 %v4137, 1.442695
    %v4147 = vpow.pop %v4146
    %v4148 = vmul.f32 %v4138, 1.442695
    %v4149 = vpow.pop %v4148
    %v4150 = vmul.f32 %v4139, 1.442695
    %v4151 = vpow.pop %v4150
    %v4152 = vmul.f32 %v4140, 1.442695
    %v4153 = vpow.pop %v4152
    %v4154 = vmul.f32 %v4141, 1.442695
    %v4155 = vpow.pop %v4154
    %v4156 = vmul.f32 %v4142, 1.442695
    %v4157 = vpow.pop %v4156
    %v4158 = vmul.f32 %v4143, 1.442695
    %v4159 = vpow.pop %v4158
    %v4160 = vmul.f32 %v4144, 1.442695
    %v4161 = vpow.pop %v4160
    %v4162 = vmul.f32 %v4145, 1.442695
    %v4163 = vpow.pop %v4162
    %vm4164 = vcmp.ge.f32.partialorder %v4119, 0.0
    %vm4165 = vcmp.ge.f32.partialorder %v4120, 0.0
    %vm4166 = vcmp.ge.f32.partialorder %v4121, 0.0
    %vm4167 = vcmp.ge.f32.partialorder %v4122, 0.0
    %vm4168 = vcmp.ge.f32.partialorder %v4123, 0.0
    %vm4169 = vcmp.ge.f32.partialorder %v4124, 0.0
    %vm4170 = vcmp.ge.f32.partialorder %v4125, 0.0
    %vm4171 = vcmp.ge.f32.partialorder %v4126, 0.0
    %vm4172 = vcmp.ge.f32.partialorder %v4127, 0.0
    %v4173 = vmul.f32 %v4147, 2.0
    %v4174 = vmul.f32 %v4149, 2.0
    %v4175 = vmul.f32 %v4151, 2.0
    %v4176 = vmul.f32 %v4153, 2.0
    %v4177 = vmul.f32 %v4155, 2.0
    %v4178 = vmul.f32 %v4157, 2.0
    %v4179 = vmul.f32 %v4159, 2.0
    %v4180 = vmul.f32 %v4161, 2.0
    %v4181 = vmul.f32 %v4163, 2.0
    %v4182 = vadd.f32 %v4173, 1.0
    %v4183 = vadd.f32 %v4174, 1.0
    %v4184 = vadd.f32 %v4175, 1.0
    %v4185 = vadd.f32 %v4176, 1.0
    %v4186 = vadd.f32 %v4177, 1.0
    %v4187 = vadd.f32 %v4178, 1.0
    %v4188 = vadd.f32 %v4179, 1.0
    %v4189 = vadd.f32 %v4180, 1.0
    %v4190 = vadd.f32 %v4181, 1.0
    %v4191 = vadd.f32 %v4147, 2.0
    %v4192 = vadd.f32 %v4149, 2.0
    %v4193 = vadd.f32 %v4151, 2.0
    %v4194 = vadd.f32 %v4153, 2.0
    %v4195 = vadd.f32 %v4155, 2.0
    %v4196 = vadd.f32 %v4157, 2.0
    %v4197 = vadd.f32 %v4159, 2.0
    %v4198 = vadd.f32 %v4161, 2.0
    %v4199 = vadd.f32 %v4163, 2.0
    %v4200 = vmul.f32 %v4147, %v4191
    %v4201 = vmul.f32 %v4149, %v4192
    %v4202 = vmul.f32 %v4151, %v4193
    %v4203 = vmul.f32 %v4153, %v4194
    %v4204 = vmul.f32 %v4155, %v4195
    %v4205 = vmul.f32 %v4157, %v4196
    %v4206 = vmul.f32 %v4159, %v4197
    %v4207 = vmul.f32 %v4161, %v4198
    %v4208 = vmul.f32 %v4163, %v4199
    %v4209 = vsel %vm4164, %v4182, %v4200
    %v4210 = vsel %vm4165, %v4183, %v4201
    %v4211 = vsel %vm4166, %v4184, %v4202
    %v4212 = vsel %vm4167, %v4185, %v4203
    %v4213 = vsel %vm4168, %v4186, %v4204
    %v4214 = vsel %vm4169, %v4187, %v4205
    %v4215 = vsel %vm4170, %v4188, %v4206
    %v4216 = vsel %vm4171, %v4189, %v4207
    %v4217 = vsel %vm4172, %v4190, %v4208
    %v4218 = vmul.f32 %v4173, %v4147
    %v4219 = vmul.f32 %v4174, %v4149
    %v4220 = vmul.f32 %v4175, %v4151
    %v4221 = vmul.f32 %v4176, %v4153
    %v4222 = vmul.f32 %v4177, %v4155
    %v4223 = vmul.f32 %v4178, %v4157
    %v4224 = vmul.f32 %v4179, %v4159
    %v4225 = vmul.f32 %v4180, %v4161
    %v4226 = vmul.f32 %v4181, %v4163
    %v4227 = vadd.f32 %v4182, %v4218
    %v4228 = vadd.f32 %v4183, %v4219
    %v4229 = vadd.f32 %v4184, %v4220
    %v4230 = vadd.f32 %v4185, %v4221
    %v4231 = vadd.f32 %v4186, %v4222
    %v4232 = vadd.f32 %v4187, %v4223
    %v4233 = vadd.f32 %v4188, %v4224
    %v4234 = vadd.f32 %v4189, %v4225
    %v4235 = vadd.f32 %v4190, %v4226
    %v4236 = vadd.f32 %v4200, 2.0
    %v4237 = vadd.f32 %v4201, 2.0
    %v4238 = vadd.f32 %v4202, 2.0
    %v4239 = vadd.f32 %v4203, 2.0
    %v4240 = vadd.f32 %v4204, 2.0
    %v4241 = vadd.f32 %v4205, 2.0
    %v4242 = vadd.f32 %v4206, 2.0
    %v4243 = vadd.f32 %v4207, 2.0
    %v4244 = vadd.f32 %v4208, 2.0
    %v4245 = vsel %vm4164, %v4227, %v4236
    %v4246 = vsel %vm4165, %v4228, %v4237
    %v4247 = vsel %vm4166, %v4229, %v4238
    %v4248 = vsel %vm4167, %v4230, %v4239
    %v4249 = vsel %vm4168, %v4231, %v4240
    %v4250 = vsel %vm4169, %v4232, %v4241
    %v4251 = vsel %vm4170, %v4233, %v4242
    %v4252 = vsel %vm4171, %v4234, %v4243
    %v4253 = vsel %vm4172, %v4235, %v4244
    %v4254 = vmul.f32 %v4119, %v4209
    %v4255 = vmul.f32 %v4120, %v4210
    %v4256 = vmul.f32 %v4121, %v4211
    %v4257 = vmul.f32 %v4122, %v4212
    %v4258 = vmul.f32 %v4123, %v4213
    %v4259 = vmul.f32 %v4124, %v4214
    %v4260 = vmul.f32 %v4125, %v4215
    %v4261 = vmul.f32 %v4126, %v4216
    %v4262 = vmul.f32 %v4127, %v4217
    %v4263 = vrcp.pop %v4245
    %v4264 = vrcp.pop %v4246
    %v4265 = vrcp.pop %v4247
    %v4266 = vrcp.pop %v4248
    %v4267 = vrcp.pop %v4249
    %v4268 = vrcp.pop %v4250
    %v4269 = vrcp.pop %v4251
    %v4270 = vrcp.pop %v4252
    %v4271 = vrcp.pop %v4253
    %v4272 = vmul.f32 %v4254, %v4263
    %v4273 = vmul.f32 %v4255, %v4264
    %v4274 = vmul.f32 %v4256, %v4265
    %v4275 = vmul.f32 %v4257, %v4266
    %v4276 = vmul.f32 %v4258, %v4267
    %v4277 = vmul.f32 %v4259, %v4268
    %v4278 = vmul.f32 %v4260, %v4269
    %v4279 = vmul.f32 %v4261, %v4270
    %v4280 = vmul.f32 %v4262, %v4271
    %v4281 = vadd.f32 %v4272, %v4273
    %v4282 = vadd.f32 %v4281, %v4274
    %v4283 = vadd.f32 %v4282, %v4275
    %v4284 = vadd.f32 %v4283, %v4276
    %v4285 = vadd.f32 %v4284, %v4277
    %v4286 = vadd.f32 %v4285, %v4278
    %v4287 = vadd.f32 %v4286, %v4279
    %v4288 = vadd.f32 %v4287, %v4280
    %v4289 = vrot.slane %v4288, 4
    %v4290 = vadd.f32 %v4288, %v4289
    %v4291 = vrot.slane %v4290, 2
    %v4292 = vadd.f32 %v4290, %v4291
    %v4293 = vrot.slane %v4292, 1
    %v4294 = vadd.f32 %v4292, %v4293
    %v4295 = vmul.f32 %v4294, 0.013888889
    %v4296 = vmul.f32 %v4272, %v4272
    %v4297 = vmul.f32 %v4273, %v4273
    %v4298 = vmul.f32 %v4274, %v4274
    %v4299 = vmul.f32 %v4275, %v4275
    %v4300 = vmul.f32 %v4276, %v4276
    %v4301 = vmul.f32 %v4277, %v4277
    %v4302 = vmul.f32 %v4278, %v4278
    %v4303 = vmul.f32 %v4279, %v4279
    %v4304 = vmul.f32 %v4280, %v4280
    %v4305 = vadd.f32 %v4296, %v4297
    %v4306 = vadd.f32 %v4305, %v4298
    %v4307 = vadd.f32 %v4306, %v4299
    %v4308 = vadd.f32 %v4307, %v4300
    %v4309 = vadd.f32 %v4308, %v4301
    %v4310 = vadd.f32 %v4309, %v4302
    %v4311 = vadd.f32 %v4310, %v4303
    %v4312 = vadd.f32 %v4311, %v4304
    %v4313 = vrot.slane %v4312, 4
    %v4314 = vadd.f32 %v4312, %v4313
    %v4315 = vrot.slane %v4314, 2
    %v4316 = vadd.f32 %v4314, %v4315
    %v4317 = vrot.slane %v4316, 1
    %v4318 = vadd.f32 %v4316, %v4317
    %v4319 = vmul.f32 %v4318, 0.013888889
    %v4320 = vmul.f32 %v4295, %v4295
    %v4321 = vsub.f32 %v4319, %v4320
    %v4322 = vmax.f32 %v4321, 0.0
    %v4323 = vadd.f32 %v4322, 1e-05
    %v4324 = vrsqrt.pop %v4323
    %v4325 = vmul.f32 %v4324, %v4323
    %v4326 = vmul.f32 %v4325, %v4324
    %v4327 = vmul.f32 0.5, %v4326
    %v4328 = vsub.f32 1.5, %v4327
    %v4329 = vmul.f32 %v4324, %v4328
    %vm4330 = vweird.f32 %v4323
    %vm4331 = vweird.f32 %v4324
    %vm4332 = vmor %vm4330, %vm4331
    %v4333 = vsel %vm4332, %v4324, %v4329
    %v4334 = vld [vmem:[%s9 + $0x2] sm:$0x1]
    %v4335 = vmul.f32 %v4333, %v4334
    %v4336 = vld [vmem:[%s10 + $0x2] sm:$0x1]
    %v4337 = vmul.f32 %v4295, %v4335
    %v4338 = vsub.f32 %v4336, %v4337
    %v4339 = vperm.slane %v4335, 0
    %v4340 = vmul.f32 %v4272, %v4339
    %v4341 = vmul.f32 %v4273, %v4339
    %v4342 = vmul.f32 %v4274, %v4339
    %v4343 = vmul.f32 %v4275, %v4339
    %v4344 = vmul.f32 %v4276, %v4339
    %v4345 = vmul.f32 %v4277, %v4339
    %v4346 = vmul.f32 %v4278, %v4339
    %v4347 = vmul.f32 %v4279, %v4339
    %v4348 = vmul.f32 %v4280, %v4339
    %v4349 = vperm.slane %v4338, 0
    %v4350 = vadd.f32 %v4340, %v4349
    %v4351 = vadd.f32 %v4341, %v4349
    %v4352 = vadd.f32 %v4342, %v4349
    %v4353 = vadd.f32 %v4343, %v4349
    %v4354 = vadd.f32 %v4344, %v4349
    %v4355 = vadd.f32 %v4345, %v4349
    %v4356 = vadd.f32 %v4346, %v4349
    %v4357 = vadd.f32 %v4347, %v4349
    %v4358 = vadd.f32 %v4348, %v4349
    %v4359 = vld [vmem:[%s5] sm:$0xff]
    %v4360 = vld [vmem:[%s5 + $0x8] sm:$0xff]
    %v4361 = vld [vmem:[%s5 + $0x10] sm:$0x3]
    %vm4362 = vcmask 588800
    %v4364 = vsel %vm4362, %v4359, 0
    %v4367 = vsel %vm4362, %v4360, 0
    %v4370 = vsel %vm4362, %v4361, 0
    %4372 = vmatpush.msra.mxu0 0.0
    %4373 = vmatpush.msra.mxu0 0.0
    %4374 = vmatpush.msra.mxu0 0.0
    %4375 = vmatpush.msra.mxu0 0.0
    %4376 = vmatpush.msra.mxu0 0.0
    %4377 = vmatpush.msra.mxu0 0.0
    %4378 = vmatpush.msra.mxu0 0.0
    %4379 = vmatpush.msra.mxu0 %v4358
    %4380 = vmatpush.msra.mxu0 %v4357
    %4381 = vmatpush.msra.mxu0 %v4356
    %4382 = vmatpush.msra.mxu0 %v4355
    %4383 = vmatpush.msra.mxu0 %v4354
    %4384 = vmatpush.msra.mxu0 %v4353
    %4385 = vmatpush.msra.mxu0 %v4352
    %4386 = vmatpush.msra.mxu0 %v4351
    %4387 = vmatpush.msra.mxu0 %v4350
    %4388 = vmatmul.f32.gmra.mxu0 %v4364
    %v4389 = vpop.f32.mrf.mxu0
    %v4390 = vadd.f32 0.0, %v4389
    %4391 = vmatmul.f32.gmra.mxu0 %v4367
    %v4392 = vpop.f32.mrf.mxu0
    %v4393 = vadd.f32 0.0, %v4392
    %4394 = vmatmul.f32.gmra.mxu0 %v4370
    %v4395 = vpop.f32.mrf.mxu0
    %v4396 = vadd.f32 0.0, %v4395
    %4397 = vdwg.mxu0
    %s4398 = scalar_lea.vmem %s2, 1024
    %v4399 = vld [vmem:[%s4398] sm:$0xff]
    %v4400 = vld [vmem:[%s4398 + $0x8] sm:$0xff]
    %v4401 = vld [vmem:[%s4398 + $0x10] sm:$0xff]
    %v4402 = vld [vmem:[%s4398 + $0x18] sm:$0xff]
    %v4403 = vld [vmem:[%s4398 + $0x20] sm:$0xff]
    %v4404 = vld [vmem:[%s4398 + $0x28] sm:$0xff]
    %v4405 = vld [vmem:[%s4398 + $0x30] sm:$0xff]
    %v4406 = vld [vmem:[%s4398 + $0x38] sm:$0xff]
    %v4407 = vld [vmem:[%s4398 + $0x40] sm:$0xff]
    %v4408 = vld [vmem:[%s4398 + $0x48] sm:$0xff]
    %v4409 = vld [vmem:[%s4398 + $0x50] sm:$0xff]
    %v4410 = vld [vmem:[%s4398 + $0x58] sm:$0xff]
    %v4411 = vld [vmem:[%s4398 + $0x60] sm:$0xff]
    %v4412 = vld [vmem:[%s4398 + $0x68] sm:$0xff]
    %v4413 = vld [vmem:[%s4398 + $0x70] sm:$0xff]
    %v4414 = vld [vmem:[%s4398 + $0x78] sm:$0xff]
    %s4415 = scalar_lea.vmem %s5, 24
    %v4416 = vld [vmem:[%s4415] sm:$0xff]
    %v4417 = vld [vmem:[%s4415 + $0x8] sm:$0xff]
    %v4418 = vld [vmem:[%s4415 + $0x10] sm:$0x3]
    %v4420 = vsel %vm4362, %v4416, 0
    %v4423 = vsel %vm4362, %v4417, 0
    %v4426 = vsel %vm4362, %v4418, 0
    %4428 = vmatpush.msra.mxu0 0.0
    %4429 = vmatpush.msra.mxu0 0.0
    %4430 = vmatpush.msra.mxu0 0.0
    %4431 = vmatpush.msra.mxu0 0.0
    %4432 = vmatpush.msra.mxu0 0.0
    %4433 = vmatpush.msra.mxu0 0.0
    %4434 = vmatpush.msra.mxu0 0.0
    %4435 = vmatpush.msra.mxu0 %v4358
    %4436 = vmatpush.msra.mxu0 %v4357
    %4437 = vmatpush.msra.mxu0 %v4356
    %4438 = vmatpush.msra.mxu0 %v4355
    %4439 = vmatpush.msra.mxu0 %v4354
    %4440 = vmatpush.msra.mxu0 %v4353
    %4441 = vmatpush.msra.mxu0 %v4352
    %4442 = vmatpush.msra.mxu0 %v4351
    %4443 = vmatpush.msra.mxu0 %v4350
    %4444 = vmatmul.f32.gmra.mxu0 %v4420
    %v4445 = vpop.f32.mrf.mxu0
    %v4446 = vadd.f32 0.0, %v4445
    %4447 = vmatmul.f32.gmra.mxu0 %v4423
    %v4448 = vpop.f32.mrf.mxu0
    %v4449 = vadd.f32 0.0, %v4448
    %4450 = vmatmul.f32.gmra.mxu0 %v4426
    %v4451 = vpop.f32.mrf.mxu0
    %v4452 = vadd.f32 0.0, %v4451
    %4453 = vdwg.mxu0
    %s4454 = scalar_lea.vmem %s2, 1152
    %v4455 = vld [vmem:[%s4454] sm:$0xff]
    %v4456 = vld [vmem:[%s4454 + $0x8] sm:$0xff]
    %v4457 = vld [vmem:[%s4454 + $0x10] sm:$0xff]
    %v4458 = vld [vmem:[%s4454 + $0x18] sm:$0xff]
    %v4459 = vld [vmem:[%s4454 + $0x20] sm:$0xff]
    %v4460 = vld [vmem:[%s4454 + $0x28] sm:$0xff]
    %v4461 = vld [vmem:[%s4454 + $0x30] sm:$0xff]
    %v4462 = vld [vmem:[%s4454 + $0x38] sm:$0xff]
    %v4463 = vld [vmem:[%s4454 + $0x40] sm:$0xff]
    %v4464 = vld [vmem:[%s4454 + $0x48] sm:$0xff]
    %v4465 = vld [vmem:[%s4454 + $0x50] sm:$0xff]
    %v4466 = vld [vmem:[%s4454 + $0x58] sm:$0xff]
    %v4467 = vld [vmem:[%s4454 + $0x60] sm:$0xff]
    %v4468 = vld [vmem:[%s4454 + $0x68] sm:$0xff]
    %v4469 = vld [vmem:[%s4454 + $0x70] sm:$0xff]
    %v4470 = vld [vmem:[%s4454 + $0x78] sm:$0xff]
    %4471 = vmatpush.msra.mxu0 %v4470
    %4472 = vmatpush.msra.mxu0 %v4469
    %4473 = vmatpush.msra.mxu0 %v4468
    %4474 = vmatpush.msra.mxu0 %v4467
    %4475 = vmatpush.msra.mxu0 %v4466
    %4476 = vmatpush.msra.mxu0 %v4465
    %4477 = vmatpush.msra.mxu0 %v4464
    %4478 = vmatpush.msra.mxu0 %v4463
    %4479 = vmatpush.msra.mxu0 %v4462
    %4480 = vmatpush.msra.mxu0 %v4461
    %4481 = vmatpush.msra.mxu0 %v4460
    %4482 = vmatpush.msra.mxu0 %v4459
    %4483 = vmatpush.msra.mxu0 %v4458
    %4484 = vmatpush.msra.mxu0 %v4457
    %4485 = vmatpush.msra.mxu0 %v4456
    %4486 = vmatpush.msra.mxu0 %v4455
    %4487 = vmatmul.f32.gmra.mxu0 %v4446
    %v4488 = vpop.f32.mrf.mxu0
    %v4489 = vadd.f32 0.0, %v4488
    %4490 = vmatmul.f32.gmra.mxu0 %v4449
    %v4491 = vpop.f32.mrf.mxu0
    %v4492 = vadd.f32 0.0, %v4491
    %4493 = vmatmul.f32.gmra.mxu0 %v4452
    %v4494 = vpop.f32.mrf.mxu0
    %v4495 = vadd.f32 0.0, %v4494
    %4496 = vdwg.mxu0
    %4497 = vmatpush.msra.mxu0 %v4414
    %4498 = vmatpush.msra.mxu0 %v4413
    %4499 = vmatpush.msra.mxu0 %v4412
    %4500 = vmatpush.msra.mxu0 %v4411
    %4501 = vmatpush.msra.mxu0 %v4410
    %4502 = vmatpush.msra.mxu0 %v4409
    %4503 = vmatpush.msra.mxu0 %v4408
    %4504 = vmatpush.msra.mxu0 %v4407
    %4505 = vmatpush.msra.mxu0 %v4406
    %4506 = vmatpush.msra.mxu0 %v4405
    %4507 = vmatpush.msra.mxu0 %v4404
    %4508 = vmatpush.msra.mxu0 %v4403
    %4509 = vmatpush.msra.mxu0 %v4402
    %4510 = vmatpush.msra.mxu0 %v4401
    %4511 = vmatpush.msra.mxu0 %v4400
    %4512 = vmatpush.msra.mxu0 %v4399
    %4513 = vmatmul.f32.gmra.mxu0 %v4390
    %v4514 = vpop.f32.mrf.mxu0
    %v4515 = vadd.f32 %v4489, %v4514
    %4516 = vmatmul.f32.gmra.mxu0 %v4393
    %v4517 = vpop.f32.mrf.mxu0
    %v4518 = vadd.f32 %v4492, %v4517
    %4519 = vmatmul.f32.gmra.mxu0 %v4396
    %v4520 = vpop.f32.mrf.mxu0
    %v4521 = vadd.f32 %v4495, %v4520
    %4522 = vdwg.mxu0
    %s4523 = scalar_lea.vmem %s5, 48
    %v4524 = vld [vmem:[%s4523] sm:$0xff]
    %v4525 = vld [vmem:[%s4523 + $0x8] sm:$0xff]
    %v4526 = vld [vmem:[%s4523 + $0x10] sm:$0x3]
    %v4528 = vsel %vm4362, %v4524, 0
    %v4531 = vsel %vm4362, %v4525, 0
    %v4534 = vsel %vm4362, %v4526, 0
    %4536 = vmatpush.msra.mxu0 0.0
    %4537 = vmatpush.msra.mxu0 0.0
    %4538 = vmatpush.msra.mxu0 0.0
    %4539 = vmatpush.msra.mxu0 0.0
    %4540 = vmatpush.msra.mxu0 0.0
    %4541 = vmatpush.msra.mxu0 0.0
    %4542 = vmatpush.msra.mxu0 0.0
    %4543 = vmatpush.msra.mxu0 %v4358
    %4544 = vmatpush.msra.mxu0 %v4357
    %4545 = vmatpush.msra.mxu0 %v4356
    %4546 = vmatpush.msra.mxu0 %v4355
    %4547 = vmatpush.msra.mxu0 %v4354
    %4548 = vmatpush.msra.mxu0 %v4353
    %4549 = vmatpush.msra.mxu0 %v4352
    %4550 = vmatpush.msra.mxu0 %v4351
    %4551 = vmatpush.msra.mxu0 %v4350
    %4552 = vmatmul.f32.gmra.mxu0 %v4528
    %v4553 = vpop.f32.mrf.mxu0
    %v4554 = vadd.f32 0.0, %v4553
    %4555 = vmatmul.f32.gmra.mxu0 %v4531
    %v4556 = vpop.f32.mrf.mxu0
    %v4557 = vadd.f32 0.0, %v4556
    %4558 = vmatmul.f32.gmra.mxu0 %v4534
    %v4559 = vpop.f32.mrf.mxu0
    %v4560 = vadd.f32 0.0, %v4559
    %4561 = vdwg.mxu0
    %s4562 = scalar_lea.vmem %s2, 1280
    %v4563 = vld [vmem:[%s4562] sm:$0xff]
    %v4564 = vld [vmem:[%s4562 + $0x8] sm:$0xff]
    %v4565 = vld [vmem:[%s4562 + $0x10] sm:$0xff]
    %v4566 = vld [vmem:[%s4562 + $0x18] sm:$0xff]
    %v4567 = vld [vmem:[%s4562 + $0x20] sm:$0xff]
    %v4568 = vld [vmem:[%s4562 + $0x28] sm:$0xff]
    %v4569 = vld [vmem:[%s4562 + $0x30] sm:$0xff]
    %v4570 = vld [vmem:[%s4562 + $0x38] sm:$0xff]
    %v4571 = vld [vmem:[%s4562 + $0x40] sm:$0xff]
    %v4572 = vld [vmem:[%s4562 + $0x48] sm:$0xff]
    %v4573 = vld [vmem:[%s4562 + $0x50] sm:$0xff]
    %v4574 = vld [vmem:[%s4562 + $0x58] sm:$0xff]
    %v4575 = vld [vmem:[%s4562 + $0x60] sm:$0xff]
    %v4576 = vld [vmem:[%s4562 + $0x68] sm:$0xff]
    %v4577 = vld [vmem:[%s4562 + $0x70] sm:$0xff]
    %v4578 = vld [vmem:[%s4562 + $0x78] sm:$0xff]
    %4579 = vmatpush.msra.mxu0 %v4578
    %4580 = vmatpush.msra.mxu0 %v4577
    %4581 = vmatpush.msra.mxu0 %v4576
    %4582 = vmatpush.msra.mxu0 %v4575
    %4583 = vmatpush.msra.mxu0 %v4574
    %4584 = vmatpush.msra.mxu0 %v4573
    %4585 = vmatpush.msra.mxu0 %v4572
    %4586 = vmatpush.msra.mxu0 %v4571
    %4587 = vmatpush.msra.mxu0 %v4570
    %4588 = vmatpush.msra.mxu0 %v4569
    %4589 = vmatpush.msra.mxu0 %v4568
    %4590 = vmatpush.msra.mxu0 %v4567
    %4591 = vmatpush.msra.mxu0 %v4566
    %4592 = vmatpush.msra.mxu0 %v4565
    %4593 = vmatpush.msra.mxu0 %v4564
    %4594 = vmatpush.msra.mxu0 %v4563
    %4595 = vmatmul.f32.gmra.mxu0 %v4554
    %v4596 = vpop.f32.mrf.mxu0
    %v4597 = vadd.f32 0.0, %v4596
    %4598 = vmatmul.f32.gmra.mxu0 %v4557
    %v4599 = vpop.f32.mrf.mxu0
    %v4600 = vadd.f32 0.0, %v4599
    %4601 = vmatmul.f32.gmra.mxu0 %v4560
    %v4602 = vpop.f32.mrf.mxu0
    %v4603 = vadd.f32 0.0, %v4602
    %4604 = vdwg.mxu0
    %v4605 = vadd.f32 %v4515, %v4597
    %v4606 = vadd.f32 %v4518, %v4600
    %v4607 = vadd.f32 %v4521, %v4603
    %s4608 = scalar_lea.vmem %s5, 72
    %v4609 = vld [vmem:[%s4608] sm:$0xff]
    %v4610 = vld [vmem:[%s4608 + $0x8] sm:$0xff]
    %v4611 = vld [vmem:[%s4608 + $0x10] sm:$0x3]
    %v4613 = vsel %vm4362, %v4609, 0
    %v4616 = vsel %vm4362, %v4610, 0
    %v4619 = vsel %vm4362, %v4611, 0
    %4621 = vmatpush.msra.mxu0 0.0
    %4622 = vmatpush.msra.mxu0 0.0
    %4623 = vmatpush.msra.mxu0 0.0
    %4624 = vmatpush.msra.mxu0 0.0
    %4625 = vmatpush.msra.mxu0 0.0
    %4626 = vmatpush.msra.mxu0 0.0
    %4627 = vmatpush.msra.mxu0 0.0
    %4628 = vmatpush.msra.mxu0 %v4358
    %4629 = vmatpush.msra.mxu0 %v4357
    %4630 = vmatpush.msra.mxu0 %v4356
    %4631 = vmatpush.msra.mxu0 %v4355
    %4632 = vmatpush.msra.mxu0 %v4354
    %4633 = vmatpush.msra.mxu0 %v4353
    %4634 = vmatpush.msra.mxu0 %v4352
    %4635 = vmatpush.msra.mxu0 %v4351
    %4636 = vmatpush.msra.mxu0 %v4350
    %4637 = vmatmul.f32.gmra.mxu0 %v4613
    %v4638 = vpop.f32.mrf.mxu0
    %v4639 = vadd.f32 0.0, %v4638
    %4640 = vmatmul.f32.gmra.mxu0 %v4616
    %v4641 = vpop.f32.mrf.mxu0
    %v4642 = vadd.f32 0.0, %v4641
    %4643 = vmatmul.f32.gmra.mxu0 %v4619
    %v4644 = vpop.f32.mrf.mxu0
    %v4645 = vadd.f32 0.0, %v4644
    %4646 = vdwg.mxu0
    %s4647 = scalar_lea.vmem %s2, 1408
    %v4648 = vld [vmem:[%s4647] sm:$0xff]
    %v4649 = vld [vmem:[%s4647 + $0x8] sm:$0xff]
    %v4650 = vld [vmem:[%s4647 + $0x10] sm:$0xff]
    %v4651 = vld [vmem:[%s4647 + $0x18] sm:$0xff]
    %v4652 = vld [vmem:[%s4647 + $0x20] sm:$0xff]
    %v4653 = vld [vmem:[%s4647 + $0x28] sm:$0xff]
    %v4654 = vld [vmem:[%s4647 + $0x30] sm:$0xff]
    %v4655 = vld [vmem:[%s4647 + $0x38] sm:$0xff]
    %v4656 = vld [vmem:[%s4647 + $0x40] sm:$0xff]
    %v4657 = vld [vmem:[%s4647 + $0x48] sm:$0xff]
    %v4658 = vld [vmem:[%s4647 + $0x50] sm:$0xff]
    %v4659 = vld [vmem:[%s4647 + $0x58] sm:$0xff]
    %v4660 = vld [vmem:[%s4647 + $0x60] sm:$0xff]
    %v4661 = vld [vmem:[%s4647 + $0x68] sm:$0xff]
    %v4662 = vld [vmem:[%s4647 + $0x70] sm:$0xff]
    %v4663 = vld [vmem:[%s4647 + $0x78] sm:$0xff]
    %4664 = vmatpush.msra.mxu0 %v4663
    %4665 = vmatpush.msra.mxu0 %v4662
    %4666 = vmatpush.msra.mxu0 %v4661
    %4667 = vmatpush.msra.mxu0 %v4660
    %4668 = vmatpush.msra.mxu0 %v4659
    %4669 = vmatpush.msra.mxu0 %v4658
    %4670 = vmatpush.msra.mxu0 %v4657
    %4671 = vmatpush.msra.mxu0 %v4656
    %4672 = vmatpush.msra.mxu0 %v4655
    %4673 = vmatpush.msra.mxu0 %v4654
    %4674 = vmatpush.msra.mxu0 %v4653
    %4675 = vmatpush.msra.mxu0 %v4652
    %4676 = vmatpush.msra.mxu0 %v4651
    %4677 = vmatpush.msra.mxu0 %v4650
    %4678 = vmatpush.msra.mxu0 %v4649
    %4679 = vmatpush.msra.mxu0 %v4648
    %4680 = vmatmul.f32.gmra.mxu0 %v4639
    %v4681 = vpop.f32.mrf.mxu0
    %v4682 = vadd.f32 0.0, %v4681
    %4683 = vmatmul.f32.gmra.mxu0 %v4642
    %v4684 = vpop.f32.mrf.mxu0
    %v4685 = vadd.f32 0.0, %v4684
    %4686 = vmatmul.f32.gmra.mxu0 %v4645
    %v4687 = vpop.f32.mrf.mxu0
    %v4688 = vadd.f32 0.0, %v4687
    %4689 = vdwg.mxu0
    %v4690 = vadd.f32 %v4605, %v4682
    %v4691 = vadd.f32 %v4606, %v4685
    %v4692 = vadd.f32 %v4607, %v4688
    %v4693 = vld [vmem:[%s8 + $0x3] sm:$0x1]
    %v4694 = vperm.slane %v4693, 0
    %v4695 = vadd.f32 %v4690, %v4694
    %v4696 = vadd.f32 %v4691, %v4694
    %v4697 = vadd.f32 %v4692, %v4694
    %v4698 = vand.u32 2147483647, %v4695
    %v4699 = vand.u32 2147483647, %v4696
    %v4700 = vand.u32 2147483647, %v4697
    %v4701 = vsub.f32 0.0, %v4698
    %v4702 = vsub.f32 0.0, %v4699
    %v4703 = vsub.f32 0.0, %v4700
    %v4704 = vmul.f32 %v4701, 1.442695
    %v4705 = vpow.pop %v4704
    %v4706 = vmul.f32 %v4702, 1.442695
    %v4707 = vpow.pop %v4706
    %v4708 = vmul.f32 %v4703, 1.442695
    %v4709 = vpow.pop %v4708
    %vm4710 = vcmp.ge.f32.partialorder %v4695, 0.0
    %vm4711 = vcmp.ge.f32.partialorder %v4696, 0.0
    %vm4712 = vcmp.ge.f32.partialorder %v4697, 0.0
    %v4713 = vmul.f32 %v4705, 2.0
    %v4714 = vmul.f32 %v4707, 2.0
    %v4715 = vmul.f32 %v4709, 2.0
    %v4716 = vadd.f32 %v4713, 1.0
    %v4717 = vadd.f32 %v4714, 1.0
    %v4718 = vadd.f32 %v4715, 1.0
    %v4719 = vadd.f32 %v4705, 2.0
    %v4720 = vadd.f32 %v4707, 2.0
    %v4721 = vadd.f32 %v4709, 2.0
    %v4722 = vmul.f32 %v4705, %v4719
    %v4723 = vmul.f32 %v4707, %v4720
    %v4724 = vmul.f32 %v4709, %v4721
    %v4725 = vsel %vm4710, %v4716, %v4722
    %v4726 = vsel %vm4711, %v4717, %v4723
    %v4727 = vsel %vm4712, %v4718, %v4724
    %v4728 = vmul.f32 %v4713, %v4705
    %v4729 = vmul.f32 %v4714, %v4707
    %v4730 = vmul.f32 %v4715, %v4709
    %v4731 = vadd.f32 %v4716, %v4728
    %v4732 = vadd.f32 %v4717, %v4729
    %v4733 = vadd.f32 %v4718, %v4730
    %v4734 = vadd.f32 %v4722, 2.0
    %v4735 = vadd.f32 %v4723, 2.0
    %v4736 = vadd.f32 %v4724, 2.0
    %v4737 = vsel %vm4710, %v4731, %v4734
    %v4738 = vsel %vm4711, %v4732, %v4735
    %v4739 = vsel %vm4712, %v4733, %v4736
    %v4740 = vmul.f32 %v4695, %v4725
    %v4741 = vmul.f32 %v4696, %v4726
    %v4742 = vmul.f32 %v4697, %v4727
    %v4743 = vrcp.pop %v4737
    %v4744 = vrcp.pop %v4738
    %v4745 = vrcp.pop %v4739
    %v4746 = vmul.f32 %v4740, %v4743
    %v4747 = vmul.f32 %v4741, %v4744
    %v4748 = vmul.f32 %v4742, %v4745
    %v4749 = vadd.f32 %v4746, %v4747
    %v4750 = vsel %vm1342, %v4748, 0.0
    %v4751 = vadd.f32 %v4749, %v4750
    %v4752 = vrot.slane %v4751, 4
    %v4753 = vadd.f32 %v4751, %v4752
    %v4754 = vrot.slane %v4753, 2
    %v4755 = vadd.f32 %v4753, %v4754
    %v4756 = vrot.slane %v4755, 1
    %v4757 = vadd.f32 %v4755, %v4756
    %v4758 = vmul.f32 %v4757, 0.055555556
    %v4759 = vmul.f32 %v4746, %v4746
    %v4760 = vmul.f32 %v4747, %v4747
    %v4761 = vmul.f32 %v4748, %v4748
    %v4762 = vadd.f32 %v4759, %v4760
    %v4763 = vsel %vm1342, %v4761, 0.0
    %v4764 = vadd.f32 %v4762, %v4763
    %v4765 = vrot.slane %v4764, 4
    %v4766 = vadd.f32 %v4764, %v4765
    %v4767 = vrot.slane %v4766, 2
    %v4768 = vadd.f32 %v4766, %v4767
    %v4769 = vrot.slane %v4768, 1
    %v4770 = vadd.f32 %v4768, %v4769
    %v4771 = vmul.f32 %v4770, 0.055555556
    %v4772 = vmul.f32 %v4758, %v4758
    %v4773 = vsub.f32 %v4771, %v4772
    %v4774 = vmax.f32 %v4773, 0.0
    %v4775 = vadd.f32 %v4774, 1e-05
    %v4776 = vrsqrt.pop %v4775
    %v4777 = vmul.f32 %v4776, %v4775
    %v4778 = vmul.f32 %v4777, %v4776
    %v4779 = vmul.f32 0.5, %v4778
    %v4780 = vsub.f32 1.5, %v4779
    %v4781 = vmul.f32 %v4776, %v4780
    %vm4782 = vweird.f32 %v4775
    %vm4783 = vweird.f32 %v4776
    %vm4784 = vmor %vm4782, %vm4783
    %v4785 = vsel %vm4784, %v4776, %v4781
    %v4786 = vld [vmem:[%s9 + $0x3] sm:$0x1]
    %v4787 = vmul.f32 %v4785, %v4786
    %v4788 = vld [vmem:[%s10 + $0x3] sm:$0x1]
    %v4789 = vmul.f32 %v4758, %v4787
    %v4790 = vsub.f32 %v4788, %v4789
    %v4791 = vperm.slane %v4787, 0
    %v4792 = vmul.f32 %v4746, %v4791
    %v4793 = vmul.f32 %v4747, %v4791
    %v4794 = vmul.f32 %v4748, %v4791
    %v4795 = vperm.slane %v4790, 0
    %v4796 = vadd.f32 %v4792, %v4795
    %v4797 = vadd.f32 %v4793, %v4795
    %v4798 = vadd.f32 %v4794, %v4795
    %v4799 = vld [vmem:[%s6] sm:$0xff]
    %vm4800 = vcmask 146432
    %v4802 = vsel %vm4800, %v4799, 0
    %v4805 = vsel %vm1342, %v4798, 0
    %4807 = vmatpush.msra.mxu0 0.0
    %4808 = vmatpush.msra.mxu0 0.0
    %4809 = vmatpush.msra.mxu0 0.0
    %4810 = vmatpush.msra.mxu0 0.0
    %4811 = vmatpush.msra.mxu0 0.0
    %4812 = vmatpush.msra.mxu0 0.0
    %4813 = vmatpush.msra.mxu0 0.0
    %4814 = vmatpush.msra.mxu0 0.0
    %4815 = vmatpush.msra.mxu0 0.0
    %4816 = vmatpush.msra.mxu0 0.0
    %4817 = vmatpush.msra.mxu0 0.0
    %4818 = vmatpush.msra.mxu0 0.0
    %4819 = vmatpush.msra.mxu0 0.0
    %4820 = vmatpush.msra.mxu0 %v4805
    %4821 = vmatpush.msra.mxu0 %v4797
    %4822 = vmatpush.msra.mxu0 %v4796
    %4823 = vmatmul.f32.gmra.mxu0 %v4802
    %v4824 = vpop.f32.mrf.mxu0
    %v4825 = vadd.f32 0.0, %v4824
    %4826 = vdwg.mxu0
    %s4827 = scalar_lea.vmem %s2, 1536
    %v4828 = vld [vmem:[%s4827] sm:$0xff]
    %v4829 = vld [vmem:[%s4827 + $0x8] sm:$0xff]
    %v4830 = vld [vmem:[%s4827 + $0x10] sm:$0xff]
    %v4831 = vld [vmem:[%s4827 + $0x18] sm:$0xff]
    %v4832 = vld [vmem:[%s4827 + $0x20] sm:$0xff]
    %v4833 = vld [vmem:[%s4827 + $0x28] sm:$0xff]
    %v4834 = vld [vmem:[%s4827 + $0x30] sm:$0xff]
    %v4835 = vld [vmem:[%s4827 + $0x38] sm:$0xff]
    %v4836 = vld [vmem:[%s4827 + $0x40] sm:$0xff]
    %v4837 = vld [vmem:[%s4827 + $0x48] sm:$0xff]
    %v4838 = vld [vmem:[%s4827 + $0x50] sm:$0xff]
    %v4839 = vld [vmem:[%s4827 + $0x58] sm:$0xff]
    %v4840 = vld [vmem:[%s4827 + $0x60] sm:$0xff]
    %v4841 = vld [vmem:[%s4827 + $0x68] sm:$0xff]
    %v4842 = vld [vmem:[%s4827 + $0x70] sm:$0xff]
    %v4843 = vld [vmem:[%s4827 + $0x78] sm:$0xff]
    %s4844 = scalar_lea.vmem %s6, 8
    %v4845 = vld [vmem:[%s4844] sm:$0xff]
    %v4847 = vsel %vm4800, %v4845, 0
    %4849 = vmatpush.msra.mxu0 0.0
    %4850 = vmatpush.msra.mxu0 0.0
    %4851 = vmatpush.msra.mxu0 0.0
    %4852 = vmatpush.msra.mxu0 0.0
    %4853 = vmatpush.msra.mxu0 0.0
    %4854 = vmatpush.msra.mxu0 0.0
    %4855 = vmatpush.msra.mxu0 0.0
    %4856 = vmatpush.msra.mxu0 0.0
    %4857 = vmatpush.msra.mxu0 0.0
    %4858 = vmatpush.msra.mxu0 0.0
    %4859 = vmatpush.msra.mxu0 0.0
    %4860 = vmatpush.msra.mxu0 0.0
    %4861 = vmatpush.msra.mxu0 0.0
    %4862 = vmatpush.msra.mxu0 %v4805
    %4863 = vmatpush.msra.mxu0 %v4797
    %4864 = vmatpush.msra.mxu0 %v4796
    %4865 = vmatmul.f32.gmra.mxu0 %v4847
    %v4866 = vpop.f32.mrf.mxu0
    %v4867 = vadd.f32 0.0, %v4866
    %4868 = vdwg.mxu0
    %s4869 = scalar_lea.vmem %s2, 1664
    %v4870 = vld [vmem:[%s4869] sm:$0xff]
    %v4871 = vld [vmem:[%s4869 + $0x8] sm:$0xff]
    %v4872 = vld [vmem:[%s4869 + $0x10] sm:$0xff]
    %v4873 = vld [vmem:[%s4869 + $0x18] sm:$0xff]
    %v4874 = vld [vmem:[%s4869 + $0x20] sm:$0xff]
    %v4875 = vld [vmem:[%s4869 + $0x28] sm:$0xff]
    %v4876 = vld [vmem:[%s4869 + $0x30] sm:$0xff]
    %v4877 = vld [vmem:[%s4869 + $0x38] sm:$0xff]
    %v4878 = vld [vmem:[%s4869 + $0x40] sm:$0xff]
    %v4879 = vld [vmem:[%s4869 + $0x48] sm:$0xff]
    %v4880 = vld [vmem:[%s4869 + $0x50] sm:$0xff]
    %v4881 = vld [vmem:[%s4869 + $0x58] sm:$0xff]
    %v4882 = vld [vmem:[%s4869 + $0x60] sm:$0xff]
    %v4883 = vld [vmem:[%s4869 + $0x68] sm:$0xff]
    %v4884 = vld [vmem:[%s4869 + $0x70] sm:$0xff]
    %v4885 = vld [vmem:[%s4869 + $0x78] sm:$0xff]
    %4886 = vmatpush.msra.mxu0 %v4885
    %4887 = vmatpush.msra.mxu0 %v4884
    %4888 = vmatpush.msra.mxu0 %v4883
    %4889 = vmatpush.msra.mxu0 %v4882
    %4890 = vmatpush.msra.mxu0 %v4881
    %4891 = vmatpush.msra.mxu0 %v4880
    %4892 = vmatpush.msra.mxu0 %v4879
    %4893 = vmatpush.msra.mxu0 %v4878
    %4894 = vmatpush.msra.mxu0 %v4877
    %4895 = vmatpush.msra.mxu0 %v4876
    %4896 = vmatpush.msra.mxu0 %v4875
    %4897 = vmatpush.msra.mxu0 %v4874
    %4898 = vmatpush.msra.mxu0 %v4873
    %4899 = vmatpush.msra.mxu0 %v4872
    %4900 = vmatpush.msra.mxu0 %v4871
    %4901 = vmatpush.msra.mxu0 %v4870
    %4902 = vmatmul.f32.gmra.mxu0 %v4867
    %v4903 = vpop.f32.mrf.mxu0
    %v4904 = vadd.f32 0.0, %v4903
    %4905 = vdwg.mxu0
    %4906 = vmatpush.msra.mxu0 %v4843
    %4907 = vmatpush.msra.mxu0 %v4842
    %4908 = vmatpush.msra.mxu0 %v4841
    %4909 = vmatpush.msra.mxu0 %v4840
    %4910 = vmatpush.msra.mxu0 %v4839
    %4911 = vmatpush.msra.mxu0 %v4838
    %4912 = vmatpush.msra.mxu0 %v4837
    %4913 = vmatpush.msra.mxu0 %v4836
    %4914 = vmatpush.msra.mxu0 %v4835
    %4915 = vmatpush.msra.mxu0 %v4834
    %4916 = vmatpush.msra.mxu0 %v4833
    %4917 = vmatpush.msra.mxu0 %v4832
    %4918 = vmatpush.msra.mxu0 %v4831
    %4919 = vmatpush.msra.mxu0 %v4830
    %4920 = vmatpush.msra.mxu0 %v4829
    %4921 = vmatpush.msra.mxu0 %v4828
    %4922 = vmatmul.f32.gmra.mxu0 %v4825
    %v4923 = vpop.f32.mrf.mxu0
    %v4924 = vadd.f32 %v4904, %v4923
    %4925 = vdwg.mxu0
    %s4926 = scalar_lea.vmem %s6, 16
    %v4927 = vld [vmem:[%s4926] sm:$0xff]
    %v4929 = vsel %vm4800, %v4927, 0
    %4931 = vmatpush.msra.mxu0 0.0
    %4932 = vmatpush.msra.mxu0 0.0
    %4933 = vmatpush.msra.mxu0 0.0
    %4934 = vmatpush.msra.mxu0 0.0
    %4935 = vmatpush.msra.mxu0 0.0
    %4936 = vmatpush.msra.mxu0 0.0
    %4937 = vmatpush.msra.mxu0 0.0
    %4938 = vmatpush.msra.mxu0 0.0
    %4939 = vmatpush.msra.mxu0 0.0
    %4940 = vmatpush.msra.mxu0 0.0
    %4941 = vmatpush.msra.mxu0 0.0
    %4942 = vmatpush.msra.mxu0 0.0
    %4943 = vmatpush.msra.mxu0 0.0
    %4944 = vmatpush.msra.mxu0 %v4805
    %4945 = vmatpush.msra.mxu0 %v4797
    %4946 = vmatpush.msra.mxu0 %v4796
    %4947 = vmatmul.f32.gmra.mxu0 %v4929
    %v4948 = vpop.f32.mrf.mxu0
    %v4949 = vadd.f32 0.0, %v4948
    %4950 = vdwg.mxu0
    %s4951 = scalar_lea.vmem %s2, 1792
    %v4952 = vld [vmem:[%s4951] sm:$0xff]
    %v4953 = vld [vmem:[%s4951 + $0x8] sm:$0xff]
    %v4954 = vld [vmem:[%s4951 + $0x10] sm:$0xff]
    %v4955 = vld [vmem:[%s4951 + $0x18] sm:$0xff]
    %v4956 = vld [vmem:[%s4951 + $0x20] sm:$0xff]
    %v4957 = vld [vmem:[%s4951 + $0x28] sm:$0xff]
    %v4958 = vld [vmem:[%s4951 + $0x30] sm:$0xff]
    %v4959 = vld [vmem:[%s4951 + $0x38] sm:$0xff]
    %v4960 = vld [vmem:[%s4951 + $0x40] sm:$0xff]
    %v4961 = vld [vmem:[%s4951 + $0x48] sm:$0xff]
    %v4962 = vld [vmem:[%s4951 + $0x50] sm:$0xff]
    %v4963 = vld [vmem:[%s4951 + $0x58] sm:$0xff]
    %v4964 = vld [vmem:[%s4951 + $0x60] sm:$0xff]
    %v4965 = vld [vmem:[%s4951 + $0x68] sm:$0xff]
    %v4966 = vld [vmem:[%s4951 + $0x70] sm:$0xff]
    %v4967 = vld [vmem:[%s4951 + $0x78] sm:$0xff]
    %4968 = vmatpush.msra.mxu0 %v4967
    %4969 = vmatpush.msra.mxu0 %v4966
    %4970 = vmatpush.msra.mxu0 %v4965
    %4971 = vmatpush.msra.mxu0 %v4964
    %4972 = vmatpush.msra.mxu0 %v4963
    %4973 = vmatpush.msra.mxu0 %v4962
    %4974 = vmatpush.msra.mxu0 %v4961
    %4975 = vmatpush.msra.mxu0 %v4960
    %4976 = vmatpush.msra.mxu0 %v4959
    %4977 = vmatpush.msra.mxu0 %v4958
    %4978 = vmatpush.msra.mxu0 %v4957
    %4979 = vmatpush.msra.mxu0 %v4956
    %4980 = vmatpush.msra.mxu0 %v4955
    %4981 = vmatpush.msra.mxu0 %v4954
    %4982 = vmatpush.msra.mxu0 %v4953
    %4983 = vmatpush.msra.mxu0 %v4952
    %4984 = vmatmul.f32.gmra.mxu0 %v4949
    %v4985 = vpop.f32.mrf.mxu0
    %v4986 = vadd.f32 0.0, %v4985
    %4987 = vdwg.mxu0
    %v4988 = vadd.f32 %v4924, %v4986
    %s4989 = scalar_lea.vmem %s6, 24
    %v4990 = vld [vmem:[%s4989] sm:$0xff]
    %v4992 = vsel %vm4800, %v4990, 0
    %4994 = vmatpush.msra.mxu0 0.0
    %4995 = vmatpush.msra.mxu0 0.0
    %4996 = vmatpush.msra.mxu0 0.0
    %4997 = vmatpush.msra.mxu0 0.0
    %4998 = vmatpush.msra.mxu0 0.0
    %4999 = vmatpush.msra.mxu0 0.0
    %5000 = vmatpush.msra.mxu0 0.0
    %5001 = vmatpush.msra.mxu0 0.0
    %5002 = vmatpush.msra.mxu0 0.0
    %5003 = vmatpush.msra.mxu0 0.0
    %5004 = vmatpush.msra.mxu0 0.0
    %5005 = vmatpush.msra.mxu0 0.0
    %5006 = vmatpush.msra.mxu0 0.0
    %5007 = vmatpush.msra.mxu0 %v4805
    %5008 = vmatpush.msra.mxu0 %v4797
    %5009 = vmatpush.msra.mxu0 %v4796
    %5010 = vmatmul.f32.gmra.mxu0 %v4992
    %v5011 = vpop.f32.mrf.mxu0
    %v5012 = vadd.f32 0.0, %v5011
    %5013 = vdwg.mxu0
    %s5014 = scalar_lea.vmem %s2, 1920
    %v5015 = vld [vmem:[%s5014] sm:$0xff]
    %v5016 = vld [vmem:[%s5014 + $0x8] sm:$0xff]
    %v5017 = vld [vmem:[%s5014 + $0x10] sm:$0xff]
    %v5018 = vld [vmem:[%s5014 + $0x18] sm:$0xff]
    %v5019 = vld [vmem:[%s5014 + $0x20] sm:$0xff]
    %v5020 = vld [vmem:[%s5014 + $0x28] sm:$0xff]
    %v5021 = vld [vmem:[%s5014 + $0x30] sm:$0xff]
    %v5022 = vld [vmem:[%s5014 + $0x38] sm:$0xff]
    %v5023 = vld [vmem:[%s5014 + $0x40] sm:$0xff]
    %v5024 = vld [vmem:[%s5014 + $0x48] sm:$0xff]
    %v5025 = vld [vmem:[%s5014 + $0x50] sm:$0xff]
    %v5026 = vld [vmem:[%s5014 + $0x58] sm:$0xff]
    %v5027 = vld [vmem:[%s5014 + $0x60] sm:$0xff]
    %v5028 = vld [vmem:[%s5014 + $0x68] sm:$0xff]
    %v5029 = vld [vmem:[%s5014 + $0x70] sm:$0xff]
    %v5030 = vld [vmem:[%s5014 + $0x78] sm:$0xff]
    %5031 = vmatpush.msra.mxu0 %v5030
    %5032 = vmatpush.msra.mxu0 %v5029
    %5033 = vmatpush.msra.mxu0 %v5028
    %5034 = vmatpush.msra.mxu0 %v5027
    %5035 = vmatpush.msra.mxu0 %v5026
    %5036 = vmatpush.msra.mxu0 %v5025
    %5037 = vmatpush.msra.mxu0 %v5024
    %5038 = vmatpush.msra.mxu0 %v5023
    %5039 = vmatpush.msra.mxu0 %v5022
    %5040 = vmatpush.msra.mxu0 %v5021
    %5041 = vmatpush.msra.mxu0 %v5020
    %5042 = vmatpush.msra.mxu0 %v5019
    %5043 = vmatpush.msra.mxu0 %v5018
    %5044 = vmatpush.msra.mxu0 %v5017
    %5045 = vmatpush.msra.mxu0 %v5016
    %5046 = vmatpush.msra.mxu0 %v5015
    %5047 = vmatmul.f32.gmra.mxu0 %v5012
    %v5048 = vpop.f32.mrf.mxu0
    %v5049 = vadd.f32 0.0, %v5048
    %5050 = vdwg.mxu0
    %v5051 = vadd.f32 %v4988, %v5049
    %v5052 = vld [vmem:[%s8 + $0x4] sm:$0x1]
    %v5053 = vperm.slane %v5052, 0
    %v5054 = vadd.f32 %v5051, %v5053
    %v5055 = vand.u32 2147483647, %v5054
    %v5056 = vsub.f32 0.0, %v5055
    %v5057 = vmul.f32 %v5056, 1.442695
    %v5058 = vpow.pop %v5057
    %vm5059 = vcmp.ge.f32.partialorder %v5054, 0.0
    %v5060 = vmul.f32 %v5058, 2.0
    %v5061 = vadd.f32 %v5060, 1.0
    %v5062 = vadd.f32 %v5058, 2.0
    %v5063 = vmul.f32 %v5058, %v5062
    %v5064 = vsel %vm5059, %v5061, %v5063
    %v5065 = vmul.f32 %v5060, %v5058
    %v5066 = vadd.f32 %v5061, %v5065
    %v5067 = vadd.f32 %v5063, 2.0
    %v5068 = vsel %vm5059, %v5066, %v5067
    %v5069 = vmul.f32 %v5054, %v5064
    %v5070 = vrcp.pop %v5068
    %v5071 = vmul.f32 %v5069, %v5070
    %v5072 = vrot.slane %v5071, 4
    %v5073 = vadd.f32 %v5071, %v5072
    %v5074 = vrot.slane %v5073, 2
    %v5075 = vadd.f32 %v5073, %v5074
    %v5076 = vrot.slane %v5075, 1
    %v5077 = vadd.f32 %v5075, %v5076
    %v5078 = vmul.f32 %v5077, 0.125
    %v5079 = vmul.f32 %v5071, %v5071
    %v5080 = vrot.slane %v5079, 4
    %v5081 = vadd.f32 %v5079, %v5080
    %v5082 = vrot.slane %v5081, 2
    %v5083 = vadd.f32 %v5081, %v5082
    %v5084 = vrot.slane %v5083, 1
    %v5085 = vadd.f32 %v5083, %v5084
    %v5086 = vmul.f32 %v5085, 0.125
    %v5087 = vmul.f32 %v5078, %v5078
    %v5088 = vsub.f32 %v5086, %v5087
    %v5089 = vmax.f32 %v5088, 0.0
    %v5090 = vadd.f32 %v5089, 1e-05
    %v5091 = vrsqrt.pop %v5090
    %v5092 = vmul.f32 %v5091, %v5090
    %v5093 = vmul.f32 %v5092, %v5091
    %v5094 = vmul.f32 0.5, %v5093
    %v5095 = vsub.f32 1.5, %v5094
    %v5096 = vmul.f32 %v5091, %v5095
    %vm5097 = vweird.f32 %v5090
    %vm5098 = vweird.f32 %v5091
    %vm5099 = vmor %vm5097, %vm5098
    %v5100 = vsel %vm5099, %v5091, %v5096
    %v5101 = vld [vmem:[%s9 + $0x4] sm:$0x1]
    %v5102 = vmul.f32 %v5100, %v5101
    %v5103 = vld [vmem:[%s10 + $0x4] sm:$0x1]
    %v5104 = vmul.f32 %v5078, %v5102
    %v5105 = vsub.f32 %v5103, %v5104
    %v5106 = vperm.slane %v5102, 0
    %v5107 = vmul.f32 %v5071, %v5106
    %v5108 = vperm.slane %v5105, 0
    %v5109 = vadd.f32 %v5107, %v5108
    %v5110 = vld [vmem:[%s7] sm:$0x3]
    %vm5111 = vcmask 64512
    %v5113 = vsel %vm5111, %v5110, 0
    %5115 = vmatpush.msra.mxu0 0.0
    %5116 = vmatpush.msra.mxu0 0.0
    %5117 = vmatpush.msra.mxu0 0.0
    %5118 = vmatpush.msra.mxu0 0.0
    %5119 = vmatpush.msra.mxu0 0.0
    %5120 = vmatpush.msra.mxu0 0.0
    %5121 = vmatpush.msra.mxu0 0.0
    %5122 = vmatpush.msra.mxu0 0.0
    %5123 = vmatpush.msra.mxu0 0.0
    %5124 = vmatpush.msra.mxu0 0.0
    %5125 = vmatpush.msra.mxu0 0.0
    %5126 = vmatpush.msra.mxu0 0.0
    %5127 = vmatpush.msra.mxu0 0.0
    %5128 = vmatpush.msra.mxu0 0.0
    %5129 = vmatpush.msra.mxu0 0.0
    %5130 = vmatpush.msra.mxu0 %v5109
    %5131 = vmatmul.f32.gmra.mxu0 %v5113
    %v5132 = vpop.f32.mrf.mxu0
    %v5133 = vadd.f32 0.0, %v5132
    %5134 = vdwg.mxu0
    %s5135 = scalar_lea.vmem %s2, 2048
    %v5136 = vld [vmem:[%s5135] sm:$0xff]
    %v5137 = vld [vmem:[%s5135 + $0x8] sm:$0xff]
    %v5138 = vld [vmem:[%s5135 + $0x10] sm:$0xff]
    %v5139 = vld [vmem:[%s5135 + $0x18] sm:$0xff]
    %v5140 = vld [vmem:[%s5135 + $0x20] sm:$0xff]
    %v5141 = vld [vmem:[%s5135 + $0x28] sm:$0xff]
    %v5142 = vld [vmem:[%s5135 + $0x30] sm:$0xff]
    %v5143 = vld [vmem:[%s5135 + $0x38] sm:$0xff]
    %v5144 = vld [vmem:[%s5135 + $0x40] sm:$0xff]
    %v5145 = vld [vmem:[%s5135 + $0x48] sm:$0xff]
    %v5146 = vld [vmem:[%s5135 + $0x50] sm:$0xff]
    %v5147 = vld [vmem:[%s5135 + $0x58] sm:$0xff]
    %v5148 = vld [vmem:[%s5135 + $0x60] sm:$0xff]
    %v5149 = vld [vmem:[%s5135 + $0x68] sm:$0xff]
    %v5150 = vld [vmem:[%s5135 + $0x70] sm:$0xff]
    %v5151 = vld [vmem:[%s5135 + $0x78] sm:$0xff]
    %s5152 = scalar_lea.vmem %s7, 2
    %v5153 = vld [vmem:[%s5152] sm:$0x3]
    %v5155 = vsel %vm5111, %v5153, 0
    %5157 = vmatpush.msra.mxu0 0.0
    %5158 = vmatpush.msra.mxu0 0.0
    %5159 = vmatpush.msra.mxu0 0.0
    %5160 = vmatpush.msra.mxu0 0.0
    %5161 = vmatpush.msra.mxu0 0.0
    %5162 = vmatpush.msra.mxu0 0.0
    %5163 = vmatpush.msra.mxu0 0.0
    %5164 = vmatpush.msra.mxu0 0.0
    %5165 = vmatpush.msra.mxu0 0.0
    %5166 = vmatpush.msra.mxu0 0.0
    %5167 = vmatpush.msra.mxu0 0.0
    %5168 = vmatpush.msra.mxu0 0.0
    %5169 = vmatpush.msra.mxu0 0.0
    %5170 = vmatpush.msra.mxu0 0.0
    %5171 = vmatpush.msra.mxu0 0.0
    %5172 = vmatpush.msra.mxu0 %v5109
    %5173 = vmatmul.f32.gmra.mxu0 %v5155
    %v5174 = vpop.f32.mrf.mxu0
    %v5175 = vadd.f32 0.0, %v5174
    %5176 = vdwg.mxu0
    %s5177 = scalar_lea.vmem %s2, 2176
    %v5178 = vld [vmem:[%s5177] sm:$0xff]
    %v5179 = vld [vmem:[%s5177 + $0x8] sm:$0xff]
    %v5180 = vld [vmem:[%s5177 + $0x10] sm:$0xff]
    %v5181 = vld [vmem:[%s5177 + $0x18] sm:$0xff]
    %v5182 = vld [vmem:[%s5177 + $0x20] sm:$0xff]
    %v5183 = vld [vmem:[%s5177 + $0x28] sm:$0xff]
    %v5184 = vld [vmem:[%s5177 + $0x30] sm:$0xff]
    %v5185 = vld [vmem:[%s5177 + $0x38] sm:$0xff]
    %v5186 = vld [vmem:[%s5177 + $0x40] sm:$0xff]
    %v5187 = vld [vmem:[%s5177 + $0x48] sm:$0xff]
    %v5188 = vld [vmem:[%s5177 + $0x50] sm:$0xff]
    %v5189 = vld [vmem:[%s5177 + $0x58] sm:$0xff]
    %v5190 = vld [vmem:[%s5177 + $0x60] sm:$0xff]
    %v5191 = vld [vmem:[%s5177 + $0x68] sm:$0xff]
    %v5192 = vld [vmem:[%s5177 + $0x70] sm:$0xff]
    %v5193 = vld [vmem:[%s5177 + $0x78] sm:$0xff]
    %5194 = vmatpush.msra.mxu0 %v5193
    %5195 = vmatpush.msra.mxu0 %v5192
    %5196 = vmatpush.msra.mxu0 %v5191
    %5197 = vmatpush.msra.mxu0 %v5190
    %5198 = vmatpush.msra.mxu0 %v5189
    %5199 = vmatpush.msra.mxu0 %v5188
    %5200 = vmatpush.msra.mxu0 %v5187
    %5201 = vmatpush.msra.mxu0 %v5186
    %5202 = vmatpush.msra.mxu0 %v5185
    %5203 = vmatpush.msra.mxu0 %v5184
    %5204 = vmatpush.msra.mxu0 %v5183
    %5205 = vmatpush.msra.mxu0 %v5182
    %5206 = vmatpush.msra.mxu0 %v5181
    %5207 = vmatpush.msra.mxu0 %v5180
    %5208 = vmatpush.msra.mxu0 %v5179
    %5209 = vmatpush.msra.mxu0 %v5178
    %5210 = vmatmul.f32.gmra.mxu0 %v5175
    %v5211 = vpop.f32.mrf.mxu0
    %v5212 = vadd.f32 0.0, %v5211
    %5213 = vdwg.mxu0
    %5214 = vmatpush.msra.mxu0 %v5151
    %5215 = vmatpush.msra.mxu0 %v5150
    %5216 = vmatpush.msra.mxu0 %v5149
    %5217 = vmatpush.msra.mxu0 %v5148
    %5218 = vmatpush.msra.mxu0 %v5147
    %5219 = vmatpush.msra.mxu0 %v5146
    %5220 = vmatpush.msra.mxu0 %v5145
    %5221 = vmatpush.msra.mxu0 %v5144
    %5222 = vmatpush.msra.mxu0 %v5143
    %5223 = vmatpush.msra.mxu0 %v5142
    %5224 = vmatpush.msra.mxu0 %v5141
    %5225 = vmatpush.msra.mxu0 %v5140
    %5226 = vmatpush.msra.mxu0 %v5139
    %5227 = vmatpush.msra.mxu0 %v5138
    %5228 = vmatpush.msra.mxu0 %v5137
    %5229 = vmatpush.msra.mxu0 %v5136
    %5230 = vmatmul.f32.gmra.mxu0 %v5133
    %v5231 = vpop.f32.mrf.mxu0
    %v5232 = vadd.f32 %v5212, %v5231
    %5233 = vdwg.mxu0
    %s5234 = scalar_lea.vmem %s7, 4
    %v5235 = vld [vmem:[%s5234] sm:$0x3]
    %v5237 = vsel %vm5111, %v5235, 0
    %5239 = vmatpush.msra.mxu0 0.0
    %5240 = vmatpush.msra.mxu0 0.0
    %5241 = vmatpush.msra.mxu0 0.0
    %5242 = vmatpush.msra.mxu0 0.0
    %5243 = vmatpush.msra.mxu0 0.0
    %5244 = vmatpush.msra.mxu0 0.0
    %5245 = vmatpush.msra.mxu0 0.0
    %5246 = vmatpush.msra.mxu0 0.0
    %5247 = vmatpush.msra.mxu0 0.0
    %5248 = vmatpush.msra.mxu0 0.0
    %5249 = vmatpush.msra.mxu0 0.0
    %5250 = vmatpush.msra.mxu0 0.0
    %5251 = vmatpush.msra.mxu0 0.0
    %5252 = vmatpush.msra.mxu0 0.0
    %5253 = vmatpush.msra.mxu0 0.0
    %5254 = vmatpush.msra.mxu0 %v5109
    %5255 = vmatmul.f32.gmra.mxu0 %v5237
    %v5256 = vpop.f32.mrf.mxu0
    %v5257 = vadd.f32 0.0, %v5256
    %5258 = vdwg.mxu0
    %s5259 = scalar_lea.vmem %s2, 2304
    %v5260 = vld [vmem:[%s5259] sm:$0xff]
    %v5261 = vld [vmem:[%s5259 + $0x8] sm:$0xff]
    %v5262 = vld [vmem:[%s5259 + $0x10] sm:$0xff]
    %v5263 = vld [vmem:[%s5259 + $0x18] sm:$0xff]
    %v5264 = vld [vmem:[%s5259 + $0x20] sm:$0xff]
    %v5265 = vld [vmem:[%s5259 + $0x28] sm:$0xff]
    %v5266 = vld [vmem:[%s5259 + $0x30] sm:$0xff]
    %v5267 = vld [vmem:[%s5259 + $0x38] sm:$0xff]
    %v5268 = vld [vmem:[%s5259 + $0x40] sm:$0xff]
    %v5269 = vld [vmem:[%s5259 + $0x48] sm:$0xff]
    %v5270 = vld [vmem:[%s5259 + $0x50] sm:$0xff]
    %v5271 = vld [vmem:[%s5259 + $0x58] sm:$0xff]
    %v5272 = vld [vmem:[%s5259 + $0x60] sm:$0xff]
    %v5273 = vld [vmem:[%s5259 + $0x68] sm:$0xff]
    %v5274 = vld [vmem:[%s5259 + $0x70] sm:$0xff]
    %v5275 = vld [vmem:[%s5259 + $0x78] sm:$0xff]
    %5276 = vmatpush.msra.mxu0 %v5275
    %5277 = vmatpush.msra.mxu0 %v5274
    %5278 = vmatpush.msra.mxu0 %v5273
    %5279 = vmatpush.msra.mxu0 %v5272
    %5280 = vmatpush.msra.mxu0 %v5271
    %5281 = vmatpush.msra.mxu0 %v5270
    %5282 = vmatpush.msra.mxu0 %v5269
    %5283 = vmatpush.msra.mxu0 %v5268
    %5284 = vmatpush.msra.mxu0 %v5267
    %5285 = vmatpush.msra.mxu0 %v5266
    %5286 = vmatpush.msra.mxu0 %v5265
    %5287 = vmatpush.msra.mxu0 %v5264
    %5288 = vmatpush.msra.mxu0 %v5263
    %5289 = vmatpush.msra.mxu0 %v5262
    %5290 = vmatpush.msra.mxu0 %v5261
    %5291 = vmatpush.msra.mxu0 %v5260
    %5292 = vmatmul.f32.gmra.mxu0 %v5257
    %v5293 = vpop.f32.mrf.mxu0
    %v5294 = vadd.f32 0.0, %v5293
    %5295 = vdwg.mxu0
    %v5296 = vadd.f32 %v5232, %v5294
    %s5297 = scalar_lea.vmem %s7, 6
    %v5298 = vld [vmem:[%s5297] sm:$0x3]
    %v5300 = vsel %vm5111, %v5298, 0
    %5302 = vmatpush.msra.mxu0 0.0
    %5303 = vmatpush.msra.mxu0 0.0
    %5304 = vmatpush.msra.mxu0 0.0
    %5305 = vmatpush.msra.mxu0 0.0
    %5306 = vmatpush.msra.mxu0 0.0
    %5307 = vmatpush.msra.mxu0 0.0
    %5308 = vmatpush.msra.mxu0 0.0
    %5309 = vmatpush.msra.mxu0 0.0
    %5310 = vmatpush.msra.mxu0 0.0
    %5311 = vmatpush.msra.mxu0 0.0
    %5312 = vmatpush.msra.mxu0 0.0
    %5313 = vmatpush.msra.mxu0 0.0
    %5314 = vmatpush.msra.mxu0 0.0
    %5315 = vmatpush.msra.mxu0 0.0
    %5316 = vmatpush.msra.mxu0 0.0
    %5317 = vmatpush.msra.mxu0 %v5109
    %5318 = vmatmul.f32.gmra.mxu0 %v5300
    %v5319 = vpop.f32.mrf.mxu0
    %v5320 = vadd.f32 0.0, %v5319
    %5321 = vdwg.mxu0
    %s5322 = scalar_lea.vmem %s2, 2432
    %v5323 = vld [vmem:[%s5322] sm:$0xff]
    %v5324 = vld [vmem:[%s5322 + $0x8] sm:$0xff]
    %v5325 = vld [vmem:[%s5322 + $0x10] sm:$0xff]
    %v5326 = vld [vmem:[%s5322 + $0x18] sm:$0xff]
    %v5327 = vld [vmem:[%s5322 + $0x20] sm:$0xff]
    %v5328 = vld [vmem:[%s5322 + $0x28] sm:$0xff]
    %v5329 = vld [vmem:[%s5322 + $0x30] sm:$0xff]
    %v5330 = vld [vmem:[%s5322 + $0x38] sm:$0xff]
    %v5331 = vld [vmem:[%s5322 + $0x40] sm:$0xff]
    %v5332 = vld [vmem:[%s5322 + $0x48] sm:$0xff]
    %v5333 = vld [vmem:[%s5322 + $0x50] sm:$0xff]
    %v5334 = vld [vmem:[%s5322 + $0x58] sm:$0xff]
    %v5335 = vld [vmem:[%s5322 + $0x60] sm:$0xff]
    %v5336 = vld [vmem:[%s5322 + $0x68] sm:$0xff]
    %v5337 = vld [vmem:[%s5322 + $0x70] sm:$0xff]
    %v5338 = vld [vmem:[%s5322 + $0x78] sm:$0xff]
    %5339 = vmatpush.msra.mxu0 %v5338
    %5340 = vmatpush.msra.mxu0 %v5337
    %5341 = vmatpush.msra.mxu0 %v5336
    %5342 = vmatpush.msra.mxu0 %v5335
    %5343 = vmatpush.msra.mxu0 %v5334
    %5344 = vmatpush.msra.mxu0 %v5333
    %5345 = vmatpush.msra.mxu0 %v5332
    %5346 = vmatpush.msra.mxu0 %v5331
    %5347 = vmatpush.msra.mxu0 %v5330
    %5348 = vmatpush.msra.mxu0 %v5329
    %5349 = vmatpush.msra.mxu0 %v5328
    %5350 = vmatpush.msra.mxu0 %v5327
    %5351 = vmatpush.msra.mxu0 %v5326
    %5352 = vmatpush.msra.mxu0 %v5325
    %5353 = vmatpush.msra.mxu0 %v5324
    %5354 = vmatpush.msra.mxu0 %v5323
    %5355 = vmatmul.f32.gmra.mxu0 %v5320
    %v5356 = vpop.f32.mrf.mxu0
    %v5357 = vadd.f32 0.0, %v5356
    %5358 = vdwg.mxu0
    %v5359 = vadd.f32 %v5296, %v5357
    %v5360 = vld [vmem:[%s8 + $0x5] sm:$0x1]
    %v5361 = vperm.slane %v5360, 0
    %v5362 = vadd.f32 %v5359, %v5361
    %v5363 = vand.u32 2147483647, %v5362
    %v5364 = vsub.f32 0.0, %v5363
    %v5365 = vmul.f32 %v5364, 1.442695
    %v5366 = vpow.pop %v5365
    %vm5367 = vcmp.ge.f32.partialorder %v5362, 0.0
    %v5368 = vmul.f32 %v5366, 2.0
    %v5369 = vadd.f32 %v5368, 1.0
    %v5370 = vadd.f32 %v5366, 2.0
    %v5371 = vmul.f32 %v5366, %v5370
    %v5372 = vsel %vm5367, %v5369, %v5371
    %v5373 = vmul.f32 %v5368, %v5366
    %v5374 = vadd.f32 %v5369, %v5373
    %v5375 = vadd.f32 %v5371, 2.0
    %v5376 = vsel %vm5367, %v5374, %v5375
    %v5377 = vmul.f32 %v5362, %v5372
    %v5378 = vrcp.pop %v5376
    %v5379 = vmul.f32 %v5377, %v5378
    %v5380 = vsel %vm1342, %v5379, 0.0
    %v5381 = vrot.slane %v5380, 4
    %v5382 = vadd.f32 %v5380, %v5381
    %v5383 = vrot.slane %v5382, 2
    %v5384 = vadd.f32 %v5382, %v5383
    %v5385 = vrot.slane %v5384, 1
    %v5386 = vadd.f32 %v5384, %v5385
    %v5387 = vmul.f32 %v5386, 0.5
    %v5388 = vmul.f32 %v5379, %v5379
    %v5389 = vsel %vm1342, %v5388, 0.0
    %v5390 = vrot.slane %v5389, 4
    %v5391 = vadd.f32 %v5389, %v5390
    %v5392 = vrot.slane %v5391, 2
    %v5393 = vadd.f32 %v5391, %v5392
    %v5394 = vrot.slane %v5393, 1
    %v5395 = vadd.f32 %v5393, %v5394
    %v5396 = vmul.f32 %v5395, 0.5
    %v5397 = vmul.f32 %v5387, %v5387
    %v5398 = vsub.f32 %v5396, %v5397
    %v5399 = vmax.f32 %v5398, 0.0
    %v5400 = vadd.f32 %v5399, 1e-05
    %v5401 = vrsqrt.pop %v5400
    %v5402 = vmul.f32 %v5401, %v5400
    %v5403 = vmul.f32 %v5402, %v5401
    %v5404 = vmul.f32 0.5, %v5403
    %v5405 = vsub.f32 1.5, %v5404
    %v5406 = vmul.f32 %v5401, %v5405
    %vm5407 = vweird.f32 %v5400
    %vm5408 = vweird.f32 %v5401
    %vm5409 = vmor %vm5407, %vm5408
    %v5410 = vsel %vm5409, %v5401, %v5406
    %v5411 = vld [vmem:[%s9 + $0x5] sm:$0x1]
    %v5412 = vmul.f32 %v5410, %v5411
    %v5413 = vld [vmem:[%s10 + $0x5] sm:$0x1]
    %v5414 = vmul.f32 %v5387, %v5412
    %v5415 = vsub.f32 %v5413, %v5414
    %v5416 = vperm.slane %v5412, 0
    %v5417 = vmul.f32 %v5379, %v5416
    %v5418 = vperm.slane %v5415, 0
    %v5419 = vadd.f32 %v5417, %v5418
    %v5420 = vtanh.pop %v5419
    %5421 = vst [vmem:[#allocation5] sm:$0x3] %v5420
    // Predicated region
    $region50: #{tpu_custom_call.1} parent=1 // pred_check
      _
    $region51: #{tpu_custom_call.1} parent=1 // pred_check_branch
      %5423 = sbr.rel (0) target = $region53
    $region52: #{tpu_custom_call.1} parent=1 // pred_region
      %5425 = vsyncadd [#allocation4], 0
      %s5427 = sshll.u32 [#allocation5], 4
      %s5428 = int_to_ptr.vmem [resolvable:$true] %s5427
      %s5429 = sshll.u32 %s11, 4
      %s5430 = int_to_ptr.hbm [resolvable:$true] %s5429
      %5432 = dma.vmem_to_hbm [thread:$0]  %s5428, 32, %s5430, [#allocation4]
    $region53: #{tpu_custom_call.1} parent=1 // pred_fallthru
      _
    // Predicated region
    $region54: #{tpu_custom_call.1} parent=1 // pred_check
      _
    $region55: #{tpu_custom_call.1} parent=1 // pred_check_branch
      %5434 = sbr.rel (0) target = $region57
    $region56: #{tpu_custom_call.1} parent=1 // pred_region
      %5436 = dma.done [#allocation4], 32
    $region57: #{tpu_custom_call.1} parent=1 // pred_fallthru
      _
    %5437 = vsyncpa [#allocation3], 1
    %5438 = vsyncpa [#allocation4], 1

</llo_original>
